<compile_context>
chip_gen: v7x
topology: tpu7x:2x2x1
jax: 0.10.0
libtpu: 0.0.40
codegen_flags: <defaults>
</compile_context>

<pallas_src>
import jax
import jax.numpy as jnp
from jax import lax
from jax.experimental import pallas as pl
from jax.experimental.pallas import tpu as pltpu

HIDDEN_DIM = 200          # cfg.hidden_dim
NUM_OUTPUTS = 6           # Pong action space
LANE = 128                # lane-dense padded width for the 6-wide actor output
C2 = 32                   # conv2 output channels
P2 = 100                  # conv2 output spatial positions per image (10 x 10)
P2_PAD = 128              # spatial positions padded to one lane tile
FLAT = C2 * P2_PAD        # 4096 padded flatten width (zeros at p >= 100)
NEG_INF = -1e30           # finite "-inf" masking padded actor lanes before log-softmax
MAX_IMGS_PER_STEP = 32    # images processed per grid step (capped at B)


# ------------------------------ K1: conv1 stage ---------------------------------
def _conv1_kernel(p_ref, w_ref, b_ref, o_ref):
    # (400*imgs, 64) bf16 @ (64, 16) bf16 -> f32 accumulate on the MXU; f32 epilogue.
    acc = jnp.dot(p_ref[...], w_ref[...], preferred_element_type=jnp.float32)
    o_ref[...] = jnp.maximum(acc + b_ref[...], 0.0).astype(o_ref.dtype)


def conv1_stage(p1, w1, b1, imgs):
    """conv1 as fused matmul+bias+ReLU; `imgs` images (400 rows each) per grid step."""
    M = p1.shape[0]                       # Bpad * 400
    rows = 400 * imgs
    nsteps = M // rows
    if nsteps >= 3:
        p_spec = pl.BlockSpec((rows, 64), lambda i: (i, 0), pipeline_mode=pl.Buffered(3))
    else:
        p_spec = pl.BlockSpec((rows, 64), lambda i: (i, 0))
    flops = 2 * M * 64 * 16
    bytes_accessed = M * 64 * 2 + 64 * 16 * 2 + 16 * 4 + M * 16 * 2
    return pl.pallas_call(
        _conv1_kernel,
        out_shape=jax.ShapeDtypeStruct((M, 16), jnp.bfloat16),
        grid=(nsteps,),
        in_specs=[
            p_spec,
            pl.BlockSpec((64, 16), lambda i: (0, 0)),      # resident weight
            pl.BlockSpec((1, 16), lambda i: (0, 0)),       # resident bias
        ],
        out_specs=pl.BlockSpec((rows, 16), lambda i: (i, 0)),
        compiler_params=pltpu.CompilerParams(
            dimension_semantics=("parallel",),
            vmem_limit_bytes=32 * 1024 * 1024),
        cost_estimate=pl.CostEstimate(flops=flops, transcendentals=0,
                                      bytes_accessed=bytes_accessed),
    )(p1, w1, b1)


# ------------------------------ K2: head stage ----------------------------------
def _make_head_kernel(imgs):
    def _head_kernel(p2t_ref, w2t_ref, b2_ref, wr_ref, linb_ref, wa_ref, ba_ref,
                     o_ref, flat_ref):
        # conv2 for the whole step as ONE channel-major MXU matmul, K = 256:
        # (32, 256) bf16 @ (256, imgs*128) bf16 -> (32, imgs*128) f32.
        h = jnp.dot(w2t_ref[...], p2t_ref[...], preferred_element_type=jnp.float32)
        h = jnp.maximum(h + b2_ref[...], 0.0)

        # NCHW flatten: scatter each (channel, image) 128-lane row into that image's
        # flat activation row.  All slices are 128-lane aligned (plain vst / vreg-row
        # extracts on otherwise-idle slots); garbage at p >= 100 is killed by the
        # zero-padded rows of the feature-linear weight.
        for i in range(imgs):
            for c in range(C2):
                flat_ref[i:i + 1, c * P2_PAD:(c + 1) * P2_PAD] = (
                    h[c:c + 1, i * P2_PAD:(i + 1) * P2_PAD])

        # feature Linear: one (imgs, 4096) @ (4096, 200) bf16 MXU matmul (K = 4096).
        flat = flat_ref[...].astype(jnp.bfloat16)
        feat = jnp.dot(flat, wr_ref[...], preferred_element_type=jnp.float32)
        feat = feat + linb_ref[...]                                   # (imgs, 200) f32

        # actor Linear (bf16 operands); padded lanes carry zero weight and a -1e30 bias.
        logits = jnp.dot(feat.astype(jnp.bfloat16), wa_ref[...],
                         preferred_element_type=jnp.float32) + ba_ref[...]

        # Categorical(logits=...).logits == max-stabilized log-softmax.
        m = jnp.max(logits, axis=-1, keepdims=True)
        lse = jnp.log(jnp.sum(jnp.exp(logits - m), axis=-1, keepdims=True)) + m
        o_ref[...] = logits - lse
    return _head_kernel


def head_stage(p2t, w2t, b2, wr, linb, wa, ba, imgs):
    """conv2 + flatten + feature Linear + actor + log-softmax, `imgs` images/step.

    All weights (~1.7 MB bf16 + small f32 biases) stay resident in VMEM across the
    grid; only the per-step patch slab streams in.
    """
    Bpad = p2t.shape[1] // P2_PAD
    nsteps = Bpad // imgs
    if nsteps >= 3:
        p_spec = pl.BlockSpec((256, imgs * P2_PAD), lambda s: (0, s),
                              pipeline_mode=pl.Buffered(3))
    else:
        p_spec = pl.BlockSpec((256, imgs * P2_PAD), lambda s: (0, s))
    flops = Bpad * (2 * C2 * 256 * P2_PAD + 2 * FLAT * HIDDEN_DIM + 2 * HIDDEN_DIM * LANE)
    transcendentals = Bpad * LANE
    bytes_accessed = (256 * Bpad * P2_PAD * 2 + C2 * 256 * 2 + FLAT * HIDDEN_DIM * 2
                      + HIDDEN_DIM * LANE * 2 + (C2 + HIDDEN_DIM + 2 * LANE) * 4
                      + Bpad * LANE * 4)
    return pl.pallas_call(
        _make_head_kernel(imgs),
        out_shape=jax.ShapeDtypeStruct((Bpad, LANE), jnp.float32),
        grid=(nsteps,),
        in_specs=[
            p_spec,                                                  # per-step patches
            pl.BlockSpec((C2, 256), lambda s: (0, 0)),               # conv2 weight
            pl.BlockSpec((C2, 1), lambda s: (0, 0)),                 # conv2 bias (col)
            pl.BlockSpec((FLAT, HIDDEN_DIM), lambda s: (0, 0)),      # feature-linear W
            pl.BlockSpec((1, HIDDEN_DIM), lambda s: (0, 0)),         # feature-linear b
            pl.BlockSpec((HIDDEN_DIM, LANE), lambda s: (0, 0)),      # actor weight
            pl.BlockSpec((1, LANE), lambda s: (0, 0)),               # actor bias (-1e30 pad)
        ],
        out_specs=pl.BlockSpec((imgs, LANE), lambda s: (s, 0)),
        scratch_shapes=[pltpu.VMEM((imgs, FLAT), jnp.float32)],      # flat activations
        compiler_params=pltpu.CompilerParams(
            dimension_semantics=("parallel",),
            vmem_limit_bytes=32 * 1024 * 1024),
        cost_estimate=pl.CostEstimate(flops=flops, transcendentals=transcendentals,
                                      bytes_accessed=bytes_accessed),
    )(p2t, w2t, b2, wr, linb, wa, ba)


# ------------------------------ JAX glue (layout only) --------------------------
def im2col(x_nhwc, kh, kw, stride, pad):
    """Extract conv patches; feature ordering (C_in, kh, kw) matches PyTorch weights."""
    B, H, W, C = x_nhwc.shape
    xp = jnp.pad(x_nhwc, ((0, 0), (pad, pad), (pad, pad), (0, 0)))
    OH = (H + 2 * pad - kh) // stride + 1
    OW = (W + 2 * pad - kw) // stride + 1
    rows = jnp.arange(OH)[:, None] * stride + jnp.arange(kh)[None, :]   # (OH, kh)
    cols = jnp.arange(OW)[:, None] * stride + jnp.arange(kw)[None, :]   # (OW, kw)
    patches = xp[:, rows]             # (B, OH, kh, Wp, C)
    patches = patches[:, :, :, cols]  # (B, OH, kh, OW, kw, C)
    patches = patches.transpose(0, 1, 3, 5, 2, 4)  # (B, OH, OW, C, kh, kw)
    return patches.reshape(B * OH * OW, C * kh * kw), OH, OW


def prepare_params(params):
    """One-time parameter prep: all reshape/transpose/pad work hoisted out of the
    traced forward, into the exact layouts the kernels consume."""
    f32, bf16 = jnp.float32, jnp.bfloat16
    w1 = params["conv1_w"].reshape(16, 64).T.astype(bf16)                 # (64, 16)
    b1 = params["conv1_b"].reshape(1, 16).astype(f32)
    w2t = params["conv2_w"].reshape(C2, 256).astype(bf16)                 # (32, 256)
    b2 = params["conv2_b"].reshape(C2, 1).astype(f32)
    # lin_w: (200, 3200), columns in NCHW flatten order c*100 + p.  Rearranged and
    # zero-padded to (c*128 + p, h) so the in-kernel flatten uses 128-aligned rows.
    wr = params["lin_w"].reshape(HIDDEN_DIM, C2, P2).transpose(1, 2, 0)   # (32, 100, 200)
    wr = jnp.pad(wr, ((0, 0), (0, P2_PAD - P2), (0, 0)))
    wr = wr.reshape(FLAT, HIDDEN_DIM).astype(bf16)
    linb = params["lin_b"].reshape(1, HIDDEN_DIM).astype(f32)
    wa = jnp.zeros((HIDDEN_DIM, LANE), f32).at[:, :NUM_OUTPUTS].set(
        params["act_w"].T).astype(bf16)
    ba = jnp.full((1, LANE), NEG_INF, f32).at[0, :NUM_OUTPUTS].set(params["act_b"])
    # Padded actor lanes must have exactly-zero weights so the -1e30 bias keeps them
    # out of the log-softmax (review correctness note).
    assert bool(jnp.all(wa[:, NUM_OUTPUTS:] == 0))
    return {"w1": w1, "b1": b1, "w2t": w2t, "b2": b2,
            "wr": wr, "linb": linb, "wa": wa, "ba": ba}


# ------------------------------ CNNModel forward --------------------------------
def cnn_model_forward(x, prep):
    """x: (B, 80, 80, 1) NHWC float32.  Returns Categorical(logits=...).logits, (B, 6)."""
    B = x.shape[0]
    imgs = min(MAX_IMGS_PER_STEP, B)
    Bpad = ((B + imgs - 1) // imgs) * imgs
    if Bpad != B:
        x = jnp.pad(x, ((0, Bpad - B), (0, 0), (0, 0), (0, 0)))
    # conv1: cast to bf16 BEFORE im2col so p1 is materialized once, in bf16.
    p1, _, _ = im2col(x.astype(jnp.bfloat16), 8, 8, 4, 2)                 # (Bpad*400, 64)
    h1 = conv1_stage(p1, prep["w1"], prep["b1"], imgs)                    # (Bpad*400, 16) bf16
    # conv2 im2col on the 16-channel h1 (XLA glue); transpose so the head kernel's
    # conv2 output comes out channel-major and the NCHW flatten needs no relayout.
    p2, _, _ = im2col(h1.reshape(Bpad, 20, 20, 16), 4, 4, 2, 1)           # (Bpad*100, 256)
    p2 = jnp.pad(p2.reshape(Bpad, P2, 256), ((0, 0), (0, P2_PAD - P2), (0, 0)))
    p2t = p2.transpose(2, 0, 1).reshape(256, Bpad * P2_PAD)               # (256, Bpad*128)
    out = head_stage(p2t, prep["w2t"], prep["b2"], prep["wr"], prep["linb"],
                     prep["wa"], prep["ba"], imgs)                        # (Bpad, 128) f32
    return out[:B, :NUM_OUTPUTS]


# ------------------------------ reference (pure JAX, f32) ------------------------
def ref_forward(x, params):
    """Independent reference mirroring the PyTorch module exactly (f32 convolutions)."""
    xt = jnp.transpose(x, (0, 3, 1, 2))                                   # NCHW
    y = lax.conv_general_dilated(xt, params["conv1_w"], (4, 4), ((2, 2), (2, 2)),
                                 dimension_numbers=("NCHW", "OIHW", "NCHW"))
    y = jnp.maximum(y + params["conv1_b"][None, :, None, None], 0.0)
    y = lax.conv_general_dilated(y, params["conv2_w"], (2, 2), ((1, 1), (1, 1)),
                                 dimension_numbers=("NCHW", "OIHW", "NCHW"))
    y = jnp.maximum(y + params["conv2_b"][None, :, None, None], 0.0)
    feat = y.reshape(y.shape[0], -1) @ params["lin_w"].T + params["lin_b"]
    logits = feat @ params["act_w"].T + params["act_b"]
    return logits - jax.scipy.special.logsumexp(logits, axis=-1, keepdims=True)


# ------------------------------ main --------------------------------------------
if __name__ == "__main__":
    key = jax.random.PRNGKey(0)
    ks = jax.random.split(key, 9)

    def uinit(k, shape, fan_in):
        bound = 1.0 / jnp.sqrt(fan_in)
        return jax.random.uniform(k, shape, jnp.float32, -bound, bound)

    params = {
        "conv1_w": uinit(ks[0], (16, 1, 8, 8), 1 * 8 * 8),
        "conv1_b": uinit(ks[1], (16,), 1 * 8 * 8),
        "conv2_w": uinit(ks[2], (32, 16, 4, 4), 16 * 4 * 4),
        "conv2_b": uinit(ks[3], (32,), 16 * 4 * 4),
        "lin_w":   uinit(ks[4], (HIDDEN_DIM, 32 * 10 * 10), 32 * 10 * 10),
        "lin_b":   uinit(ks[5], (HIDDEN_DIM,), 32 * 10 * 10),
        "act_w":   uinit(ks[6], (NUM_OUTPUTS, HIDDEN_DIM), HIDDEN_DIM),
        "act_b":   uinit(ks[7], (NUM_OUTPUTS,), HIDDEN_DIM),
    }

    # Input spatial size is forced to 80x80x1 by Linear(in_features=32*10*10).
    x = jax.random.normal(ks[8], (2, 80, 80, 1), jnp.float32)

    prep = prepare_params(params)                         # one-time weight prep
    fwd = jax.jit(cnn_model_forward)

    out = jax.block_until_ready(fwd(x, prep))
    ref = jax.block_until_ready(ref_forward(x, params))

    assert out.shape == (2, NUM_OUTPUTS), out.shape
    assert bool(jnp.all(jnp.isfinite(out)))
    # bf16 matmul operands (f32 accumulation) => compare at 1e-2.
    assert bool(jnp.allclose(out, ref, rtol=1e-2, atol=1e-2)), (out, ref)
    print("KERNEL_OK")
</pallas_src>

<mosaic_0001>
module attributes {stable_mosaic.version = 11 : i64} {
  func.func @_conv1_kernel(%arg0: i32, %arg1: memref<800x64xbf16, #tpu.memory_space<vmem>>, %arg2: memref<64x16xbf16, #tpu.memory_space<vmem>>, %arg3: memref<1x16xf32, #tpu.memory_space<vmem>>, %arg4: memref<800x16xbf16, #tpu.memory_space<vmem>>) attributes {dimension_semantics = [#tpu.dimension_semantics<parallel>], iteration_bounds = array<i64: 1>, scalar_prefetch = 0 : i64, scratch_operands = 0 : i64, tpu.core_type = #tpu.core_type<tc>, window_params = [{transform_indices = @transform_0, window_bounds = array<i64: 800, 64>}, {pipeline_mode = #tpu.pipeline_mode<synchronous>, transform_indices = @transform_1, window_bounds = array<i64: 64, 16>}, {pipeline_mode = #tpu.pipeline_mode<synchronous>, transform_indices = @transform_2, window_bounds = array<i64: 1, 16>}, {transform_indices = @transform_3, window_bounds = array<i64: 800, 16>}]} {
    %c0 = arith.constant 0 : index
    %c0_0 = arith.constant 0 : index
    %0 = vector.load %arg1[%c0, %c0_0] : memref<800x64xbf16, #tpu.memory_space<vmem>>, vector<800x64xbf16>
    %c0_1 = arith.constant 0 : index
    %c0_2 = arith.constant 0 : index
    %1 = vector.load %arg2[%c0_1, %c0_2] : memref<64x16xbf16, #tpu.memory_space<vmem>>, vector<64x16xbf16>
    %cst = arith.constant dense<0.000000e+00> : vector<800x16xf32>
    %2 = tpu.matmul %0, %1, %cst {dimension_numbers = #tpu.dot_dimension_numbers<[1], [0], [0], [1], [0, 0, 1, 1], [], []>} : vector<800x64xbf16>, vector<64x16xbf16>, vector<800x16xf32> -> vector<800x16xf32>
    %c0_3 = arith.constant 0 : index
    %c0_4 = arith.constant 0 : index
    %3 = vector.load %arg3[%c0_3, %c0_4] : memref<1x16xf32, #tpu.memory_space<vmem>>, vector<1x16xf32>
    %4 = vector.broadcast %3 : vector<1x16xf32> to vector<800x16xf32>
    %5 = arith.addf %2, %4 : vector<800x16xf32>
    %cst_5 = arith.constant 0.000000e+00 : f32
    %6 = vector.broadcast %cst_5 : f32 to vector<800x16xf32>
    %7 = arith.maximumf %5, %6 : vector<800x16xf32>
    %8 = arith.truncf %7 : vector<800x16xf32> to vector<800x16xbf16>
    %c0_6 = arith.constant 0 : index
    %c0_7 = arith.constant 0 : index
    %9 = vector.load %arg4[%c0_6, %c0_7] : memref<800x16xbf16, #tpu.memory_space<vmem>>, vector<800x16xbf16>
    tpu.vector_store %arg4[%c0_6, %c0_7], %8 {strides = array<i32>} : memref<800x16xbf16, #tpu.memory_space<vmem>>, vector<800x16xbf16>,
    return
  }
  func.func @transform_0(%arg0: i32) -> (i32, i32) {
    %c0_i32 = arith.constant 0 : i32
    %c0_i32_0 = arith.constant 0 : i32
    return %arg0, %c0_i32 : i32, i32
  }
  func.func @transform_1(%arg0: i32) -> (i32, i32) {
    %c0_i32 = arith.constant 0 : i32
    %c0_i32_0 = arith.constant 0 : i32
    %c0_i32_1 = arith.constant 0 : i32
    return %c0_i32, %c0_i32_0 : i32, i32
  }
  func.func @transform_2(%arg0: i32) -> (i32, i32) {
    %c0_i32 = arith.constant 0 : i32
    %c0_i32_0 = arith.constant 0 : i32
    %c0_i32_1 = arith.constant 0 : i32
    return %c0_i32, %c0_i32_0 : i32, i32
  }
  func.func @transform_3(%arg0: i32) -> (i32, i32) {
    %c0_i32 = arith.constant 0 : i32
    %c0_i32_0 = arith.constant 0 : i32
    return %arg0, %c0_i32 : i32, i32
  }
}

module attributes {stable_mosaic.version = 11 : i64} {
  func.func @_head_kernel(%arg0: i32, %arg1: memref<256x256xbf16, #tpu.memory_space<vmem>>, %arg2: memref<32x256xbf16, #tpu.memory_space<vmem>>, %arg3: memref<32x1xf32, #tpu.memory_space<vmem>>, %arg4: memref<4096x200xbf16, #tpu.memory_space<vmem>>, %arg5: memref<1x200xf32, #tpu.memory_space<vmem>>, %arg6: memref<200x128xbf16, #tpu.memory_space<vmem>>, %arg7: memref<1x128xf32, #tpu.memory_space<vmem>>, %arg8: memref<2x128xf32, #tpu.memory_space<vmem>>, %arg9: memref<2x4096xf32, #tpu.memory_space<vmem>>) attributes {dimension_semantics = [#tpu.dimension_semantics<parallel>], iteration_bounds = array<i64: 1>, scalar_prefetch = 0 : i64, scratch_operands = 1 : i64, tpu.core_type = #tpu.core_type<tc>, window_params = [{transform_indices = @transform_0, window_bounds = array<i64: 256, 256>}, {pipeline_mode = #tpu.pipeline_mode<synchronous>, transform_indices = @transform_1, window_bounds = array<i64: 32, 256>}, {pipeline_mode = #tpu.pipeline_mode<synchronous>, transform_indices = @transform_2, window_bounds = array<i64: 32, 1>}, {pipeline_mode = #tpu.pipeline_mode<synchronous>, transform_indices = @transform_3, window_bounds = array<i64: 4096, 200>}, {pipeline_mode = #tpu.pipeline_mode<synchronous>, transform_indices = @transform_4, window_bounds = array<i64: 1, 200>}, {pipeline_mode = #tpu.pipeline_mode<synchronous>, transform_indices = @transform_5, window_bounds = array<i64: 200, 128>}, {pipeline_mode = #tpu.pipeline_mode<synchronous>, transform_indices = @transform_6, window_bounds = array<i64: 1, 128>}, {transform_indices = @transform_7, window_bounds = array<i64: 2, 128>}]} {
    %c0 = arith.constant 0 : index
    %c0_0 = arith.constant 0 : index
    %0 = vector.load %arg2[%c0, %c0_0] : memref<32x256xbf16, #tpu.memory_space<vmem>>, vector<32x256xbf16>
    %c0_1 = arith.constant 0 : index
    %c0_2 = arith.constant 0 : index
    %1 = vector.load %arg1[%c0_1, %c0_2] : memref<256x256xbf16, #tpu.memory_space<vmem>>, vector<256x256xbf16>
    %cst = arith.constant dense<0.000000e+00> : vector<32x256xf32>
    %2 = tpu.matmul %0, %1, %cst {dimension_numbers = #tpu.dot_dimension_numbers<[1], [0], [0], [1], [0, 0, 1, 1], [], []>} : vector<32x256xbf16>, vector<256x256xbf16>, vector<32x256xf32> -> vector<32x256xf32>
    %c0_3 = arith.constant 0 : index
    %c0_4 = arith.constant 0 : index
    %3 = vector.load %arg3[%c0_3, %c0_4] : memref<32x1xf32, #tpu.memory_space<vmem>>, vector<32x1xf32>
    %4 = vector.broadcast %3 : vector<32x1xf32> to vector<32x256xf32>
    %5 = arith.addf %2, %4 : vector<32x256xf32>
    %cst_5 = arith.constant 0.000000e+00 : f32
    %6 = vector.broadcast %cst_5 : f32 to vector<32x256xf32>
    %7 = arith.maximumf %5, %6 : vector<32x256xf32>
    %8 = vector.extract_strided_slice %7 {offsets = [0, 0], sizes = [1, 128], strides = [1, 1]} : vector<32x256xf32> to vector<1x128xf32>
    %c0_6 = arith.constant 0 : index
    %c0_7 = arith.constant 0 : index
    %9 = vector.load %arg9[%c0_6, %c0_7] : memref<2x4096xf32, #tpu.memory_space<vmem>>, vector<1x128xf32>
    tpu.vector_store %arg9[%c0_6, %c0_7], %8 {strides = array<i32>} : memref<2x4096xf32, #tpu.memory_space<vmem>>, vector<1x128xf32>,
    %10 = vector.extract_strided_slice %7 {offsets = [1, 0], sizes = [1, 128], strides = [1, 1]} : vector<32x256xf32> to vector<1x128xf32>
    %c0_8 = arith.constant 0 : index
    %c128 = arith.constant 128 : index
    %11 = vector.load %arg9[%c0_8, %c128] : memref<2x4096xf32, #tpu.memory_space<vmem>>, vector<1x128xf32>
    tpu.vector_store %arg9[%c0_8, %c128], %10 {strides = array<i32>} : memref<2x4096xf32, #tpu.memory_space<vmem>>, vector<1x128xf32>,
    %12 = vector.extract_strided_slice %7 {offsets = [2, 0], sizes = [1, 128], strides = [1, 1]} : vector<32x256xf32> to vector<1x128xf32>
    %c0_9 = arith.constant 0 : index
    %c256 = arith.constant 256 : index
    %13 = vector.load %arg9[%c0_9, %c256] : memref<2x4096xf32, #tpu.memory_space<vmem>>, vector<1x128xf32>
    tpu.vector_store %arg9[%c0_9, %c256], %12 {strides = array<i32>} : memref<2x4096xf32, #tpu.memory_space<vmem>>, vector<1x128xf32>,
    %14 = vector.extract_strided_slice %7 {offsets = [3, 0], sizes = [1, 128], strides = [1, 1]} : vector<32x256xf32> to vector<1x128xf32>
    %c0_10 = arith.constant 0 : index
    %c384 = arith.constant 384 : index
    %15 = vector.load %arg9[%c0_10, %c384] : memref<2x4096xf32, #tpu.memory_space<vmem>>, vector<1x128xf32>
    tpu.vector_store %arg9[%c0_10, %c384], %14 {strides = array<i32>} : memref<2x4096xf32, #tpu.memory_space<vmem>>, vector<1x128xf32>,
    %16 = vector.extract_strided_slice %7 {offsets = [4, 0], sizes = [1, 128], strides = [1, 1]} : vector<32x256xf32> to vector<1x128xf32>
    %c0_11 = arith.constant 0 : index
    %c512 = arith.constant 512 : index
    %17 = vector.load %arg9[%c0_11, %c512] : memref<2x4096xf32, #tpu.memory_space<vmem>>, vector<1x128xf32>
    tpu.vector_store %arg9[%c0_11, %c512], %16 {strides = array<i32>} : memref<2x4096xf32, #tpu.memory_space<vmem>>, vector<1x128xf32>,
    %18 = vector.extract_strided_slice %7 {offsets = [5, 0], sizes = [1, 128], strides = [1, 1]} : vector<32x256xf32> to vector<1x128xf32>
    %c0_12 = arith.constant 0 : index
    %c640 = arith.constant 640 : index
    %19 = vector.load %arg9[%c0_12, %c640] : memref<2x4096xf32, #tpu.memory_space<vmem>>, vector<1x128xf32>
    tpu.vector_store %arg9[%c0_12, %c640], %18 {strides = array<i32>} : memref<2x4096xf32, #tpu.memory_space<vmem>>, vector<1x128xf32>,
    %20 = vector.extract_strided_slice %7 {offsets = [6, 0], sizes = [1, 128], strides = [1, 1]} : vector<32x256xf32> to vector<1x128xf32>
    %c0_13 = arith.constant 0 : index
    %c768 = arith.constant 768 : index
    %21 = vector.load %arg9[%c0_13, %c768] : memref<2x4096xf32, #tpu.memory_space<vmem>>, vector<1x128xf32>
    tpu.vector_store %arg9[%c0_13, %c768], %20 {strides = array<i32>} : memref<2x4096xf32, #tpu.memory_space<vmem>>, vector<1x128xf32>,
    %22 = vector.extract_strided_slice %7 {offsets = [7, 0], sizes = [1, 128], strides = [1, 1]} : vector<32x256xf32> to vector<1x128xf32>
    %c0_14 = arith.constant 0 : index
    %c896 = arith.constant 896 : index
    %23 = vector.load %arg9[%c0_14, %c896] : memref<2x4096xf32, #tpu.memory_space<vmem>>, vector<1x128xf32>
    tpu.vector_store %arg9[%c0_14, %c896], %22 {strides = array<i32>} : memref<2x4096xf32, #tpu.memory_space<vmem>>, vector<1x128xf32>,
    %24 = vector.extract_strided_slice %7 {offsets = [8, 0], sizes = [1, 128], strides = [1, 1]} : vector<32x256xf32> to vector<1x128xf32>
    %c0_15 = arith.constant 0 : index
    %c1024 = arith.constant 1024 : index
    %25 = vector.load %arg9[%c0_15, %c1024] : memref<2x4096xf32, #tpu.memory_space<vmem>>, vector<1x128xf32>
    tpu.vector_store %arg9[%c0_15, %c1024], %24 {strides = array<i32>} : memref<2x4096xf32, #tpu.memory_space<vmem>>, vector<1x128xf32>,
    %26 = vector.extract_strided_slice %7 {offsets = [9, 0], sizes = [1, 128], strides = [1, 1]} : vector<32x256xf32> to vector<1x128xf32>
    %c0_16 = arith.constant 0 : index
    %c1152 = arith.constant 1152 : index
    %27 = vector.load %arg9[%c0_16, %c1152] : memref<2x4096xf32, #tpu.memory_space<vmem>>, vector<1x128xf32>
    tpu.vector_store %arg9[%c0_16, %c1152], %26 {strides = array<i32>} : memref<2x4096xf32, #tpu.memory_space<vmem>>, vector<1x128xf32>,
    %28 = vector.extract_strided_slice %7 {offsets = [10, 0], sizes = [1, 128], strides = [1, 1]} : vector<32x256xf32> to vector<1x128xf32>
    %c0_17 = arith.constant 0 : index
    %c1280 = arith.constant 1280 : index
    %29 = vector.load %arg9[%c0_17, %c1280] : memref<2x4096xf32, #tpu.memory_space<vmem>>, vector<1x128xf32>
    tpu.vector_store %arg9[%c0_17, %c1280], %28 {strides = array<i32>} : memref<2x4096xf32, #tpu.memory_space<vmem>>, vector<1x128xf32>,
    %30 = vector.extract_strided_slice %7 {offsets = [11, 0], sizes = [1, 128], strides = [1, 1]} : vector<32x256xf32> to vector<1x128xf32>
    %c0_18 = arith.constant 0 : index
    %c1408 = arith.constant 1408 : index
    %31 = vector.load %arg9[%c0_18, %c1408] : memref<2x4096xf32, #tpu.memory_space<vmem>>, vector<1x128xf32>
    tpu.vector_store %arg9[%c0_18, %c1408], %30 {strides = array<i32>} : memref<2x4096xf32, #tpu.memory_space<vmem>>, vector<1x128xf32>,
    %32 = vector.extract_strided_slice %7 {offsets = [12, 0], sizes = [1, 128], strides = [1, 1]} : vector<32x256xf32> to vector<1x128xf32>
    %c0_19 = arith.constant 0 : index
    %c1536 = arith.constant 1536 : index
    %33 = vector.load %arg9[%c0_19, %c1536] : memref<2x4096xf32, #tpu.memory_space<vmem>>, vector<1x128xf32>
    tpu.vector_store %arg9[%c0_19, %c1536], %32 {strides = array<i32>} : memref<2x4096xf32, #tpu.memory_space<vmem>>, vector<1x128xf32>,
    %34 = vector.extract_strided_slice %7 {offsets = [13, 0], sizes = [1, 128], strides = [1, 1]} : vector<32x256xf32> to vector<1x128xf32>
    %c0_20 = arith.constant 0 : index
    %c1664 = arith.constant 1664 : index
    %35 = vector.load %arg9[%c0_20, %c1664] : memref<2x4096xf32, #tpu.memory_space<vmem>>, vector<1x128xf32>
    tpu.vector_store %arg9[%c0_20, %c1664], %34 {strides = array<i32>} : memref<2x4096xf32, #tpu.memory_space<vmem>>, vector<1x128xf32>,
    %36 = vector.extract_strided_slice %7 {offsets = [14, 0], sizes = [1, 128], strides = [1, 1]} : vector<32x256xf32> to vector<1x128xf32>
    %c0_21 = arith.constant 0 : index
    %c1792 = arith.constant 1792 : index
    %37 = vector.load %arg9[%c0_21, %c1792] : memref<2x4096xf32, #tpu.memory_space<vmem>>, vector<1x128xf32>
    tpu.vector_store %arg9[%c0_21, %c1792], %36 {strides = array<i32>} : memref<2x4096xf32, #tpu.memory_space<vmem>>, vector<1x128xf32>,
    %38 = vector.extract_strided_slice %7 {offsets = [15, 0], sizes = [1, 128], strides = [1, 1]} : vector<32x256xf32> to vector<1x128xf32>
    %c0_22 = arith.constant 0 : index
    %c1920 = arith.constant 1920 : index
    %39 = vector.load %arg9[%c0_22, %c1920] : memref<2x4096xf32, #tpu.memory_space<vmem>>, vector<1x128xf32>
    tpu.vector_store %arg9[%c0_22, %c1920], %38 {strides = array<i32>} : memref<2x4096xf32, #tpu.memory_space<vmem>>, vector<1x128xf32>,
    %40 = vector.extract_strided_slice %7 {offsets = [16, 0], sizes = [1, 128], strides = [1, 1]} : vector<32x256xf32> to vector<1x128xf32>
    %c0_23 = arith.constant 0 : index
    %c2048 = arith.constant 2048 : index
    %41 = vector.load %arg9[%c0_23, %c2048] : memref<2x4096xf32, #tpu.memory_space<vmem>>, vector<1x128xf32>
    tpu.vector_store %arg9[%c0_23, %c2048], %40 {strides = array<i32>} : memref<2x4096xf32, #tpu.memory_space<vmem>>, vector<1x128xf32>,
    %42 = vector.extract_strided_slice %7 {offsets = [17, 0], sizes = [1, 128], strides = [1, 1]} : vector<32x256xf32> to vector<1x128xf32>
    %c0_24 = arith.constant 0 : index
    %c2176 = arith.constant 2176 : index
    %43 = vector.load %arg9[%c0_24, %c2176] : memref<2x4096xf32, #tpu.memory_space<vmem>>, vector<1x128xf32>
    tpu.vector_store %arg9[%c0_24, %c2176], %42 {strides = array<i32>} : memref<2x4096xf32, #tpu.memory_space<vmem>>, vector<1x128xf32>,
    %44 = vector.extract_strided_slice %7 {offsets = [18, 0], sizes = [1, 128], strides = [1, 1]} : vector<32x256xf32> to vector<1x128xf32>
    %c0_25 = arith.constant 0 : index
    %c2304 = arith.constant 2304 : index
    %45 = vector.load %arg9[%c0_25, %c2304] : memref<2x4096xf32, #tpu.memory_space<vmem>>, vector<1x128xf32>
    tpu.vector_store %arg9[%c0_25, %c2304], %44 {strides = array<i32>} : memref<2x4096xf32, #tpu.memory_space<vmem>>, vector<1x128xf32>,
    %46 = vector.extract_strided_slice %7 {offsets = [19, 0], sizes = [1, 128], strides = [1, 1]} : vector<32x256xf32> to vector<1x128xf32>
    %c0_26 = arith.constant 0 : index
    %c2432 = arith.constant 2432 : index
    %47 = vector.load %arg9[%c0_26, %c2432] : memref<2x4096xf32, #tpu.memory_space<vmem>>, vector<1x128xf32>
    tpu.vector_store %arg9[%c0_26, %c2432], %46 {strides = array<i32>} : memref<2x4096xf32, #tpu.memory_space<vmem>>, vector<1x128xf32>,
    %48 = vector.extract_strided_slice %7 {offsets = [20, 0], sizes = [1, 128], strides = [1, 1]} : vector<32x256xf32> to vector<1x128xf32>
    %c0_27 = arith.constant 0 : index
    %c2560 = arith.constant 2560 : index
    %49 = vector.load %arg9[%c0_27, %c2560] : memref<2x4096xf32, #tpu.memory_space<vmem>>, vector<1x128xf32>
    tpu.vector_store %arg9[%c0_27, %c2560], %48 {strides = array<i32>} : memref<2x4096xf32, #tpu.memory_space<vmem>>, vector<1x128xf32>,
    %50 = vector.extract_strided_slice %7 {offsets = [21, 0], sizes = [1, 128], strides = [1, 1]} : vector<32x256xf32> to vector<1x128xf32>
    %c0_28 = arith.constant 0 : index
    %c2688 = arith.constant 2688 : index
    %51 = vector.load %arg9[%c0_28, %c2688] : memref<2x4096xf32, #tpu.memory_space<vmem>>, vector<1x128xf32>
    tpu.vector_store %arg9[%c0_28, %c2688], %50 {strides = array<i32>} : memref<2x4096xf32, #tpu.memory_space<vmem>>, vector<1x128xf32>,
    %52 = vector.extract_strided_slice %7 {offsets = [22, 0], sizes = [1, 128], strides = [1, 1]} : vector<32x256xf32> to vector<1x128xf32>
    %c0_29 = arith.constant 0 : index
    %c2816 = arith.constant 2816 : index
    %53 = vector.load %arg9[%c0_29, %c2816] : memref<2x4096xf32, #tpu.memory_space<vmem>>, vector<1x128xf32>
    tpu.vector_store %arg9[%c0_29, %c2816], %52 {strides = array<i32>} : memref<2x4096xf32, #tpu.memory_space<vmem>>, vector<1x128xf32>,
    %54 = vector.extract_strided_slice %7 {offsets = [23, 0], sizes = [1, 128], strides = [1, 1]} : vector<32x256xf32> to vector<1x128xf32>
    %c0_30 = arith.constant 0 : index
    %c2944 = arith.constant 2944 : index
    %55 = vector.load %arg9[%c0_30, %c2944] : memref<2x4096xf32, #tpu.memory_space<vmem>>, vector<1x128xf32>
    tpu.vector_store %arg9[%c0_30, %c2944], %54 {strides = array<i32>} : memref<2x4096xf32, #tpu.memory_space<vmem>>, vector<1x128xf32>,
    %56 = vector.extract_strided_slice %7 {offsets = [24, 0], sizes = [1, 128], strides = [1, 1]} : vector<32x256xf32> to vector<1x128xf32>
    %c0_31 = arith.constant 0 : index
    %c3072 = arith.constant 3072 : index
    %57 = vector.load %arg9[%c0_31, %c3072] : memref<2x4096xf32, #tpu.memory_space<vmem>>, vector<1x128xf32>
    tpu.vector_store %arg9[%c0_31, %c3072], %56 {strides = array<i32>} : memref<2x4096xf32, #tpu.memory_space<vmem>>, vector<1x128xf32>,
    %58 = vector.extract_strided_slice %7 {offsets = [25, 0], sizes = [1, 128], strides = [1, 1]} : vector<32x256xf32> to vector<1x128xf32>
    %c0_32 = arith.constant 0 : index
    %c3200 = arith.constant 3200 : index
    %59 = vector.load %arg9[%c0_32, %c3200] : memref<2x4096xf32, #tpu.memory_space<vmem>>, vector<1x128xf32>
    tpu.vector_store %arg9[%c0_32, %c3200], %58 {strides = array<i32>} : memref<2x4096xf32, #tpu.memory_space<vmem>>, vector<1x128xf32>,
    %60 = vector.extract_strided_slice %7 {offsets = [26, 0], sizes = [1, 128], strides = [1, 1]} : vector<32x256xf32> to vector<1x128xf32>
    %c0_33 = arith.constant 0 : index
    %c3328 = arith.constant 3328 : index
    %61 = vector.load %arg9[%c0_33, %c3328] : memref<2x4096xf32, #tpu.memory_space<vmem>>, vector<1x128xf32>
    tpu.vector_store %arg9[%c0_33, %c3328], %60 {strides = array<i32>} : memref<2x4096xf32, #tpu.memory_space<vmem>>, vector<1x128xf32>,
    %62 = vector.extract_strided_slice %7 {offsets = [27, 0], sizes = [1, 128], strides = [1, 1]} : vector<32x256xf32> to vector<1x128xf32>
    %c0_34 = arith.constant 0 : index
    %c3456 = arith.constant 3456 : index
    %63 = vector.load %arg9[%c0_34, %c3456] : memref<2x4096xf32, #tpu.memory_space<vmem>>, vector<1x128xf32>
    tpu.vector_store %arg9[%c0_34, %c3456], %62 {strides = array<i32>} : memref<2x4096xf32, #tpu.memory_space<vmem>>, vector<1x128xf32>,
    %64 = vector.extract_strided_slice %7 {offsets = [28, 0], sizes = [1, 128], strides = [1, 1]} : vector<32x256xf32> to vector<1x128xf32>
    %c0_35 = arith.constant 0 : index
    %c3584 = arith.constant 3584 : index
    %65 = vector.load %arg9[%c0_35, %c3584] : memref<2x4096xf32, #tpu.memory_space<vmem>>, vector<1x128xf32>
    tpu.vector_store %arg9[%c0_35, %c3584], %64 {strides = array<i32>} : memref<2x4096xf32, #tpu.memory_space<vmem>>, vector<1x128xf32>,
    %66 = vector.extract_strided_slice %7 {offsets = [29, 0], sizes = [1, 128], strides = [1, 1]} : vector<32x256xf32> to vector<1x128xf32>
    %c0_36 = arith.constant 0 : index
    %c3712 = arith.constant 3712 : index
    %67 = vector.load %arg9[%c0_36, %c3712] : memref<2x4096xf32, #tpu.memory_space<vmem>>, vector<1x128xf32>
    tpu.vector_store %arg9[%c0_36, %c3712], %66 {strides = array<i32>} : memref<2x4096xf32, #tpu.memory_space<vmem>>, vector<1x128xf32>,
    %68 = vector.extract_strided_slice %7 {offsets = [30, 0], sizes = [1, 128], strides = [1, 1]} : vector<32x256xf32> to vector<1x128xf32>
    %c0_37 = arith.constant 0 : index
    %c3840 = arith.constant 3840 : index
    %69 = vector.load %arg9[%c0_37, %c3840] : memref<2x4096xf32, #tpu.memory_space<vmem>>, vector<1x128xf32>
    tpu.vector_store %arg9[%c0_37, %c3840], %68 {strides = array<i32>} : memref<2x4096xf32, #tpu.memory_space<vmem>>, vector<1x128xf32>,
    %70 = vector.extract_strided_slice %7 {offsets = [31, 0], sizes = [1, 128], strides = [1, 1]} : vector<32x256xf32> to vector<1x128xf32>
    %c0_38 = arith.constant 0 : index
    %c3968 = arith.constant 3968 : index
    %71 = vector.load %arg9[%c0_38, %c3968] : memref<2x4096xf32, #tpu.memory_space<vmem>>, vector<1x128xf32>
    tpu.vector_store %arg9[%c0_38, %c3968], %70 {strides = array<i32>} : memref<2x4096xf32, #tpu.memory_space<vmem>>, vector<1x128xf32>,
    %72 = vector.extract_strided_slice %7 {offsets = [0, 128], sizes = [1, 128], strides = [1, 1]} : vector<32x256xf32> to vector<1x128xf32>
    %c1 = arith.constant 1 : index
    %c0_39 = arith.constant 0 : index
    %73 = vector.load %arg9[%c1, %c0_39] : memref<2x4096xf32, #tpu.memory_space<vmem>>, vector<1x128xf32>
    tpu.vector_store %arg9[%c1, %c0_39], %72 {strides = array<i32>} : memref<2x4096xf32, #tpu.memory_space<vmem>>, vector<1x128xf32>,
    %74 = vector.extract_strided_slice %7 {offsets = [1, 128], sizes = [1, 128], strides = [1, 1]} : vector<32x256xf32> to vector<1x128xf32>
    %c1_40 = arith.constant 1 : index
    %c128_41 = arith.constant 128 : index
    %75 = vector.load %arg9[%c1_40, %c128_41] : memref<2x4096xf32, #tpu.memory_space<vmem>>, vector<1x128xf32>
    tpu.vector_store %arg9[%c1_40, %c128_41], %74 {strides = array<i32>} : memref<2x4096xf32, #tpu.memory_space<vmem>>, vector<1x128xf32>,
    %76 = vector.extract_strided_slice %7 {offsets = [2, 128], sizes = [1, 128], strides = [1, 1]} : vector<32x256xf32> to vector<1x128xf32>
    %c1_42 = arith.constant 1 : index
    %c256_43 = arith.constant 256 : index
    %77 = vector.load %arg9[%c1_42, %c256_43] : memref<2x4096xf32, #tpu.memory_space<vmem>>, vector<1x128xf32>
    tpu.vector_store %arg9[%c1_42, %c256_43], %76 {strides = array<i32>} : memref<2x4096xf32, #tpu.memory_space<vmem>>, vector<1x128xf32>,
    %78 = vector.extract_strided_slice %7 {offsets = [3, 128], sizes = [1, 128], strides = [1, 1]} : vector<32x256xf32> to vector<1x128xf32>
    %c1_44 = arith.constant 1 : index
    %c384_45 = arith.constant 384 : index
    %79 = vector.load %arg9[%c1_44, %c384_45] : memref<2x4096xf32, #tpu.memory_space<vmem>>, vector<1x128xf32>
    tpu.vector_store %arg9[%c1_44, %c384_45], %78 {strides = array<i32>} : memref<2x4096xf32, #tpu.memory_space<vmem>>, vector<1x128xf32>,
    %80 = vector.extract_strided_slice %7 {offsets = [4, 128], sizes = [1, 128], strides = [1, 1]} : vector<32x256xf32> to vector<1x128xf32>
    %c1_46 = arith.constant 1 : index
    %c512_47 = arith.constant 512 : index
    %81 = vector.load %arg9[%c1_46, %c512_47] : memref<2x4096xf32, #tpu.memory_space<vmem>>, vector<1x128xf32>
    tpu.vector_store %arg9[%c1_46, %c512_47], %80 {strides = array<i32>} : memref<2x4096xf32, #tpu.memory_space<vmem>>, vector<1x128xf32>,
    %82 = vector.extract_strided_slice %7 {offsets = [5, 128], sizes = [1, 128], strides = [1, 1]} : vector<32x256xf32> to vector<1x128xf32>
    %c1_48 = arith.constant 1 : index
    %c640_49 = arith.constant 640 : index
    %83 = vector.load %arg9[%c1_48, %c640_49] : memref<2x4096xf32, #tpu.memory_space<vmem>>, vector<1x128xf32>
    tpu.vector_store %arg9[%c1_48, %c640_49], %82 {strides = array<i32>} : memref<2x4096xf32, #tpu.memory_space<vmem>>, vector<1x128xf32>,
    %84 = vector.extract_strided_slice %7 {offsets = [6, 128], sizes = [1, 128], strides = [1, 1]} : vector<32x256xf32> to vector<1x128xf32>
    %c1_50 = arith.constant 1 : index
    %c768_51 = arith.constant 768 : index
    %85 = vector.load %arg9[%c1_50, %c768_51] : memref<2x4096xf32, #tpu.memory_space<vmem>>, vector<1x128xf32>
    tpu.vector_store %arg9[%c1_50, %c768_51], %84 {strides = array<i32>} : memref<2x4096xf32, #tpu.memory_space<vmem>>, vector<1x128xf32>,
    %86 = vector.extract_strided_slice %7 {offsets = [7, 128], sizes = [1, 128], strides = [1, 1]} : vector<32x256xf32> to vector<1x128xf32>
    %c1_52 = arith.constant 1 : index
    %c896_53 = arith.constant 896 : index
    %87 = vector.load %arg9[%c1_52, %c896_53] : memref<2x4096xf32, #tpu.memory_space<vmem>>, vector<1x128xf32>
    tpu.vector_store %arg9[%c1_52, %c896_53], %86 {strides = array<i32>} : memref<2x4096xf32, #tpu.memory_space<vmem>>, vector<1x128xf32>,
    %88 = vector.extract_strided_slice %7 {offsets = [8, 128], sizes = [1, 128], strides = [1, 1]} : vector<32x256xf32> to vector<1x128xf32>
    %c1_54 = arith.constant 1 : index
    %c1024_55 = arith.constant 1024 : index
    %89 = vector.load %arg9[%c1_54, %c1024_55] : memref<2x4096xf32, #tpu.memory_space<vmem>>, vector<1x128xf32>
    tpu.vector_store %arg9[%c1_54, %c1024_55], %88 {strides = array<i32>} : memref<2x4096xf32, #tpu.memory_space<vmem>>, vector<1x128xf32>,
    %90 = vector.extract_strided_slice %7 {offsets = [9, 128], sizes = [1, 128], strides = [1, 1]} : vector<32x256xf32> to vector<1x128xf32>
    %c1_56 = arith.constant 1 : index
    %c1152_57 = arith.constant 1152 : index
    %91 = vector.load %arg9[%c1_56, %c1152_57] : memref<2x4096xf32, #tpu.memory_space<vmem>>, vector<1x128xf32>
    tpu.vector_store %arg9[%c1_56, %c1152_57], %90 {strides = array<i32>} : memref<2x4096xf32, #tpu.memory_space<vmem>>, vector<1x128xf32>,
    %92 = vector.extract_strided_slice %7 {offsets = [10, 128], sizes = [1, 128], strides = [1, 1]} : vector<32x256xf32> to vector<1x128xf32>
    %c1_58 = arith.constant 1 : index
    %c1280_59 = arith.constant 1280 : index
    %93 = vector.load %arg9[%c1_58, %c1280_59] : memref<2x4096xf32, #tpu.memory_space<vmem>>, vector<1x128xf32>
    tpu.vector_store %arg9[%c1_58, %c1280_59], %92 {strides = array<i32>} : memref<2x4096xf32, #tpu.memory_space<vmem>>, vector<1x128xf32>,
    %94 = vector.extract_strided_slice %7 {offsets = [11, 128], sizes = [1, 128], strides = [1, 1]} : vector<32x256xf32> to vector<1x128xf32>
    %c1_60 = arith.constant 1 : index
    %c1408_61 = arith.constant 1408 : index
    %95 = vector.load %arg9[%c1_60, %c1408_61] : memref<2x4096xf32, #tpu.memory_space<vmem>>, vector<1x128xf32>
    tpu.vector_store %arg9[%c1_60, %c1408_61], %94 {strides = array<i32>} : memref<2x4096xf32, #tpu.memory_space<vmem>>, vector<1x128xf32>,
    %96 = vector.extract_strided_slice %7 {offsets = [12, 128], sizes = [1, 128], strides = [1, 1]} : vector<32x256xf32> to vector<1x128xf32>
    %c1_62 = arith.constant 1 : index
    %c1536_63 = arith.constant 1536 : index
    %97 = vector.load %arg9[%c1_62, %c1536_63] : memref<2x4096xf32, #tpu.memory_space<vmem>>, vector<1x128xf32>
    tpu.vector_store %arg9[%c1_62, %c1536_63], %96 {strides = array<i32>} : memref<2x4096xf32, #tpu.memory_space<vmem>>, vector<1x128xf32>,
    %98 = vector.extract_strided_slice %7 {offsets = [13, 128], sizes = [1, 128], strides = [1, 1]} : vector<32x256xf32> to vector<1x128xf32>
    %c1_64 = arith.constant 1 : index
    %c1664_65 = arith.constant 1664 : index
    %99 = vector.load %arg9[%c1_64, %c1664_65] : memref<2x4096xf32, #tpu.memory_space<vmem>>, vector<1x128xf32>
    tpu.vector_store %arg9[%c1_64, %c1664_65], %98 {strides = array<i32>} : memref<2x4096xf32, #tpu.memory_space<vmem>>, vector<1x128xf32>,
    %100 = vector.extract_strided_slice %7 {offsets = [14, 128], sizes = [1, 128], strides = [1, 1]} : vector<32x256xf32> to vector<1x128xf32>
    %c1_66 = arith.constant 1 : index
    %c1792_67 = arith.constant 1792 : index
    %101 = vector.load %arg9[%c1_66, %c1792_67] : memref<2x4096xf32, #tpu.memory_space<vmem>>, vector<1x128xf32>
    tpu.vector_store %arg9[%c1_66, %c1792_67], %100 {strides = array<i32>} : memref<2x4096xf32, #tpu.memory_space<vmem>>, vector<1x128xf32>,
    %102 = vector.extract_strided_slice %7 {offsets = [15, 128], sizes = [1, 128], strides = [1, 1]} : vector<32x256xf32> to vector<1x128xf32>
    %c1_68 = arith.constant 1 : index
    %c1920_69 = arith.constant 1920 : index
    %103 = vector.load %arg9[%c1_68, %c1920_69] : memref<2x4096xf32, #tpu.memory_space<vmem>>, vector<1x128xf32>
    tpu.vector_store %arg9[%c1_68, %c1920_69], %102 {strides = array<i32>} : memref<2x4096xf32, #tpu.memory_space<vmem>>, vector<1x128xf32>,
    %104 = vector.extract_strided_slice %7 {offsets = [16, 128], sizes = [1, 128], strides = [1, 1]} : vector<32x256xf32> to vector<1x128xf32>
    %c1_70 = arith.constant 1 : index
    %c2048_71 = arith.constant 2048 : index
    %105 = vector.load %arg9[%c1_70, %c2048_71] : memref<2x4096xf32, #tpu.memory_space<vmem>>, vector<1x128xf32>
    tpu.vector_store %arg9[%c1_70, %c2048_71], %104 {strides = array<i32>} : memref<2x4096xf32, #tpu.memory_space<vmem>>, vector<1x128xf32>,
    %106 = vector.extract_strided_slice %7 {offsets = [17, 128], sizes = [1, 128], strides = [1, 1]} : vector<32x256xf32> to vector<1x128xf32>
    %c1_72 = arith.constant 1 : index
    %c2176_73 = arith.constant 2176 : index
    %107 = vector.load %arg9[%c1_72, %c2176_73] : memref<2x4096xf32, #tpu.memory_space<vmem>>, vector<1x128xf32>
    tpu.vector_store %arg9[%c1_72, %c2176_73], %106 {strides = array<i32>} : memref<2x4096xf32, #tpu.memory_space<vmem>>, vector<1x128xf32>,
    %108 = vector.extract_strided_slice %7 {offsets = [18, 128], sizes = [1, 128], strides = [1, 1]} : vector<32x256xf32> to vector<1x128xf32>
    %c1_74 = arith.constant 1 : index
    %c2304_75 = arith.constant 2304 : index
    %109 = vector.load %arg9[%c1_74, %c2304_75] : memref<2x4096xf32, #tpu.memory_space<vmem>>, vector<1x128xf32>
    tpu.vector_store %arg9[%c1_74, %c2304_75], %108 {strides = array<i32>} : memref<2x4096xf32, #tpu.memory_space<vmem>>, vector<1x128xf32>,
    %110 = vector.extract_strided_slice %7 {offsets = [19, 128], sizes = [1, 128], strides = [1, 1]} : vector<32x256xf32> to vector<1x128xf32>
    %c1_76 = arith.constant 1 : index
    %c2432_77 = arith.constant 2432 : index
    %111 = vector.load %arg9[%c1_76, %c2432_77] : memref<2x4096xf32, #tpu.memory_space<vmem>>, vector<1x128xf32>
    tpu.vector_store %arg9[%c1_76, %c2432_77], %110 {strides = array<i32>} : memref<2x4096xf32, #tpu.memory_space<vmem>>, vector<1x128xf32>,
    %112 = vector.extract_strided_slice %7 {offsets = [20, 128], sizes = [1, 128], strides = [1, 1]} : vector<32x256xf32> to vector<1x128xf32>
    %c1_78 = arith.constant 1 : index
    %c2560_79 = arith.constant 2560 : index
    %113 = vector.load %arg9[%c1_78, %c2560_79] : memref<2x4096xf32, #tpu.memory_space<vmem>>, vector<1x128xf32>
    tpu.vector_store %arg9[%c1_78, %c2560_79], %112 {strides = array<i32>} : memref<2x4096xf32, #tpu.memory_space<vmem>>, vector<1x128xf32>,
    %114 = vector.extract_strided_slice %7 {offsets = [21, 128], sizes = [1, 128], strides = [1, 1]} : vector<32x256xf32> to vector<1x128xf32>
    %c1_80 = arith.constant 1 : index
    %c2688_81 = arith.constant 2688 : index
    %115 = vector.load %arg9[%c1_80, %c2688_81] : memref<2x4096xf32, #tpu.memory_space<vmem>>, vector<1x128xf32>
    tpu.vector_store %arg9[%c1_80, %c2688_81], %114 {strides = array<i32>} : memref<2x4096xf32, #tpu.memory_space<vmem>>, vector<1x128xf32>,
    %116 = vector.extract_strided_slice %7 {offsets = [22, 128], sizes = [1, 128], strides = [1, 1]} : vector<32x256xf32> to vector<1x128xf32>
    %c1_82 = arith.constant 1 : index
    %c2816_83 = arith.constant 2816 : index
    %117 = vector.load %arg9[%c1_82, %c2816_83] : memref<2x4096xf32, #tpu.memory_space<vmem>>, vector<1x128xf32>
    tpu.vector_store %arg9[%c1_82, %c2816_83], %116 {strides = array<i32>} : memref<2x4096xf32, #tpu.memory_space<vmem>>, vector<1x128xf32>,
    %118 = vector.extract_strided_slice %7 {offsets = [23, 128], sizes = [1, 128], strides = [1, 1]} : vector<32x256xf32> to vector<1x128xf32>
    %c1_84 = arith.constant 1 : index
    %c2944_85 = arith.constant 2944 : index
    %119 = vector.load %arg9[%c1_84, %c2944_85] : memref<2x4096xf32, #tpu.memory_space<vmem>>, vector<1x128xf32>
    tpu.vector_store %arg9[%c1_84, %c2944_85], %118 {strides = array<i32>} : memref<2x4096xf32, #tpu.memory_space<vmem>>, vector<1x128xf32>,
    %120 = vector.extract_strided_slice %7 {offsets = [24, 128], sizes = [1, 128], strides = [1, 1]} : vector<32x256xf32> to vector<1x128xf32>
    %c1_86 = arith.constant 1 : index
    %c3072_87 = arith.constant 3072 : index
    %121 = vector.load %arg9[%c1_86, %c3072_87] : memref<2x4096xf32, #tpu.memory_space<vmem>>, vector<1x128xf32>
    tpu.vector_store %arg9[%c1_86, %c3072_87], %120 {strides = array<i32>} : memref<2x4096xf32, #tpu.memory_space<vmem>>, vector<1x128xf32>,
    %122 = vector.extract_strided_slice %7 {offsets = [25, 128], sizes = [1, 128], strides = [1, 1]} : vector<32x256xf32> to vector<1x128xf32>
    %c1_88 = arith.constant 1 : index
    %c3200_89 = arith.constant 3200 : index
    %123 = vector.load %arg9[%c1_88, %c3200_89] : memref<2x4096xf32, #tpu.memory_space<vmem>>, vector<1x128xf32>
    tpu.vector_store %arg9[%c1_88, %c3200_89], %122 {strides = array<i32>} : memref<2x4096xf32, #tpu.memory_space<vmem>>, vector<1x128xf32>,
    %124 = vector.extract_strided_slice %7 {offsets = [26, 128], sizes = [1, 128], strides = [1, 1]} : vector<32x256xf32> to vector<1x128xf32>
    %c1_90 = arith.constant 1 : index
    %c3328_91 = arith.constant 3328 : index
    %125 = vector.load %arg9[%c1_90, %c3328_91] : memref<2x4096xf32, #tpu.memory_space<vmem>>, vector<1x128xf32>
    tpu.vector_store %arg9[%c1_90, %c3328_91], %124 {strides = array<i32>} : memref<2x4096xf32, #tpu.memory_space<vmem>>, vector<1x128xf32>,
    %126 = vector.extract_strided_slice %7 {offsets = [27, 128], sizes = [1, 128], strides = [1, 1]} : vector<32x256xf32> to vector<1x128xf32>
    %c1_92 = arith.constant 1 : index
    %c3456_93 = arith.constant 3456 : index
    %127 = vector.load %arg9[%c1_92, %c3456_93] : memref<2x4096xf32, #tpu.memory_space<vmem>>, vector<1x128xf32>
    tpu.vector_store %arg9[%c1_92, %c3456_93], %126 {strides = array<i32>} : memref<2x4096xf32, #tpu.memory_space<vmem>>, vector<1x128xf32>,
    %128 = vector.extract_strided_slice %7 {offsets = [28, 128], sizes = [1, 128], strides = [1, 1]} : vector<32x256xf32> to vector<1x128xf32>
    %c1_94 = arith.constant 1 : index
    %c3584_95 = arith.constant 3584 : index
    %129 = vector.load %arg9[%c1_94, %c3584_95] : memref<2x4096xf32, #tpu.memory_space<vmem>>, vector<1x128xf32>
    tpu.vector_store %arg9[%c1_94, %c3584_95], %128 {strides = array<i32>} : memref<2x4096xf32, #tpu.memory_space<vmem>>, vector<1x128xf32>,
    %130 = vector.extract_strided_slice %7 {offsets = [29, 128], sizes = [1, 128], strides = [1, 1]} : vector<32x256xf32> to vector<1x128xf32>
    %c1_96 = arith.constant 1 : index
    %c3712_97 = arith.constant 3712 : index
    %131 = vector.load %arg9[%c1_96, %c3712_97] : memref<2x4096xf32, #tpu.memory_space<vmem>>, vector<1x128xf32>
    tpu.vector_store %arg9[%c1_96, %c3712_97], %130 {strides = array<i32>} : memref<2x4096xf32, #tpu.memory_space<vmem>>, vector<1x128xf32>,
    %132 = vector.extract_strided_slice %7 {offsets = [30, 128], sizes = [1, 128], strides = [1, 1]} : vector<32x256xf32> to vector<1x128xf32>
    %c1_98 = arith.constant 1 : index
    %c3840_99 = arith.constant 3840 : index
    %133 = vector.load %arg9[%c1_98, %c3840_99] : memref<2x4096xf32, #tpu.memory_space<vmem>>, vector<1x128xf32>
    tpu.vector_store %arg9[%c1_98, %c3840_99], %132 {strides = array<i32>} : memref<2x4096xf32, #tpu.memory_space<vmem>>, vector<1x128xf32>,
    %134 = vector.extract_strided_slice %7 {offsets = [31, 128], sizes = [1, 128], strides = [1, 1]} : vector<32x256xf32> to vector<1x128xf32>
    %c1_100 = arith.constant 1 : index
    %c3968_101 = arith.constant 3968 : index
    %135 = vector.load %arg9[%c1_100, %c3968_101] : memref<2x4096xf32, #tpu.memory_space<vmem>>, vector<1x128xf32>
    tpu.vector_store %arg9[%c1_100, %c3968_101], %134 {strides = array<i32>} : memref<2x4096xf32, #tpu.memory_space<vmem>>, vector<1x128xf32>,
    %c0_102 = arith.constant 0 : index
    %c0_103 = arith.constant 0 : index
    %136 = vector.load %arg9[%c0_102, %c0_103] : memref<2x4096xf32, #tpu.memory_space<vmem>>, vector<2x4096xf32>
    %137 = arith.truncf %136 : vector<2x4096xf32> to vector<2x4096xbf16>
    %c0_104 = arith.constant 0 : index
    %c0_105 = arith.constant 0 : index
    %138 = vector.load %arg4[%c0_104, %c0_105] : memref<4096x200xbf16, #tpu.memory_space<vmem>>, vector<4096x200xbf16>
    %cst_106 = arith.constant dense<0.000000e+00> : vector<2x200xf32>
    %139 = tpu.matmul %137, %138, %cst_106 {dimension_numbers = #tpu.dot_dimension_numbers<[1], [0], [0], [1], [0, 0, 1, 1], [], []>} : vector<2x4096xbf16>, vector<4096x200xbf16>, vector<2x200xf32> -> vector<2x200xf32>
    %c0_107 = arith.constant 0 : index
    %c0_108 = arith.constant 0 : index
    %140 = vector.load %arg5[%c0_107, %c0_108] : memref<1x200xf32, #tpu.memory_space<vmem>>, vector<1x200xf32>
    %141 = vector.broadcast %140 : vector<1x200xf32> to vector<2x200xf32>
    %142 = arith.addf %139, %141 : vector<2x200xf32>
    %143 = arith.truncf %142 : vector<2x200xf32> to vector<2x200xbf16>
    %c0_109 = arith.constant 0 : index
    %c0_110 = arith.constant 0 : index
    %144 = vector.load %arg6[%c0_109, %c0_110] : memref<200x128xbf16, #tpu.memory_space<vmem>>, vector<200x128xbf16>
    %cst_111 = arith.constant dense<0.000000e+00> : vector<2x128xf32>
    %145 = tpu.matmul %143, %144, %cst_111 {dimension_numbers = #tpu.dot_dimension_numbers<[1], [0], [0], [1], [0, 0, 1, 1], [], []>} : vector<2x200xbf16>, vector<200x128xbf16>, vector<2x128xf32> -> vector<2x128xf32>
    %c0_112 = arith.constant 0 : index
    %c0_113 = arith.constant 0 : index
    %146 = vector.load %arg7[%c0_112, %c0_113] : memref<1x128xf32, #tpu.memory_space<vmem>>, vector<1x128xf32>
    %147 = vector.broadcast %146 : vector<1x128xf32> to vector<2x128xf32>
    %148 = arith.addf %145, %147 : vector<2x128xf32>
    %cst_114 = arith.constant dense<0xFF800000> : vector<2xf32>
    %149 = vector.multi_reduction <maximumf>, %148, %cst_114 [1] : vector<2x128xf32> to vector<2xf32>
    %150 = vector.shape_cast %149 : vector<2xf32> to vector<2x1xf32>
    %151 = vector.broadcast %150 : vector<2x1xf32> to vector<2x128xf32>
    %152 = arith.subf %148, %151 : vector<2x128xf32>
    %153 = math.exp %152 : vector<2x128xf32>
    %cst_115 = arith.constant dense<0.000000e+00> : vector<2xf32>
    %154 = vector.multi_reduction <add>, %153, %cst_115 [1] : vector<2x128xf32> to vector<2xf32>
    %155 = vector.shape_cast %154 : vector<2xf32> to vector<2x1xf32>
    %156 = math.log %155 : vector<2x1xf32>
    %157 = arith.addf %156, %150 : vector<2x1xf32>
    %158 = vector.broadcast %157 : vector<2x1xf32> to vector<2x128xf32>
    %159 = arith.subf %148, %158 : vector<2x128xf32>
    %c0_116 = arith.constant 0 : index
    %c0_117 = arith.constant 0 : index
    %160 = vector.load %arg8[%c0_116, %c0_117] : memref<2x128xf32, #tpu.memory_space<vmem>>, vector<2x128xf32>
    tpu.vector_store %arg8[%c0_116, %c0_117], %159 {strides = array<i32>} : memref<2x128xf32, #tpu.memory_space<vmem>>, vector<2x128xf32>,
    return
  }
  func.func @transform_0(%arg0: i32) -> (i32, i32) {
    %c0_i32 = arith.constant 0 : i32
    %c0_i32_0 = arith.constant 0 : i32
    return %c0_i32, %arg0 : i32, i32
  }
  func.func @transform_1(%arg0: i32) -> (i32, i32) {
    %c0_i32 = arith.constant 0 : i32
    %c0_i32_0 = arith.constant 0 : i32
    %c0_i32_1 = arith.constant 0 : i32
    return %c0_i32, %c0_i32_0 : i32, i32
  }
  func.func @transform_2(%arg0: i32) -> (i32, i32) {
    %c0_i32 = arith.constant 0 : i32
    %c0_i32_0 = arith.constant 0 : i32
    %c0_i32_1 = arith.constant 0 : i32
    return %c0_i32, %c0_i32_0 : i32, i32
  }
  func.func @transform_3(%arg0: i32) -> (i32, i32) {
    %c0_i32 = arith.constant 0 : i32
    %c0_i32_0 = arith.constant 0 : i32
    %c0_i32_1 = arith.constant 0 : i32
    return %c0_i32, %c0_i32_0 : i32, i32
  }
  func.func @transform_4(%arg0: i32) -> (i32, i32) {
    %c0_i32 = arith.constant 0 : i32
    %c0_i32_0 = arith.constant 0 : i32
    %c0_i32_1 = arith.constant 0 : i32
    return %c0_i32, %c0_i32_0 : i32, i32
  }
  func.func @transform_5(%arg0: i32) -> (i32, i32) {
    %c0_i32 = arith.constant 0 : i32
    %c0_i32_0 = arith.constant 0 : i32
    %c0_i32_1 = arith.constant 0 : i32
    return %c0_i32, %c0_i32_0 : i32, i32
  }
  func.func @transform_6(%arg0: i32) -> (i32, i32) {
    %c0_i32 = arith.constant 0 : i32
    %c0_i32_0 = arith.constant 0 : i32
    %c0_i32_1 = arith.constant 0 : i32
    return %c0_i32, %c0_i32_0 : i32, i32
  }
  func.func @transform_7(%arg0: i32) -> (i32, i32) {
    %c0_i32 = arith.constant 0 : i32
    %c0_i32_0 = arith.constant 0 : i32
    return %arg0, %c0_i32 : i32, i32
  }
}

</mosaic_0001>

<llo_original>
// kernel: cnn_model_forward.2
$region0: #{cnn_model_forward.2}
  #allocation0 [shape = 'u32[]', space=smem, size = 0x4, offset = 0x4, fixed_abs, tag = 'smem constant byte address 0x4 - core index']
  #allocation1 [shape = 'u32[144,128]{1,0:T(1,128)}', space=vmem, size = 0x12000, scoped, tag = 'internal scratch']
  %s0 = inlined_call_operand.vmem [shape: bf16[800,64], index: 0, kind: input, shape index: {}]
  %s1 = inlined_call_operand.vmem [shape: bf16[64,16], index: 1, kind: input, shape index: {}]
  %s2 = inlined_call_operand.vmem [shape: f32[1,16], index: 2, kind: input, shape index: {}]
  %s3 = inlined_call_operand.vmem [shape: bf16[800,16], index: 3, kind: output, shape index: {}]
  %s4 = sld [smem:[#allocation0]]
  $region22: #{cnn_model_forward.2} parent=0
    _
  %s6 = ssub.s32 1, %s4
  %s7 = scalar_select 0, %s6, %s4
  // Predicated region
  $region2: #{cnn_model_forward.2} parent=0 // pred_check
    _
  $region3: #{cnn_model_forward.2} parent=0 // pred_check_branch
    %9 = sbr.rel (0) target = $region5
  $region4: #{cnn_model_forward.2} parent=0 // pred_region
    _
  $region5: #{cnn_model_forward.2} parent=0 // pred_fallthru
    _
  // Predicated region
  $region6: #{cnn_model_forward.2} parent=0 // pred_check
    _
  $region7: #{cnn_model_forward.2} parent=0 // pred_check_branch
    %11 = sbr.rel (0) target = $region9
  $region8: #{cnn_model_forward.2} parent=0 // pred_region
    _
  $region9: #{cnn_model_forward.2} parent=0 // pred_fallthru
    _
  // Predicated region
  $region10: #{cnn_model_forward.2} parent=0 // pred_check
    _
  $region11: #{cnn_model_forward.2} parent=0 // pred_check_branch
    %13 = sbr.rel (0) target = $region13
  $region12: #{cnn_model_forward.2} parent=0 // pred_region
    _
  $region13: #{cnn_model_forward.2} parent=0 // pred_fallthru
    _
  %v15 = vld [vmem:[%s0] sm:$0xf]
  %v16 = vld [vmem:[%s0 + $0x4] sm:$0xf]
  %v17 = vld [vmem:[%s0 + $0x8] sm:$0xf]
  %v18 = vld [vmem:[%s0 + $0xc] sm:$0xf]
  %v19 = vld [vmem:[%s0 + $0x10] sm:$0xf]
  %v20 = vld [vmem:[%s0 + $0x14] sm:$0xf]
  %v21 = vld [vmem:[%s0 + $0x18] sm:$0xf]
  %v22 = vld [vmem:[%s0 + $0x1c] sm:$0xf]
  %v23 = vld [vmem:[%s0 + $0x20] sm:$0xf]
  %v24 = vld [vmem:[%s0 + $0x24] sm:$0xf]
  %v25 = vld [vmem:[%s0 + $0x28] sm:$0xf]
  %v26 = vld [vmem:[%s0 + $0x2c] sm:$0xf]
  %v27 = vld [vmem:[%s0 + $0x30] sm:$0xf]
  %v28 = vld [vmem:[%s0 + $0x34] sm:$0xf]
  %v29 = vld [vmem:[%s0 + $0x38] sm:$0xf]
  %v30 = vld [vmem:[%s0 + $0x3c] sm:$0xf]
  %v31 = vld [vmem:[%s0 + $0x40] sm:$0xf]
  %v32 = vld [vmem:[%s0 + $0x44] sm:$0xf]
  %v33 = vld [vmem:[%s0 + $0x48] sm:$0xf]
  %v34 = vld [vmem:[%s0 + $0x4c] sm:$0xf]
  %v35 = vld [vmem:[%s0 + $0x50] sm:$0xf]
  %v36 = vld [vmem:[%s0 + $0x54] sm:$0xf]
  %v37 = vld [vmem:[%s0 + $0x58] sm:$0xf]
  %v38 = vld [vmem:[%s0 + $0x5c] sm:$0xf]
  %v39 = vld [vmem:[%s0 + $0x60] sm:$0xf]
  %v40 = vld [vmem:[%s0 + $0x64] sm:$0xf]
  %v41 = vld [vmem:[%s0 + $0x68] sm:$0xf]
  %v42 = vld [vmem:[%s0 + $0x6c] sm:$0xf]
  %v43 = vld [vmem:[%s0 + $0x70] sm:$0xf]
  %v44 = vld [vmem:[%s0 + $0x74] sm:$0xf]
  %v45 = vld [vmem:[%s0 + $0x78] sm:$0xf]
  %v46 = vld [vmem:[%s0 + $0x7c] sm:$0xf]
  %v47 = vld [vmem:[%s0 + $0x80] sm:$0xf]
  %v48 = vld [vmem:[%s0 + $0x84] sm:$0xf]
  %v49 = vld [vmem:[%s0 + $0x88] sm:$0xf]
  %v50 = vld [vmem:[%s0 + $0x8c] sm:$0xf]
  %v51 = vld [vmem:[%s0 + $0x90] sm:$0xf]
  %v52 = vld [vmem:[%s0 + $0x94] sm:$0xf]
  %v53 = vld [vmem:[%s0 + $0x98] sm:$0xf]
  %v54 = vld [vmem:[%s0 + $0x9c] sm:$0xf]
  %v55 = vld [vmem:[%s0 + $0xa0] sm:$0xf]
  %v56 = vld [vmem:[%s0 + $0xa4] sm:$0xf]
  %v57 = vld [vmem:[%s0 + $0xa8] sm:$0xf]
  %v58 = vld [vmem:[%s0 + $0xac] sm:$0xf]
  %v59 = vld [vmem:[%s0 + $0xb0] sm:$0xf]
  %v60 = vld [vmem:[%s0 + $0xb4] sm:$0xf]
  %v61 = vld [vmem:[%s0 + $0xb8] sm:$0xf]
  %v62 = vld [vmem:[%s0 + $0xbc] sm:$0xf]
  %v63 = vld [vmem:[%s0 + $0xc0] sm:$0xf]
  %v64 = vld [vmem:[%s0 + $0xc4] sm:$0xf]
  %v65 = vld [vmem:[%s0 + $0xc8] sm:$0xf]
  %v66 = vld [vmem:[%s0 + $0xcc] sm:$0xf]
  %v67 = vld [vmem:[%s0 + $0xd0] sm:$0xf]
  %v68 = vld [vmem:[%s0 + $0xd4] sm:$0xf]
  %v69 = vld [vmem:[%s0 + $0xd8] sm:$0xf]
  %v70 = vld [vmem:[%s0 + $0xdc] sm:$0xf]
  %v71 = vld [vmem:[%s0 + $0xe0] sm:$0xf]
  %v72 = vld [vmem:[%s0 + $0xe4] sm:$0xf]
  %v73 = vld [vmem:[%s0 + $0xe8] sm:$0xf]
  %v74 = vld [vmem:[%s0 + $0xec] sm:$0xf]
  %v75 = vld [vmem:[%s0 + $0xf0] sm:$0xf]
  %v76 = vld [vmem:[%s0 + $0xf4] sm:$0xf]
  %v77 = vld [vmem:[%s0 + $0xf8] sm:$0xf]
  %v78 = vld [vmem:[%s0 + $0xfc] sm:$0xf]
  %v79 = vld [vmem:[%s0 + $0x100] sm:$0xf]
  %v80 = vld [vmem:[%s0 + $0x104] sm:$0xf]
  %v81 = vld [vmem:[%s0 + $0x108] sm:$0xf]
  %v82 = vld [vmem:[%s0 + $0x10c] sm:$0xf]
  %v83 = vld [vmem:[%s0 + $0x110] sm:$0xf]
  %v84 = vld [vmem:[%s0 + $0x114] sm:$0xf]
  %v85 = vld [vmem:[%s0 + $0x118] sm:$0xf]
  %v86 = vld [vmem:[%s0 + $0x11c] sm:$0xf]
  %v87 = vld [vmem:[%s0 + $0x120] sm:$0xf]
  %v88 = vld [vmem:[%s0 + $0x124] sm:$0xf]
  %v89 = vld [vmem:[%s0 + $0x128] sm:$0xf]
  %v90 = vld [vmem:[%s0 + $0x12c] sm:$0xf]
  %v91 = vld [vmem:[%s0 + $0x130] sm:$0xf]
  %v92 = vld [vmem:[%s0 + $0x134] sm:$0xf]
  %v93 = vld [vmem:[%s0 + $0x138] sm:$0xf]
  %v94 = vld [vmem:[%s0 + $0x13c] sm:$0xf]
  %v95 = vld [vmem:[%s0 + $0x140] sm:$0xf]
  %v96 = vld [vmem:[%s0 + $0x144] sm:$0xf]
  %v97 = vld [vmem:[%s0 + $0x148] sm:$0xf]
  %v98 = vld [vmem:[%s0 + $0x14c] sm:$0xf]
  %v99 = vld [vmem:[%s0 + $0x150] sm:$0xf]
  %v100 = vld [vmem:[%s0 + $0x154] sm:$0xf]
  %v101 = vld [vmem:[%s0 + $0x158] sm:$0xf]
  %v102 = vld [vmem:[%s0 + $0x15c] sm:$0xf]
  %v103 = vld [vmem:[%s0 + $0x160] sm:$0xf]
  %v104 = vld [vmem:[%s0 + $0x164] sm:$0xf]
  %v105 = vld [vmem:[%s0 + $0x168] sm:$0xf]
  %v106 = vld [vmem:[%s0 + $0x16c] sm:$0xf]
  %v107 = vld [vmem:[%s0 + $0x170] sm:$0xf]
  %v108 = vld [vmem:[%s0 + $0x174] sm:$0xf]
  %v109 = vld [vmem:[%s0 + $0x178] sm:$0xf]
  %v110 = vld [vmem:[%s0 + $0x17c] sm:$0xf]
  %v111 = vld [vmem:[%s0 + $0x180] sm:$0xf]
  %v112 = vld [vmem:[%s0 + $0x184] sm:$0xf]
  %v113 = vld [vmem:[%s0 + $0x188] sm:$0xf]
  %v114 = vld [vmem:[%s0 + $0x18c] sm:$0xf]
  %v115 = vld [vmem:[%s1] sm:$0xf]
  %v116 = vld [vmem:[%s1 + $0x4] sm:$0xf]
  %v117 = vld [vmem:[%s1 + $0x8] sm:$0xf]
  %v118 = vld [vmem:[%s1 + $0xc] sm:$0xf]
  %v119 = vld [vmem:[%s1 + $0x10] sm:$0xf]
  %v120 = vld [vmem:[%s1 + $0x14] sm:$0xf]
  %v121 = vld [vmem:[%s1 + $0x18] sm:$0xf]
  %v122 = vld [vmem:[%s1 + $0x1c] sm:$0xf]
  %v123 = vld [vmem:[%s2] sm:$0x1]
  %v125 = vlaneseq
  %v126 = vshrl.u32 %v125, 7
  %v127 = vsub.s32 0, %v126
  %v128 = vrot.slane %v123, %v127
  %v230 = vunpack.c.l.b16 %v15
  %v231 = vunpack.c.l.b16 %v16
  %v232 = vunpack.c.l.b16 %v17
  %v233 = vunpack.c.l.b16 %v18
  %v234 = vunpack.c.l.b16 %v19
  %v235 = vunpack.c.l.b16 %v20
  %v236 = vunpack.c.l.b16 %v21
  %v237 = vunpack.c.l.b16 %v22
  %v238 = vunpack.c.l.b16 %v23
  %v239 = vunpack.c.l.b16 %v24
  %v240 = vunpack.c.l.b16 %v25
  %v241 = vunpack.c.l.b16 %v26
  %v242 = vunpack.c.l.b16 %v27
  %v243 = vunpack.c.l.b16 %v28
  %v244 = vunpack.c.l.b16 %v29
  %v245 = vunpack.c.l.b16 %v30
  %v246 = vunpack.c.l.b16 %v31
  %v247 = vunpack.c.l.b16 %v32
  %v248 = vunpack.c.l.b16 %v33
  %v249 = vunpack.c.l.b16 %v34
  %v250 = vunpack.c.l.b16 %v35
  %v251 = vunpack.c.l.b16 %v36
  %v252 = vunpack.c.l.b16 %v37
  %v253 = vunpack.c.l.b16 %v38
  %v254 = vunpack.c.l.b16 %v39
  %v255 = vunpack.c.l.b16 %v40
  %v256 = vunpack.c.l.b16 %v41
  %v257 = vunpack.c.l.b16 %v42
  %v258 = vunpack.c.l.b16 %v43
  %v259 = vunpack.c.l.b16 %v44
  %v260 = vunpack.c.l.b16 %v45
  %v261 = vunpack.c.l.b16 %v46
  %v262 = vunpack.c.l.b16 %v47
  %v263 = vunpack.c.l.b16 %v48
  %v264 = vunpack.c.l.b16 %v49
  %v265 = vunpack.c.l.b16 %v50
  %v266 = vunpack.c.l.b16 %v51
  %v267 = vunpack.c.l.b16 %v52
  %v268 = vunpack.c.l.b16 %v53
  %v269 = vunpack.c.l.b16 %v54
  %v270 = vunpack.c.l.b16 %v55
  %v271 = vunpack.c.l.b16 %v56
  %v272 = vunpack.c.l.b16 %v57
  %v273 = vunpack.c.l.b16 %v58
  %v274 = vunpack.c.l.b16 %v59
  %v275 = vunpack.c.l.b16 %v60
  %v276 = vunpack.c.l.b16 %v61
  %v277 = vunpack.c.l.b16 %v62
  %v278 = vunpack.c.l.b16 %v63
  %v279 = vunpack.c.l.b16 %v64
  %v280 = vunpack.c.l.b16 %v65
  %v281 = vunpack.c.l.b16 %v66
  %v282 = vunpack.c.l.b16 %v67
  %v283 = vunpack.c.l.b16 %v68
  %v284 = vunpack.c.l.b16 %v69
  %v285 = vunpack.c.l.b16 %v70
  %v286 = vunpack.c.l.b16 %v71
  %v287 = vunpack.c.l.b16 %v72
  %v288 = vunpack.c.l.b16 %v73
  %v289 = vunpack.c.l.b16 %v74
  %v290 = vunpack.c.l.b16 %v75
  %v291 = vunpack.c.l.b16 %v76
  %v292 = vunpack.c.l.b16 %v77
  %v293 = vunpack.c.l.b16 %v78
  %v294 = vunpack.c.l.b16 %v79
  %v295 = vunpack.c.l.b16 %v80
  %v296 = vunpack.c.l.b16 %v81
  %v297 = vunpack.c.l.b16 %v82
  %v298 = vunpack.c.l.b16 %v83
  %v299 = vunpack.c.l.b16 %v84
  %v300 = vunpack.c.l.b16 %v85
  %v301 = vunpack.c.l.b16 %v86
  %v302 = vunpack.c.l.b16 %v87
  %v303 = vunpack.c.l.b16 %v88
  %v304 = vunpack.c.l.b16 %v89
  %v305 = vunpack.c.l.b16 %v90
  %v306 = vunpack.c.l.b16 %v91
  %v307 = vunpack.c.l.b16 %v92
  %v308 = vunpack.c.l.b16 %v93
  %v309 = vunpack.c.l.b16 %v94
  %v310 = vunpack.c.l.b16 %v95
  %v311 = vunpack.c.l.b16 %v96
  %v312 = vunpack.c.l.b16 %v97
  %v313 = vunpack.c.l.b16 %v98
  %v314 = vunpack.c.l.b16 %v99
  %v315 = vunpack.c.l.b16 %v100
  %v316 = vunpack.c.l.b16 %v101
  %v317 = vunpack.c.l.b16 %v102
  %v318 = vunpack.c.l.b16 %v103
  %v319 = vunpack.c.l.b16 %v104
  %v320 = vunpack.c.l.b16 %v105
  %v321 = vunpack.c.l.b16 %v106
  %v322 = vunpack.c.l.b16 %v107
  %v323 = vunpack.c.l.b16 %v108
  %v324 = vunpack.c.l.b16 %v109
  %v325 = vunpack.c.l.b16 %v110
  %v326 = vunpack.c.l.b16 %v111
  %v327 = vunpack.c.l.b16 %v112
  %v328 = vunpack.c.l.b16 %v113
  %v329 = vunpack.c.l.b16 %v114
  %v330 = vpack.c.b16 %v231, %v230
  %v331 = vpack.c.b16 %v233, %v232
  %v332 = vpack.c.b16 %v235, %v234
  %v333 = vpack.c.b16 %v237, %v236
  %v334 = vpack.c.b16 %v239, %v238
  %v335 = vpack.c.b16 %v241, %v240
  %v336 = vpack.c.b16 %v243, %v242
  %v337 = vpack.c.b16 %v245, %v244
  %v338 = vpack.c.b16 %v247, %v246
  %v339 = vpack.c.b16 %v249, %v248
  %v340 = vpack.c.b16 %v251, %v250
  %v341 = vpack.c.b16 %v253, %v252
  %v342 = vpack.c.b16 %v255, %v254
  %v343 = vpack.c.b16 %v257, %v256
  %v344 = vpack.c.b16 %v259, %v258
  %v345 = vpack.c.b16 %v261, %v260
  %v346 = vpack.c.b16 %v263, %v262
  %v347 = vpack.c.b16 %v265, %v264
  %v348 = vpack.c.b16 %v267, %v266
  %v349 = vpack.c.b16 %v269, %v268
  %v350 = vpack.c.b16 %v271, %v270
  %v351 = vpack.c.b16 %v273, %v272
  %v352 = vpack.c.b16 %v275, %v274
  %v353 = vpack.c.b16 %v277, %v276
  %v354 = vpack.c.b16 %v279, %v278
  %v355 = vpack.c.b16 %v281, %v280
  %v356 = vpack.c.b16 %v283, %v282
  %v357 = vpack.c.b16 %v285, %v284
  %v358 = vpack.c.b16 %v287, %v286
  %v359 = vpack.c.b16 %v289, %v288
  %v360 = vpack.c.b16 %v291, %v290
  %v361 = vpack.c.b16 %v293, %v292
  %v362 = vpack.c.b16 %v295, %v294
  %v363 = vpack.c.b16 %v297, %v296
  %v364 = vpack.c.b16 %v299, %v298
  %v365 = vpack.c.b16 %v301, %v300
  %v366 = vpack.c.b16 %v303, %v302
  %v367 = vpack.c.b16 %v305, %v304
  %v368 = vpack.c.b16 %v307, %v306
  %v369 = vpack.c.b16 %v309, %v308
  %v370 = vpack.c.b16 %v311, %v310
  %v371 = vpack.c.b16 %v313, %v312
  %v372 = vpack.c.b16 %v315, %v314
  %v373 = vpack.c.b16 %v317, %v316
  %v374 = vpack.c.b16 %v319, %v318
  %v375 = vpack.c.b16 %v321, %v320
  %v376 = vpack.c.b16 %v323, %v322
  %v377 = vpack.c.b16 %v325, %v324
  %v378 = vpack.c.b16 %v327, %v326
  %v379 = vpack.c.b16 %v329, %v328
  %v388 = vunpack.c.l.b16 %v115
  %v389 = vunpack.c.l.b16 %v116
  %v390 = vunpack.c.l.b16 %v117
  %v391 = vunpack.c.l.b16 %v118
  %v392 = vunpack.c.l.b16 %v119
  %v393 = vunpack.c.l.b16 %v120
  %v394 = vunpack.c.l.b16 %v121
  %v395 = vunpack.c.l.b16 %v122
  %v396 = vpack.c.b16 %v389, %v388
  %v397 = vpack.c.b16 %v391, %v390
  %v398 = vpack.c.b16 %v393, %v392
  %v399 = vpack.c.b16 %v395, %v394
  %vm404 = vcmask 523264
  %v406 = vsel %vm404, %v330, 0
  %v409 = vsel %vm404, %v331, 0
  %v412 = vsel %vm404, %v332, 0
  %v415 = vsel %vm404, %v333, 0
  %v418 = vsel %vm404, %v334, 0
  %v421 = vsel %vm404, %v335, 0
  %v424 = vsel %vm404, %v336, 0
  %v427 = vsel %vm404, %v337, 0
  %v430 = vsel %vm404, %v338, 0
  %v433 = vsel %vm404, %v339, 0
  %v436 = vsel %vm404, %v340, 0
  %v439 = vsel %vm404, %v341, 0
  %v442 = vsel %vm404, %v342, 0
  %v445 = vsel %vm404, %v343, 0
  %v448 = vsel %vm404, %v344, 0
  %v451 = vsel %vm404, %v345, 0
  %v454 = vsel %vm404, %v346, 0
  %v457 = vsel %vm404, %v347, 0
  %v460 = vsel %vm404, %v348, 0
  %v463 = vsel %vm404, %v349, 0
  %v466 = vsel %vm404, %v350, 0
  %v469 = vsel %vm404, %v351, 0
  %v472 = vsel %vm404, %v352, 0
  %v475 = vsel %vm404, %v353, 0
  %v478 = vsel %vm404, %v354, 0
  %v481 = vsel %vm404, %v355, 0
  %v484 = vsel %vm404, %v356, 0
  %v487 = vsel %vm404, %v357, 0
  %v490 = vsel %vm404, %v358, 0
  %v493 = vsel %vm404, %v359, 0
  %v496 = vsel %vm404, %v360, 0
  %v499 = vsel %vm404, %v361, 0
  %v502 = vsel %vm404, %v362, 0
  %v505 = vsel %vm404, %v363, 0
  %v508 = vsel %vm404, %v364, 0
  %v511 = vsel %vm404, %v365, 0
  %v514 = vsel %vm404, %v366, 0
  %v517 = vsel %vm404, %v367, 0
  %v520 = vsel %vm404, %v368, 0
  %v523 = vsel %vm404, %v369, 0
  %v526 = vsel %vm404, %v370, 0
  %v529 = vsel %vm404, %v371, 0
  %v532 = vsel %vm404, %v372, 0
  %v535 = vsel %vm404, %v373, 0
  %v538 = vsel %vm404, %v374, 0
  %v541 = vsel %vm404, %v375, 0
  %v544 = vsel %vm404, %v376, 0
  %v547 = vsel %vm404, %v377, 0
  %v550 = vsel %vm404, %v378, 0
  %v553 = vsel %vm404, %v379, 0
  %555 = vmatprep.subr.bf16.mxu0 0
  %556 = vmatpush1.bf16.msra.mxu0 %v396
  %557 = vmatprep.subr.bf16.mxu0 0
  %558 = vmatpush1.bf16.msra.mxu0 %v397
  %559 = vmatprep.subr.bf16.mxu0 0
  %560 = vmatpush1.bf16.msra.mxu0 %v398
  %561 = vmatprep.subr.bf16.mxu0 0
  %562 = vmatpush1.bf16.msra.mxu0 %v399
  %563 = vmatprep.subr.bf16.mxu0 0
  %564 = vmatpush1.bf16.msra.mxu0 0
  %565 = vmatprep.subr.bf16.mxu0 0
  %566 = vmatpush1.bf16.msra.mxu0 0
  %567 = vmatprep.subr.bf16.mxu0 0
  %568 = vmatpush1.bf16.msra.mxu0 0
  %569 = vmatprep.subr.bf16.mxu0 0
  %570 = vmatpush1.bf16.msra.mxu0 0
  %571 = vmatprep.subr.bf16.mxu0 0
  %572 = vmatpush1.bf16.msra.mxu0 0
  %573 = vmatprep.subr.bf16.mxu0 0
  %574 = vmatpush1.bf16.msra.mxu0 0
  %575 = vmatprep.subr.bf16.mxu0 0
  %576 = vmatpush1.bf16.msra.mxu0 0
  %577 = vmatprep.subr.bf16.mxu0 0
  %578 = vmatpush1.bf16.msra.mxu0 0
  %579 = vmatprep.subr.bf16.mxu0 0
  %580 = vmatpush1.bf16.msra.mxu0 0
  %581 = vmatprep.subr.bf16.mxu0 0
  %582 = vmatpush1.bf16.msra.mxu0 0
  %583 = vmatprep.subr.bf16.mxu0 0
  %584 = vmatpush1.bf16.msra.mxu0 0
  %585 = vmatprep.subr.bf16.mxu0 0
  %586 = vmatpush1.bf16.msra.mxu0 0
  %587 = vmatprep.mubr.bf16.mxu0 0
  %588 = vmatmul.mubr.bf16.gmra.mrb[0].mxu0 %v406
  %v589 = vpop.f32.mrb[0].mxu0
  %v590 = vadd.f32 %v128, %v589
  %v591 = vpop.f32.mrb[0].mxu0
  %v592 = vpop.f32.mrb[0].mxu0
  %v593 = vadd.f32 %v128, %v592
  %v594 = vpop.f32.mrb[0].mxu0
  %595 = vmatprep.mubr.bf16.mxu0 0
  %596 = vmatmul.mubr.bf16.gmra.mrb[0].mxu0 %v409
  %v597 = vpop.f32.mrb[0].mxu0
  %v598 = vadd.f32 %v128, %v597
  %v599 = vpop.f32.mrb[0].mxu0
  %v600 = vpop.f32.mrb[0].mxu0
  %v601 = vadd.f32 %v128, %v600
  %v602 = vpop.f32.mrb[0].mxu0
  %603 = vmatprep.mubr.bf16.mxu0 0
  %604 = vmatmul.mubr.bf16.gmra.mrb[0].mxu0 %v412
  %v605 = vpop.f32.mrb[0].mxu0
  %v606 = vadd.f32 %v128, %v605
  %v607 = vpop.f32.mrb[0].mxu0
  %v608 = vpop.f32.mrb[0].mxu0
  %v609 = vadd.f32 %v128, %v608
  %v610 = vpop.f32.mrb[0].mxu0
  %611 = vmatprep.mubr.bf16.mxu0 0
  %612 = vmatmul.mubr.bf16.gmra.mrb[0].mxu0 %v415
  %v613 = vpop.f32.mrb[0].mxu0
  %v614 = vadd.f32 %v128, %v613
  %v615 = vpop.f32.mrb[0].mxu0
  %v616 = vpop.f32.mrb[0].mxu0
  %v617 = vadd.f32 %v128, %v616
  %v618 = vpop.f32.mrb[0].mxu0
  %619 = vmatprep.mubr.bf16.mxu0 0
  %620 = vmatmul.mubr.bf16.gmra.mrb[0].mxu0 %v418
  %v621 = vpop.f32.mrb[0].mxu0
  %v622 = vadd.f32 %v128, %v621
  %v623 = vpop.f32.mrb[0].mxu0
  %v624 = vpop.f32.mrb[0].mxu0
  %v625 = vadd.f32 %v128, %v624
  %v626 = vpop.f32.mrb[0].mxu0
  %627 = vmatprep.mubr.bf16.mxu0 0
  %628 = vmatmul.mubr.bf16.gmra.mrb[0].mxu0 %v421
  %v629 = vpop.f32.mrb[0].mxu0
  %v630 = vadd.f32 %v128, %v629
  %v631 = vpop.f32.mrb[0].mxu0
  %v632 = vpop.f32.mrb[0].mxu0
  %v633 = vadd.f32 %v128, %v632
  %v634 = vpop.f32.mrb[0].mxu0
  %635 = vmatprep.mubr.bf16.mxu0 0
  %636 = vmatmul.mubr.bf16.gmra.mrb[0].mxu0 %v424
  %v637 = vpop.f32.mrb[0].mxu0
  %v638 = vadd.f32 %v128, %v637
  %v639 = vpop.f32.mrb[0].mxu0
  %v640 = vpop.f32.mrb[0].mxu0
  %v641 = vadd.f32 %v128, %v640
  %v642 = vpop.f32.mrb[0].mxu0
  %643 = vmatprep.mubr.bf16.mxu0 0
  %644 = vmatmul.mubr.bf16.gmra.mrb[0].mxu0 %v427
  %v645 = vpop.f32.mrb[0].mxu0
  %v646 = vadd.f32 %v128, %v645
  %v647 = vpop.f32.mrb[0].mxu0
  %v648 = vpop.f32.mrb[0].mxu0
  %v649 = vadd.f32 %v128, %v648
  %v650 = vpop.f32.mrb[0].mxu0
  %651 = vmatprep.mubr.bf16.mxu0 0
  %652 = vmatmul.mubr.bf16.gmra.mrb[0].mxu0 %v430
  %v653 = vpop.f32.mrb[0].mxu0
  %v654 = vadd.f32 %v128, %v653
  %v655 = vpop.f32.mrb[0].mxu0
  %v656 = vpop.f32.mrb[0].mxu0
  %v657 = vadd.f32 %v128, %v656
  %v658 = vpop.f32.mrb[0].mxu0
  %659 = vmatprep.mubr.bf16.mxu0 0
  %660 = vmatmul.mubr.bf16.gmra.mrb[0].mxu0 %v433
  %v661 = vpop.f32.mrb[0].mxu0
  %v662 = vadd.f32 %v128, %v661
  %v663 = vpop.f32.mrb[0].mxu0
  %v664 = vpop.f32.mrb[0].mxu0
  %v665 = vadd.f32 %v128, %v664
  %v666 = vpop.f32.mrb[0].mxu0
  %667 = vmatprep.mubr.bf16.mxu0 0
  %668 = vmatmul.mubr.bf16.gmra.mrb[0].mxu0 %v436
  %v669 = vpop.f32.mrb[0].mxu0
  %v670 = vadd.f32 %v128, %v669
  %v671 = vpop.f32.mrb[0].mxu0
  %v672 = vpop.f32.mrb[0].mxu0
  %v673 = vadd.f32 %v128, %v672
  %v674 = vpop.f32.mrb[0].mxu0
  %675 = vmatprep.mubr.bf16.mxu0 0
  %676 = vmatmul.mubr.bf16.gmra.mrb[0].mxu0 %v439
  %v677 = vpop.f32.mrb[0].mxu0
  %v678 = vadd.f32 %v128, %v677
  %v679 = vpop.f32.mrb[0].mxu0
  %v680 = vpop.f32.mrb[0].mxu0
  %v681 = vadd.f32 %v128, %v680
  %v682 = vpop.f32.mrb[0].mxu0
  %683 = vmatprep.mubr.bf16.mxu0 0
  %684 = vmatmul.mubr.bf16.gmra.mrb[0].mxu0 %v442
  %v685 = vpop.f32.mrb[0].mxu0
  %v686 = vadd.f32 %v128, %v685
  %v687 = vpop.f32.mrb[0].mxu0
  %v688 = vpop.f32.mrb[0].mxu0
  %v689 = vadd.f32 %v128, %v688
  %v690 = vpop.f32.mrb[0].mxu0
  %691 = vmatprep.mubr.bf16.mxu0 0
  %692 = vmatmul.mubr.bf16.gmra.mrb[0].mxu0 %v445
  %v693 = vpop.f32.mrb[0].mxu0
  %v694 = vadd.f32 %v128, %v693
  %v695 = vpop.f32.mrb[0].mxu0
  %v696 = vpop.f32.mrb[0].mxu0
  %v697 = vadd.f32 %v128, %v696
  %v698 = vpop.f32.mrb[0].mxu0
  %699 = vmatprep.mubr.bf16.mxu0 0
  %700 = vmatmul.mubr.bf16.gmra.mrb[0].mxu0 %v448
  %v701 = vpop.f32.mrb[0].mxu0
  %v702 = vadd.f32 %v128, %v701
  %v703 = vpop.f32.mrb[0].mxu0
  %v704 = vpop.f32.mrb[0].mxu0
  %v705 = vadd.f32 %v128, %v704
  %v706 = vpop.f32.mrb[0].mxu0
  %707 = vmatprep.mubr.bf16.mxu0 0
  %708 = vmatmul.mubr.bf16.gmra.mrb[0].mxu0 %v451
  %v709 = vpop.f32.mrb[0].mxu0
  %v710 = vadd.f32 %v128, %v709
  %v711 = vpop.f32.mrb[0].mxu0
  %v712 = vpop.f32.mrb[0].mxu0
  %v713 = vadd.f32 %v128, %v712
  %v714 = vpop.f32.mrb[0].mxu0
  %715 = vmatprep.mubr.bf16.mxu0 0
  %716 = vmatmul.mubr.bf16.gmra.mrb[0].mxu0 %v454
  %v717 = vpop.f32.mrb[0].mxu0
  %v718 = vadd.f32 %v128, %v717
  %v719 = vpop.f32.mrb[0].mxu0
  %v720 = vpop.f32.mrb[0].mxu0
  %v721 = vadd.f32 %v128, %v720
  %v722 = vpop.f32.mrb[0].mxu0
  %723 = vmatprep.mubr.bf16.mxu0 0
  %724 = vmatmul.mubr.bf16.gmra.mrb[0].mxu0 %v457
  %v725 = vpop.f32.mrb[0].mxu0
  %v726 = vadd.f32 %v128, %v725
  %v727 = vpop.f32.mrb[0].mxu0
  %v728 = vpop.f32.mrb[0].mxu0
  %v729 = vadd.f32 %v128, %v728
  %v730 = vpop.f32.mrb[0].mxu0
  %731 = vmatprep.mubr.bf16.mxu0 0
  %732 = vmatmul.mubr.bf16.gmra.mrb[0].mxu0 %v460
  %v733 = vpop.f32.mrb[0].mxu0
  %v734 = vadd.f32 %v128, %v733
  %v735 = vpop.f32.mrb[0].mxu0
  %v736 = vpop.f32.mrb[0].mxu0
  %v737 = vadd.f32 %v128, %v736
  %v738 = vpop.f32.mrb[0].mxu0
  %739 = vmatprep.mubr.bf16.mxu0 0
  %740 = vmatmul.mubr.bf16.gmra.mrb[0].mxu0 %v463
  %v741 = vpop.f32.mrb[0].mxu0
  %v742 = vadd.f32 %v128, %v741
  %v743 = vpop.f32.mrb[0].mxu0
  %v744 = vpop.f32.mrb[0].mxu0
  %v745 = vadd.f32 %v128, %v744
  %v746 = vpop.f32.mrb[0].mxu0
  %747 = vmatprep.mubr.bf16.mxu0 0
  %748 = vmatmul.mubr.bf16.gmra.mrb[0].mxu0 %v466
  %v749 = vpop.f32.mrb[0].mxu0
  %v750 = vadd.f32 %v128, %v749
  %v751 = vpop.f32.mrb[0].mxu0
  %v752 = vpop.f32.mrb[0].mxu0
  %v753 = vadd.f32 %v128, %v752
  %v754 = vpop.f32.mrb[0].mxu0
  %755 = vmatprep.mubr.bf16.mxu0 0
  %756 = vmatmul.mubr.bf16.gmra.mrb[0].mxu0 %v469
  %v757 = vpop.f32.mrb[0].mxu0
  %v758 = vadd.f32 %v128, %v757
  %v759 = vpop.f32.mrb[0].mxu0
  %v760 = vpop.f32.mrb[0].mxu0
  %v761 = vadd.f32 %v128, %v760
  %v762 = vpop.f32.mrb[0].mxu0
  %763 = vmatprep.mubr.bf16.mxu0 0
  %764 = vmatmul.mubr.bf16.gmra.mrb[0].mxu0 %v472
  %v765 = vpop.f32.mrb[0].mxu0
  %v766 = vadd.f32 %v128, %v765
  %v767 = vpop.f32.mrb[0].mxu0
  %v768 = vpop.f32.mrb[0].mxu0
  %v769 = vadd.f32 %v128, %v768
  %v770 = vpop.f32.mrb[0].mxu0
  %771 = vmatprep.mubr.bf16.mxu0 0
  %772 = vmatmul.mubr.bf16.gmra.mrb[0].mxu0 %v475
  %v773 = vpop.f32.mrb[0].mxu0
  %v774 = vadd.f32 %v128, %v773
  %v775 = vpop.f32.mrb[0].mxu0
  %v776 = vpop.f32.mrb[0].mxu0
  %v777 = vadd.f32 %v128, %v776
  %v778 = vpop.f32.mrb[0].mxu0
  %779 = vmatprep.mubr.bf16.mxu0 0
  %780 = vmatmul.mubr.bf16.gmra.mrb[0].mxu0 %v478
  %v781 = vpop.f32.mrb[0].mxu0
  %v782 = vadd.f32 %v128, %v781
  %v783 = vpop.f32.mrb[0].mxu0
  %v784 = vpop.f32.mrb[0].mxu0
  %v785 = vadd.f32 %v128, %v784
  %v786 = vpop.f32.mrb[0].mxu0
  %787 = vmatprep.mubr.bf16.mxu0 0
  %788 = vmatmul.mubr.bf16.gmra.mrb[0].mxu0 %v481
  %v789 = vpop.f32.mrb[0].mxu0
  %v790 = vadd.f32 %v128, %v789
  %v791 = vpop.f32.mrb[0].mxu0
  %v792 = vpop.f32.mrb[0].mxu0
  %v793 = vadd.f32 %v128, %v792
  %v794 = vpop.f32.mrb[0].mxu0
  %795 = vmatprep.mubr.bf16.mxu0 0
  %796 = vmatmul.mubr.bf16.gmra.mrb[0].mxu0 %v484
  %v797 = vpop.f32.mrb[0].mxu0
  %v798 = vadd.f32 %v128, %v797
  %v799 = vpop.f32.mrb[0].mxu0
  %v800 = vpop.f32.mrb[0].mxu0
  %v801 = vadd.f32 %v128, %v800
  %v802 = vpop.f32.mrb[0].mxu0
  %803 = vmatprep.mubr.bf16.mxu0 0
  %804 = vmatmul.mubr.bf16.gmra.mrb[0].mxu0 %v487
  %v805 = vpop.f32.mrb[0].mxu0
  %v806 = vadd.f32 %v128, %v805
  %v807 = vpop.f32.mrb[0].mxu0
  %v808 = vpop.f32.mrb[0].mxu0
  %v809 = vadd.f32 %v128, %v808
  %v810 = vpop.f32.mrb[0].mxu0
  %811 = vmatprep.mubr.bf16.mxu0 0
  %812 = vmatmul.mubr.bf16.gmra.mrb[0].mxu0 %v490
  %v813 = vpop.f32.mrb[0].mxu0
  %v814 = vadd.f32 %v128, %v813
  %v815 = vpop.f32.mrb[0].mxu0
  %v816 = vpop.f32.mrb[0].mxu0
  %v817 = vadd.f32 %v128, %v816
  %v818 = vpop.f32.mrb[0].mxu0
  %819 = vmatprep.mubr.bf16.mxu0 0
  %820 = vmatmul.mubr.bf16.gmra.mrb[0].mxu0 %v493
  %v821 = vpop.f32.mrb[0].mxu0
  %v822 = vadd.f32 %v128, %v821
  %v823 = vpop.f32.mrb[0].mxu0
  %v824 = vpop.f32.mrb[0].mxu0
  %v825 = vadd.f32 %v128, %v824
  %v826 = vpop.f32.mrb[0].mxu0
  %827 = vmatprep.mubr.bf16.mxu0 0
  %828 = vmatmul.mubr.bf16.gmra.mrb[0].mxu0 %v496
  %v829 = vpop.f32.mrb[0].mxu0
  %v830 = vadd.f32 %v128, %v829
  %v831 = vpop.f32.mrb[0].mxu0
  %v832 = vpop.f32.mrb[0].mxu0
  %v833 = vadd.f32 %v128, %v832
  %v834 = vpop.f32.mrb[0].mxu0
  %835 = vmatprep.mubr.bf16.mxu0 0
  %836 = vmatmul.mubr.bf16.gmra.mrb[0].mxu0 %v499
  %v837 = vpop.f32.mrb[0].mxu0
  %v838 = vadd.f32 %v128, %v837
  %v839 = vpop.f32.mrb[0].mxu0
  %v840 = vpop.f32.mrb[0].mxu0
  %v841 = vadd.f32 %v128, %v840
  %v842 = vpop.f32.mrb[0].mxu0
  %843 = vmatprep.mubr.bf16.mxu0 0
  %844 = vmatmul.mubr.bf16.gmra.mrb[0].mxu0 %v502
  %v845 = vpop.f32.mrb[0].mxu0
  %v846 = vadd.f32 %v128, %v845
  %v847 = vpop.f32.mrb[0].mxu0
  %v848 = vpop.f32.mrb[0].mxu0
  %v849 = vadd.f32 %v128, %v848
  %v850 = vpop.f32.mrb[0].mxu0
  %851 = vmatprep.mubr.bf16.mxu0 0
  %852 = vmatmul.mubr.bf16.gmra.mrb[0].mxu0 %v505
  %v853 = vpop.f32.mrb[0].mxu0
  %v854 = vadd.f32 %v128, %v853
  %v855 = vpop.f32.mrb[0].mxu0
  %v856 = vpop.f32.mrb[0].mxu0
  %v857 = vadd.f32 %v128, %v856
  %v858 = vpop.f32.mrb[0].mxu0
  %859 = vmatprep.mubr.bf16.mxu0 0
  %860 = vmatmul.mubr.bf16.gmra.mrb[0].mxu0 %v508
  %v861 = vpop.f32.mrb[0].mxu0
  %v862 = vadd.f32 %v128, %v861
  %v863 = vpop.f32.mrb[0].mxu0
  %v864 = vpop.f32.mrb[0].mxu0
  %v865 = vadd.f32 %v128, %v864
  %v866 = vpop.f32.mrb[0].mxu0
  %867 = vmatprep.mubr.bf16.mxu0 0
  %868 = vmatmul.mubr.bf16.gmra.mrb[0].mxu0 %v511
  %v869 = vpop.f32.mrb[0].mxu0
  %v870 = vadd.f32 %v128, %v869
  %v871 = vpop.f32.mrb[0].mxu0
  %v872 = vpop.f32.mrb[0].mxu0
  %v873 = vadd.f32 %v128, %v872
  %v874 = vpop.f32.mrb[0].mxu0
  %875 = vmatprep.mubr.bf16.mxu0 0
  %876 = vmatmul.mubr.bf16.gmra.mrb[0].mxu0 %v514
  %v877 = vpop.f32.mrb[0].mxu0
  %v878 = vadd.f32 %v128, %v877
  %v879 = vpop.f32.mrb[0].mxu0
  %v880 = vpop.f32.mrb[0].mxu0
  %v881 = vadd.f32 %v128, %v880
  %v882 = vpop.f32.mrb[0].mxu0
  %883 = vmatprep.mubr.bf16.mxu0 0
  %884 = vmatmul.mubr.bf16.gmra.mrb[0].mxu0 %v517
  %v885 = vpop.f32.mrb[0].mxu0
  %v886 = vadd.f32 %v128, %v885
  %v887 = vpop.f32.mrb[0].mxu0
  %v888 = vpop.f32.mrb[0].mxu0
  %v889 = vadd.f32 %v128, %v888
  %v890 = vpop.f32.mrb[0].mxu0
  %891 = vmatprep.mubr.bf16.mxu0 0
  %892 = vmatmul.mubr.bf16.gmra.mrb[0].mxu0 %v520
  %v893 = vpop.f32.mrb[0].mxu0
  %v894 = vadd.f32 %v128, %v893
  %v895 = vpop.f32.mrb[0].mxu0
  %v896 = vpop.f32.mrb[0].mxu0
  %v897 = vadd.f32 %v128, %v896
  %v898 = vpop.f32.mrb[0].mxu0
  %899 = vmatprep.mubr.bf16.mxu0 0
  %900 = vmatmul.mubr.bf16.gmra.mrb[0].mxu0 %v523
  %v901 = vpop.f32.mrb[0].mxu0
  %v902 = vadd.f32 %v128, %v901
  %v903 = vpop.f32.mrb[0].mxu0
  %v904 = vpop.f32.mrb[0].mxu0
  %v905 = vadd.f32 %v128, %v904
  %v906 = vpop.f32.mrb[0].mxu0
  %907 = vmatprep.mubr.bf16.mxu0 0
  %908 = vmatmul.mubr.bf16.gmra.mrb[0].mxu0 %v526
  %v909 = vpop.f32.mrb[0].mxu0
  %v910 = vadd.f32 %v128, %v909
  %v911 = vpop.f32.mrb[0].mxu0
  %v912 = vpop.f32.mrb[0].mxu0
  %v913 = vadd.f32 %v128, %v912
  %v914 = vpop.f32.mrb[0].mxu0
  %915 = vmatprep.mubr.bf16.mxu0 0
  %916 = vmatmul.mubr.bf16.gmra.mrb[0].mxu0 %v529
  %v917 = vpop.f32.mrb[0].mxu0
  %v918 = vadd.f32 %v128, %v917
  %v919 = vpop.f32.mrb[0].mxu0
  %v920 = vpop.f32.mrb[0].mxu0
  %v921 = vadd.f32 %v128, %v920
  %v922 = vpop.f32.mrb[0].mxu0
  %923 = vmatprep.mubr.bf16.mxu0 0
  %924 = vmatmul.mubr.bf16.gmra.mrb[0].mxu0 %v532
  %v925 = vpop.f32.mrb[0].mxu0
  %v926 = vadd.f32 %v128, %v925
  %v927 = vpop.f32.mrb[0].mxu0
  %v928 = vpop.f32.mrb[0].mxu0
  %v929 = vadd.f32 %v128, %v928
  %v930 = vpop.f32.mrb[0].mxu0
  %931 = vmatprep.mubr.bf16.mxu0 0
  %932 = vmatmul.mubr.bf16.gmra.mrb[0].mxu0 %v535
  %v933 = vpop.f32.mrb[0].mxu0
  %v934 = vadd.f32 %v128, %v933
  %v935 = vpop.f32.mrb[0].mxu0
  %v936 = vpop.f32.mrb[0].mxu0
  %v937 = vadd.f32 %v128, %v936
  %v938 = vpop.f32.mrb[0].mxu0
  %939 = vmatprep.mubr.bf16.mxu0 0
  %940 = vmatmul.mubr.bf16.gmra.mrb[0].mxu0 %v538
  %v941 = vpop.f32.mrb[0].mxu0
  %v942 = vadd.f32 %v128, %v941
  %v943 = vpop.f32.mrb[0].mxu0
  %v944 = vpop.f32.mrb[0].mxu0
  %v945 = vadd.f32 %v128, %v944
  %v946 = vpop.f32.mrb[0].mxu0
  %947 = vmatprep.mubr.bf16.mxu0 0
  %948 = vmatmul.mubr.bf16.gmra.mrb[0].mxu0 %v541
  %v949 = vpop.f32.mrb[0].mxu0
  %v950 = vadd.f32 %v128, %v949
  %v951 = vpop.f32.mrb[0].mxu0
  %v952 = vpop.f32.mrb[0].mxu0
  %v953 = vadd.f32 %v128, %v952
  %v954 = vpop.f32.mrb[0].mxu0
  %955 = vmatprep.mubr.bf16.mxu0 0
  %956 = vmatmul.mubr.bf16.gmra.mrb[0].mxu0 %v544
  %v957 = vpop.f32.mrb[0].mxu0
  %v958 = vadd.f32 %v128, %v957
  %v959 = vpop.f32.mrb[0].mxu0
  %v960 = vpop.f32.mrb[0].mxu0
  %v961 = vadd.f32 %v128, %v960
  %v962 = vpop.f32.mrb[0].mxu0
  %963 = vmatprep.mubr.bf16.mxu0 0
  %964 = vmatmul.mubr.bf16.gmra.mrb[0].mxu0 %v547
  %v965 = vpop.f32.mrb[0].mxu0
  %v966 = vadd.f32 %v128, %v965
  %v967 = vpop.f32.mrb[0].mxu0
  %v968 = vpop.f32.mrb[0].mxu0
  %v969 = vadd.f32 %v128, %v968
  %v970 = vpop.f32.mrb[0].mxu0
  %971 = vmatprep.mubr.bf16.mxu0 0
  %972 = vmatmul.mubr.bf16.gmra.mrb[0].mxu0 %v550
  %v973 = vpop.f32.mrb[0].mxu0
  %v974 = vadd.f32 %v128, %v973
  %v975 = vpop.f32.mrb[0].mxu0
  %v976 = vpop.f32.mrb[0].mxu0
  %v977 = vadd.f32 %v128, %v976
  %v978 = vpop.f32.mrb[0].mxu0
  %979 = vmatprep.mubr.bf16.mxu0 0
  %980 = vmatmul.mubr.bf16.gmra.mrb[0].mxu0 %v553
  %v981 = vpop.f32.mrb[0].mxu0
  %v982 = vadd.f32 %v128, %v981
  %v983 = vpop.f32.mrb[0].mxu0
  %v984 = vpop.f32.mrb[0].mxu0
  %v985 = vadd.f32 %v128, %v984
  %v986 = vpop.f32.mrb[0].mxu0
  %987 = vdwg.mxu0
  %v988 = vmax.f32 %v590, 0.0
  %v989 = vmax.f32 %v593, 0.0
  %v990 = vmax.f32 %v598, 0.0
  %v991 = vmax.f32 %v601, 0.0
  %v992 = vmax.f32 %v606, 0.0
  %v993 = vmax.f32 %v609, 0.0
  %v994 = vmax.f32 %v614, 0.0
  %v995 = vmax.f32 %v617, 0.0
  %v996 = vmax.f32 %v622, 0.0
  %v997 = vmax.f32 %v625, 0.0
  %v998 = vmax.f32 %v630, 0.0
  %v999 = vmax.f32 %v633, 0.0
  %v1000 = vmax.f32 %v638, 0.0
  %v1001 = vmax.f32 %v641, 0.0
  %v1002 = vmax.f32 %v646, 0.0
  %v1003 = vmax.f32 %v649, 0.0
  %v1004 = vmax.f32 %v654, 0.0
  %v1005 = vmax.f32 %v657, 0.0
  %v1006 = vmax.f32 %v662, 0.0
  %v1007 = vmax.f32 %v665, 0.0
  %v1008 = vmax.f32 %v670, 0.0
  %v1009 = vmax.f32 %v673, 0.0
  %v1010 = vmax.f32 %v678, 0.0
  %v1011 = vmax.f32 %v681, 0.0
  %v1012 = vmax.f32 %v686, 0.0
  %v1013 = vmax.f32 %v689, 0.0
  %v1014 = vmax.f32 %v694, 0.0
  %v1015 = vmax.f32 %v697, 0.0
  %v1016 = vmax.f32 %v702, 0.0
  %v1017 = vmax.f32 %v705, 0.0
  %v1018 = vmax.f32 %v710, 0.0
  %v1019 = vmax.f32 %v713, 0.0
  %v1020 = vmax.f32 %v718, 0.0
  %v1021 = vmax.f32 %v721, 0.0
  %v1022 = vmax.f32 %v726, 0.0
  %v1023 = vmax.f32 %v729, 0.0
  %v1024 = vmax.f32 %v734, 0.0
  %v1025 = vmax.f32 %v737, 0.0
  %v1026 = vmax.f32 %v742, 0.0
  %v1027 = vmax.f32 %v745, 0.0
  %v1028 = vmax.f32 %v750, 0.0
  %v1029 = vmax.f32 %v753, 0.0
  %v1030 = vmax.f32 %v758, 0.0
  %v1031 = vmax.f32 %v761, 0.0
  %v1032 = vmax.f32 %v766, 0.0
  %v1033 = vmax.f32 %v769, 0.0
  %v1034 = vmax.f32 %v774, 0.0
  %v1035 = vmax.f32 %v777, 0.0
  %v1036 = vmax.f32 %v782, 0.0
  %v1037 = vmax.f32 %v785, 0.0
  %v1038 = vmax.f32 %v790, 0.0
  %v1039 = vmax.f32 %v793, 0.0
  %v1040 = vmax.f32 %v798, 0.0
  %v1041 = vmax.f32 %v801, 0.0
  %v1042 = vmax.f32 %v806, 0.0
  %v1043 = vmax.f32 %v809, 0.0
  %v1044 = vmax.f32 %v814, 0.0
  %v1045 = vmax.f32 %v817, 0.0
  %v1046 = vmax.f32 %v822, 0.0
  %v1047 = vmax.f32 %v825, 0.0
  %v1048 = vmax.f32 %v830, 0.0
  %v1049 = vmax.f32 %v833, 0.0
  %v1050 = vmax.f32 %v838, 0.0
  %v1051 = vmax.f32 %v841, 0.0
  %v1052 = vmax.f32 %v846, 0.0
  %v1053 = vmax.f32 %v849, 0.0
  %v1054 = vmax.f32 %v854, 0.0
  %v1055 = vmax.f32 %v857, 0.0
  %v1056 = vmax.f32 %v862, 0.0
  %v1057 = vmax.f32 %v865, 0.0
  %v1058 = vmax.f32 %v870, 0.0
  %v1059 = vmax.f32 %v873, 0.0
  %v1060 = vmax.f32 %v878, 0.0
  %v1061 = vmax.f32 %v881, 0.0
  %v1062 = vmax.f32 %v886, 0.0
  %v1063 = vmax.f32 %v889, 0.0
  %v1064 = vmax.f32 %v894, 0.0
  %v1065 = vmax.f32 %v897, 0.0
  %v1066 = vmax.f32 %v902, 0.0
  %v1067 = vmax.f32 %v905, 0.0
  %v1068 = vmax.f32 %v910, 0.0
  %v1069 = vmax.f32 %v913, 0.0
  %v1070 = vmax.f32 %v918, 0.0
  %v1071 = vmax.f32 %v921, 0.0
  %v1072 = vmax.f32 %v926, 0.0
  %v1073 = vmax.f32 %v929, 0.0
  %v1074 = vmax.f32 %v934, 0.0
  %v1075 = vmax.f32 %v937, 0.0
  %v1076 = vmax.f32 %v942, 0.0
  %v1077 = vmax.f32 %v945, 0.0
  %v1078 = vmax.f32 %v950, 0.0
  %v1079 = vmax.f32 %v953, 0.0
  %v1080 = vmax.f32 %v958, 0.0
  %v1081 = vmax.f32 %v961, 0.0
  %v1082 = vmax.f32 %v966, 0.0
  %v1083 = vmax.f32 %v969, 0.0
  %v1084 = vmax.f32 %v974, 0.0
  %v1085 = vmax.f32 %v977, 0.0
  %v1086 = vmax.f32 %v982, 0.0
  %v1087 = vmax.f32 %v985, 0.0
  %v1088 = vpack.c.bf16 %v989, %v988
  %v1089 = vpack.c.bf16 %v991, %v990
  %v1090 = vpack.c.bf16 %v993, %v992
  %v1091 = vpack.c.bf16 %v995, %v994
  %v1092 = vpack.c.bf16 %v997, %v996
  %v1093 = vpack.c.bf16 %v999, %v998
  %v1094 = vpack.c.bf16 %v1001, %v1000
  %v1095 = vpack.c.bf16 %v1003, %v1002
  %v1096 = vpack.c.bf16 %v1005, %v1004
  %v1097 = vpack.c.bf16 %v1007, %v1006
  %v1098 = vpack.c.bf16 %v1009, %v1008
  %v1099 = vpack.c.bf16 %v1011, %v1010
  %v1100 = vpack.c.bf16 %v1013, %v1012
  %v1101 = vpack.c.bf16 %v1015, %v1014
  %v1102 = vpack.c.bf16 %v1017, %v1016
  %v1103 = vpack.c.bf16 %v1019, %v1018
  %v1104 = vpack.c.bf16 %v1021, %v1020
  %v1105 = vpack.c.bf16 %v1023, %v1022
  %v1106 = vpack.c.bf16 %v1025, %v1024
  %v1107 = vpack.c.bf16 %v1027, %v1026
  %v1108 = vpack.c.bf16 %v1029, %v1028
  %v1109 = vpack.c.bf16 %v1031, %v1030
  %v1110 = vpack.c.bf16 %v1033, %v1032
  %v1111 = vpack.c.bf16 %v1035, %v1034
  %v1112 = vpack.c.bf16 %v1037, %v1036
  %v1113 = vpack.c.bf16 %v1039, %v1038
  %v1114 = vpack.c.bf16 %v1041, %v1040
  %v1115 = vpack.c.bf16 %v1043, %v1042
  %v1116 = vpack.c.bf16 %v1045, %v1044
  %v1117 = vpack.c.bf16 %v1047, %v1046
  %v1118 = vpack.c.bf16 %v1049, %v1048
  %v1119 = vpack.c.bf16 %v1051, %v1050
  %v1120 = vpack.c.bf16 %v1053, %v1052
  %v1121 = vpack.c.bf16 %v1055, %v1054
  %v1122 = vpack.c.bf16 %v1057, %v1056
  %v1123 = vpack.c.bf16 %v1059, %v1058
  %v1124 = vpack.c.bf16 %v1061, %v1060
  %v1125 = vpack.c.bf16 %v1063, %v1062
  %v1126 = vpack.c.bf16 %v1065, %v1064
  %v1127 = vpack.c.bf16 %v1067, %v1066
  %v1128 = vpack.c.bf16 %v1069, %v1068
  %v1129 = vpack.c.bf16 %v1071, %v1070
  %v1130 = vpack.c.bf16 %v1073, %v1072
  %v1131 = vpack.c.bf16 %v1075, %v1074
  %v1132 = vpack.c.bf16 %v1077, %v1076
  %v1133 = vpack.c.bf16 %v1079, %v1078
  %v1134 = vpack.c.bf16 %v1081, %v1080
  %v1135 = vpack.c.bf16 %v1083, %v1082
  %v1136 = vpack.c.bf16 %v1085, %v1084
  %v1137 = vpack.c.bf16 %v1087, %v1086
  %v1188 = vunpack.c.l.b16 %v1088
  %v1189 = vunpack.c.h.b16 %v1088
  %v1190 = vunpack.c.l.b16 %v1089
  %v1191 = vunpack.c.h.b16 %v1089
  %v1192 = vunpack.c.l.b16 %v1090
  %v1193 = vunpack.c.h.b16 %v1090
  %v1194 = vunpack.c.l.b16 %v1091
  %v1195 = vunpack.c.h.b16 %v1091
  %v1196 = vunpack.c.l.b16 %v1092
  %v1197 = vunpack.c.h.b16 %v1092
  %v1198 = vunpack.c.l.b16 %v1093
  %v1199 = vunpack.c.h.b16 %v1093
  %v1200 = vunpack.c.l.b16 %v1094
  %v1201 = vunpack.c.h.b16 %v1094
  %v1202 = vunpack.c.l.b16 %v1095
  %v1203 = vunpack.c.h.b16 %v1095
  %v1204 = vunpack.c.l.b16 %v1096
  %v1205 = vunpack.c.h.b16 %v1096
  %v1206 = vunpack.c.l.b16 %v1097
  %v1207 = vunpack.c.h.b16 %v1097
  %v1208 = vunpack.c.l.b16 %v1098
  %v1209 = vunpack.c.h.b16 %v1098
  %v1210 = vunpack.c.l.b16 %v1099
  %v1211 = vunpack.c.h.b16 %v1099
  %v1212 = vunpack.c.l.b16 %v1100
  %v1213 = vunpack.c.h.b16 %v1100
  %v1214 = vunpack.c.l.b16 %v1101
  %v1215 = vunpack.c.h.b16 %v1101
  %v1216 = vunpack.c.l.b16 %v1102
  %v1217 = vunpack.c.h.b16 %v1102
  %v1218 = vunpack.c.l.b16 %v1103
  %v1219 = vunpack.c.h.b16 %v1103
  %v1220 = vunpack.c.l.b16 %v1104
  %v1221 = vunpack.c.h.b16 %v1104
  %v1222 = vunpack.c.l.b16 %v1105
  %v1223 = vunpack.c.h.b16 %v1105
  %v1224 = vunpack.c.l.b16 %v1106
  %v1225 = vunpack.c.h.b16 %v1106
  %v1226 = vunpack.c.l.b16 %v1107
  %v1227 = vunpack.c.h.b16 %v1107
  %v1228 = vunpack.c.l.b16 %v1108
  %v1229 = vunpack.c.h.b16 %v1108
  %v1230 = vunpack.c.l.b16 %v1109
  %v1231 = vunpack.c.h.b16 %v1109
  %v1232 = vunpack.c.l.b16 %v1110
  %v1233 = vunpack.c.h.b16 %v1110
  %v1234 = vunpack.c.l.b16 %v1111
  %v1235 = vunpack.c.h.b16 %v1111
  %v1236 = vunpack.c.l.b16 %v1112
  %v1237 = vunpack.c.h.b16 %v1112
  %v1238 = vunpack.c.l.b16 %v1113
  %v1239 = vunpack.c.h.b16 %v1113
  %v1240 = vunpack.c.l.b16 %v1114
  %v1241 = vunpack.c.h.b16 %v1114
  %v1242 = vunpack.c.l.b16 %v1115
  %v1243 = vunpack.c.h.b16 %v1115
  %v1244 = vunpack.c.l.b16 %v1116
  %v1245 = vunpack.c.h.b16 %v1116
  %v1246 = vunpack.c.l.b16 %v1117
  %v1247 = vunpack.c.h.b16 %v1117
  %v1248 = vunpack.c.l.b16 %v1118
  %v1249 = vunpack.c.h.b16 %v1118
  %v1250 = vunpack.c.l.b16 %v1119
  %v1251 = vunpack.c.h.b16 %v1119
  %v1252 = vunpack.c.l.b16 %v1120
  %v1253 = vunpack.c.h.b16 %v1120
  %v1254 = vunpack.c.l.b16 %v1121
  %v1255 = vunpack.c.h.b16 %v1121
  %v1256 = vunpack.c.l.b16 %v1122
  %v1257 = vunpack.c.h.b16 %v1122
  %v1258 = vunpack.c.l.b16 %v1123
  %v1259 = vunpack.c.h.b16 %v1123
  %v1260 = vunpack.c.l.b16 %v1124
  %v1261 = vunpack.c.h.b16 %v1124
  %v1262 = vunpack.c.l.b16 %v1125
  %v1263 = vunpack.c.h.b16 %v1125
  %v1264 = vunpack.c.l.b16 %v1126
  %v1265 = vunpack.c.h.b16 %v1126
  %v1266 = vunpack.c.l.b16 %v1127
  %v1267 = vunpack.c.h.b16 %v1127
  %v1268 = vunpack.c.l.b16 %v1128
  %v1269 = vunpack.c.h.b16 %v1128
  %v1270 = vunpack.c.l.b16 %v1129
  %v1271 = vunpack.c.h.b16 %v1129
  %v1272 = vunpack.c.l.b16 %v1130
  %v1273 = vunpack.c.h.b16 %v1130
  %v1274 = vunpack.c.l.b16 %v1131
  %v1275 = vunpack.c.h.b16 %v1131
  %v1276 = vunpack.c.l.b16 %v1132
  %v1277 = vunpack.c.h.b16 %v1132
  %v1278 = vunpack.c.l.b16 %v1133
  %v1279 = vunpack.c.h.b16 %v1133
  %v1280 = vunpack.c.l.b16 %v1134
  %v1281 = vunpack.c.h.b16 %v1134
  %v1282 = vunpack.c.l.b16 %v1135
  %v1283 = vunpack.c.h.b16 %v1135
  %v1284 = vunpack.c.l.b16 %v1136
  %v1285 = vunpack.c.h.b16 %v1136
  %v1286 = vunpack.c.l.b16 %v1137
  %v1287 = vunpack.c.h.b16 %v1137
  %v1288 = vpack.c.b16 %v1188, %v1188
  %v1289 = vpack.c.b16 %v1189, %v1189
  %v1290 = vpack.c.b16 %v1190, %v1190
  %v1291 = vpack.c.b16 %v1191, %v1191
  %v1292 = vpack.c.b16 %v1192, %v1192
  %v1293 = vpack.c.b16 %v1193, %v1193
  %v1294 = vpack.c.b16 %v1194, %v1194
  %v1295 = vpack.c.b16 %v1195, %v1195
  %v1296 = vpack.c.b16 %v1196, %v1196
  %v1297 = vpack.c.b16 %v1197, %v1197
  %v1298 = vpack.c.b16 %v1198, %v1198
  %v1299 = vpack.c.b16 %v1199, %v1199
  %v1300 = vpack.c.b16 %v1200, %v1200
  %v1301 = vpack.c.b16 %v1201, %v1201
  %v1302 = vpack.c.b16 %v1202, %v1202
  %v1303 = vpack.c.b16 %v1203, %v1203
  %v1304 = vpack.c.b16 %v1204, %v1204
  %v1305 = vpack.c.b16 %v1205, %v1205
  %v1306 = vpack.c.b16 %v1206, %v1206
  %v1307 = vpack.c.b16 %v1207, %v1207
  %v1308 = vpack.c.b16 %v1208, %v1208
  %v1309 = vpack.c.b16 %v1209, %v1209
  %v1310 = vpack.c.b16 %v1210, %v1210
  %v1311 = vpack.c.b16 %v1211, %v1211
  %v1312 = vpack.c.b16 %v1212, %v1212
  %v1313 = vpack.c.b16 %v1213, %v1213
  %v1314 = vpack.c.b16 %v1214, %v1214
  %v1315 = vpack.c.b16 %v1215, %v1215
  %v1316 = vpack.c.b16 %v1216, %v1216
  %v1317 = vpack.c.b16 %v1217, %v1217
  %v1318 = vpack.c.b16 %v1218, %v1218
  %v1319 = vpack.c.b16 %v1219, %v1219
  %v1320 = vpack.c.b16 %v1220, %v1220
  %v1321 = vpack.c.b16 %v1221, %v1221
  %v1322 = vpack.c.b16 %v1222, %v1222
  %v1323 = vpack.c.b16 %v1223, %v1223
  %v1324 = vpack.c.b16 %v1224, %v1224
  %v1325 = vpack.c.b16 %v1225, %v1225
  %v1326 = vpack.c.b16 %v1226, %v1226
  %v1327 = vpack.c.b16 %v1227, %v1227
  %v1328 = vpack.c.b16 %v1228, %v1228
  %v1329 = vpack.c.b16 %v1229, %v1229
  %v1330 = vpack.c.b16 %v1230, %v1230
  %v1331 = vpack.c.b16 %v1231, %v1231
  %v1332 = vpack.c.b16 %v1232, %v1232
  %v1333 = vpack.c.b16 %v1233, %v1233
  %v1334 = vpack.c.b16 %v1234, %v1234
  %v1335 = vpack.c.b16 %v1235, %v1235
  %v1336 = vpack.c.b16 %v1236, %v1236
  %v1337 = vpack.c.b16 %v1237, %v1237
  %v1338 = vpack.c.b16 %v1238, %v1238
  %v1339 = vpack.c.b16 %v1239, %v1239
  %v1340 = vpack.c.b16 %v1240, %v1240
  %v1341 = vpack.c.b16 %v1241, %v1241
  %v1342 = vpack.c.b16 %v1242, %v1242
  %v1343 = vpack.c.b16 %v1243, %v1243
  %v1344 = vpack.c.b16 %v1244, %v1244
  %v1345 = vpack.c.b16 %v1245, %v1245
  %v1346 = vpack.c.b16 %v1246, %v1246
  %v1347 = vpack.c.b16 %v1247, %v1247
  %v1348 = vpack.c.b16 %v1248, %v1248
  %v1349 = vpack.c.b16 %v1249, %v1249
  %v1350 = vpack.c.b16 %v1250, %v1250
  %v1351 = vpack.c.b16 %v1251, %v1251
  %v1352 = vpack.c.b16 %v1252, %v1252
  %v1353 = vpack.c.b16 %v1253, %v1253
  %v1354 = vpack.c.b16 %v1254, %v1254
  %v1355 = vpack.c.b16 %v1255, %v1255
  %v1356 = vpack.c.b16 %v1256, %v1256
  %v1357 = vpack.c.b16 %v1257, %v1257
  %v1358 = vpack.c.b16 %v1258, %v1258
  %v1359 = vpack.c.b16 %v1259, %v1259
  %v1360 = vpack.c.b16 %v1260, %v1260
  %v1361 = vpack.c.b16 %v1261, %v1261
  %v1362 = vpack.c.b16 %v1262, %v1262
  %v1363 = vpack.c.b16 %v1263, %v1263
  %v1364 = vpack.c.b16 %v1264, %v1264
  %v1365 = vpack.c.b16 %v1265, %v1265
  %v1366 = vpack.c.b16 %v1266, %v1266
  %v1367 = vpack.c.b16 %v1267, %v1267
  %v1368 = vpack.c.b16 %v1268, %v1268
  %v1369 = vpack.c.b16 %v1269, %v1269
  %v1370 = vpack.c.b16 %v1270, %v1270
  %v1371 = vpack.c.b16 %v1271, %v1271
  %v1372 = vpack.c.b16 %v1272, %v1272
  %v1373 = vpack.c.b16 %v1273, %v1273
  %v1374 = vpack.c.b16 %v1274, %v1274
  %v1375 = vpack.c.b16 %v1275, %v1275
  %v1376 = vpack.c.b16 %v1276, %v1276
  %v1377 = vpack.c.b16 %v1277, %v1277
  %v1378 = vpack.c.b16 %v1278, %v1278
  %v1379 = vpack.c.b16 %v1279, %v1279
  %v1380 = vpack.c.b16 %v1280, %v1280
  %v1381 = vpack.c.b16 %v1281, %v1281
  %v1382 = vpack.c.b16 %v1282, %v1282
  %v1383 = vpack.c.b16 %v1283, %v1283
  %v1384 = vpack.c.b16 %v1284, %v1284
  %v1385 = vpack.c.b16 %v1285, %v1285
  %v1386 = vpack.c.b16 %v1286, %v1286
  %v1387 = vpack.c.b16 %v1287, %v1287
  %vm1488 = vcmask 125952
  %1489 = vst.msk [vmem:[%s3] sm:$0xf] %vm1488, %v1288
  %1490 = vst.msk [vmem:[%s3 + $0x4] sm:$0xf] %vm1488, %v1289
  %1491 = vst.msk [vmem:[%s3 + $0x8] sm:$0xf] %vm1488, %v1290
  %1492 = vst.msk [vmem:[%s3 + $0xc] sm:$0xf] %vm1488, %v1291
  %1493 = vst.msk [vmem:[%s3 + $0x10] sm:$0xf] %vm1488, %v1292
  %1494 = vst.msk [vmem:[%s3 + $0x14] sm:$0xf] %vm1488, %v1293
  %1495 = vst.msk [vmem:[%s3 + $0x18] sm:$0xf] %vm1488, %v1294
  %1496 = vst.msk [vmem:[%s3 + $0x1c] sm:$0xf] %vm1488, %v1295
  %1497 = vst.msk [vmem:[%s3 + $0x20] sm:$0xf] %vm1488, %v1296
  %1498 = vst.msk [vmem:[%s3 + $0x24] sm:$0xf] %vm1488, %v1297
  %1499 = vst.msk [vmem:[%s3 + $0x28] sm:$0xf] %vm1488, %v1298
  %1500 = vst.msk [vmem:[%s3 + $0x2c] sm:$0xf] %vm1488, %v1299
  %1501 = vst.msk [vmem:[%s3 + $0x30] sm:$0xf] %vm1488, %v1300
  %1502 = vst.msk [vmem:[%s3 + $0x34] sm:$0xf] %vm1488, %v1301
  %1503 = vst.msk [vmem:[%s3 + $0x38] sm:$0xf] %vm1488, %v1302
  %1504 = vst.msk [vmem:[%s3 + $0x3c] sm:$0xf] %vm1488, %v1303
  %1505 = vst.msk [vmem:[%s3 + $0x40] sm:$0xf] %vm1488, %v1304
  %1506 = vst.msk [vmem:[%s3 + $0x44] sm:$0xf] %vm1488, %v1305
  %1507 = vst.msk [vmem:[%s3 + $0x48] sm:$0xf] %vm1488, %v1306
  %1508 = vst.msk [vmem:[%s3 + $0x4c] sm:$0xf] %vm1488, %v1307
  %1509 = vst.msk [vmem:[%s3 + $0x50] sm:$0xf] %vm1488, %v1308
  %1510 = vst.msk [vmem:[%s3 + $0x54] sm:$0xf] %vm1488, %v1309
  %1511 = vst.msk [vmem:[%s3 + $0x58] sm:$0xf] %vm1488, %v1310
  %1512 = vst.msk [vmem:[%s3 + $0x5c] sm:$0xf] %vm1488, %v1311
  %1513 = vst.msk [vmem:[%s3 + $0x60] sm:$0xf] %vm1488, %v1312
  %1514 = vst.msk [vmem:[%s3 + $0x64] sm:$0xf] %vm1488, %v1313
  %1515 = vst.msk [vmem:[%s3 + $0x68] sm:$0xf] %vm1488, %v1314
  %1516 = vst.msk [vmem:[%s3 + $0x6c] sm:$0xf] %vm1488, %v1315
  %1517 = vst.msk [vmem:[%s3 + $0x70] sm:$0xf] %vm1488, %v1316
  %1518 = vst.msk [vmem:[%s3 + $0x74] sm:$0xf] %vm1488, %v1317
  %1519 = vst.msk [vmem:[%s3 + $0x78] sm:$0xf] %vm1488, %v1318
  %1520 = vst.msk [vmem:[%s3 + $0x7c] sm:$0xf] %vm1488, %v1319
  %1521 = vst.msk [vmem:[%s3 + $0x80] sm:$0xf] %vm1488, %v1320
  %1522 = vst.msk [vmem:[%s3 + $0x84] sm:$0xf] %vm1488, %v1321
  %1523 = vst.msk [vmem:[%s3 + $0x88] sm:$0xf] %vm1488, %v1322
  %1524 = vst.msk [vmem:[%s3 + $0x8c] sm:$0xf] %vm1488, %v1323
  %1525 = vst.msk [vmem:[%s3 + $0x90] sm:$0xf] %vm1488, %v1324
  %1526 = vst.msk [vmem:[%s3 + $0x94] sm:$0xf] %vm1488, %v1325
  %1527 = vst.msk [vmem:[%s3 + $0x98] sm:$0xf] %vm1488, %v1326
  %1528 = vst.msk [vmem:[%s3 + $0x9c] sm:$0xf] %vm1488, %v1327
  %1529 = vst.msk [vmem:[%s3 + $0xa0] sm:$0xf] %vm1488, %v1328
  %1530 = vst.msk [vmem:[%s3 + $0xa4] sm:$0xf] %vm1488, %v1329
  %1531 = vst.msk [vmem:[%s3 + $0xa8] sm:$0xf] %vm1488, %v1330
  %1532 = vst.msk [vmem:[%s3 + $0xac] sm:$0xf] %vm1488, %v1331
  %1533 = vst.msk [vmem:[%s3 + $0xb0] sm:$0xf] %vm1488, %v1332
  %1534 = vst.msk [vmem:[%s3 + $0xb4] sm:$0xf] %vm1488, %v1333
  %1535 = vst.msk [vmem:[%s3 + $0xb8] sm:$0xf] %vm1488, %v1334
  %1536 = vst.msk [vmem:[%s3 + $0xbc] sm:$0xf] %vm1488, %v1335
  %1537 = vst.msk [vmem:[%s3 + $0xc0] sm:$0xf] %vm1488, %v1336
  %1538 = vst.msk [vmem:[%s3 + $0xc4] sm:$0xf] %vm1488, %v1337
  %1539 = vst.msk [vmem:[%s3 + $0xc8] sm:$0xf] %vm1488, %v1338
  %1540 = vst.msk [vmem:[%s3 + $0xcc] sm:$0xf] %vm1488, %v1339
  %1541 = vst.msk [vmem:[%s3 + $0xd0] sm:$0xf] %vm1488, %v1340
  %1542 = vst.msk [vmem:[%s3 + $0xd4] sm:$0xf] %vm1488, %v1341
  %1543 = vst.msk [vmem:[%s3 + $0xd8] sm:$0xf] %vm1488, %v1342
  %1544 = vst.msk [vmem:[%s3 + $0xdc] sm:$0xf] %vm1488, %v1343
  %1545 = vst.msk [vmem:[%s3 + $0xe0] sm:$0xf] %vm1488, %v1344
  %1546 = vst.msk [vmem:[%s3 + $0xe4] sm:$0xf] %vm1488, %v1345
  %1547 = vst.msk [vmem:[%s3 + $0xe8] sm:$0xf] %vm1488, %v1346
  %1548 = vst.msk [vmem:[%s3 + $0xec] sm:$0xf] %vm1488, %v1347
  %1549 = vst.msk [vmem:[%s3 + $0xf0] sm:$0xf] %vm1488, %v1348
  %1550 = vst.msk [vmem:[%s3 + $0xf4] sm:$0xf] %vm1488, %v1349
  %1551 = vst.msk [vmem:[%s3 + $0xf8] sm:$0xf] %vm1488, %v1350
  %1552 = vst.msk [vmem:[%s3 + $0xfc] sm:$0xf] %vm1488, %v1351
  %1553 = vst.msk [vmem:[%s3 + $0x100] sm:$0xf] %vm1488, %v1352
  %1554 = vst.msk [vmem:[%s3 + $0x104] sm:$0xf] %vm1488, %v1353
  %1555 = vst.msk [vmem:[%s3 + $0x108] sm:$0xf] %vm1488, %v1354
  %1556 = vst.msk [vmem:[%s3 + $0x10c] sm:$0xf] %vm1488, %v1355
  %1557 = vst.msk [vmem:[%s3 + $0x110] sm:$0xf] %vm1488, %v1356
  %1558 = vst.msk [vmem:[%s3 + $0x114] sm:$0xf] %vm1488, %v1357
  %1559 = vst.msk [vmem:[%s3 + $0x118] sm:$0xf] %vm1488, %v1358
  %1560 = vst.msk [vmem:[%s3 + $0x11c] sm:$0xf] %vm1488, %v1359
  %1561 = vst.msk [vmem:[%s3 + $0x120] sm:$0xf] %vm1488, %v1360
  %1562 = vst.msk [vmem:[%s3 + $0x124] sm:$0xf] %vm1488, %v1361
  %1563 = vst.msk [vmem:[%s3 + $0x128] sm:$0xf] %vm1488, %v1362
  %1564 = vst.msk [vmem:[%s3 + $0x12c] sm:$0xf] %vm1488, %v1363
  %1565 = vst.msk [vmem:[%s3 + $0x130] sm:$0xf] %vm1488, %v1364
  %1566 = vst.msk [vmem:[%s3 + $0x134] sm:$0xf] %vm1488, %v1365
  %1567 = vst.msk [vmem:[%s3 + $0x138] sm:$0xf] %vm1488, %v1366
  %1568 = vst.msk [vmem:[%s3 + $0x13c] sm:$0xf] %vm1488, %v1367
  %1569 = vst.msk [vmem:[%s3 + $0x140] sm:$0xf] %vm1488, %v1368
  %1570 = vst.msk [vmem:[%s3 + $0x144] sm:$0xf] %vm1488, %v1369
  %1571 = vst.msk [vmem:[%s3 + $0x148] sm:$0xf] %vm1488, %v1370
  %1572 = vst.msk [vmem:[%s3 + $0x14c] sm:$0xf] %vm1488, %v1371
  %1573 = vst.msk [vmem:[%s3 + $0x150] sm:$0xf] %vm1488, %v1372
  %1574 = vst.msk [vmem:[%s3 + $0x154] sm:$0xf] %vm1488, %v1373
  %1575 = vst.msk [vmem:[%s3 + $0x158] sm:$0xf] %vm1488, %v1374
  %1576 = vst.msk [vmem:[%s3 + $0x15c] sm:$0xf] %vm1488, %v1375
  %1577 = vst.msk [vmem:[%s3 + $0x160] sm:$0xf] %vm1488, %v1376
  %1578 = vst.msk [vmem:[%s3 + $0x164] sm:$0xf] %vm1488, %v1377
  %1579 = vst.msk [vmem:[%s3 + $0x168] sm:$0xf] %vm1488, %v1378
  %1580 = vst.msk [vmem:[%s3 + $0x16c] sm:$0xf] %vm1488, %v1379
  %1581 = vst.msk [vmem:[%s3 + $0x170] sm:$0xf] %vm1488, %v1380
  %1582 = vst.msk [vmem:[%s3 + $0x174] sm:$0xf] %vm1488, %v1381
  %1583 = vst.msk [vmem:[%s3 + $0x178] sm:$0xf] %vm1488, %v1382
  %1584 = vst.msk [vmem:[%s3 + $0x17c] sm:$0xf] %vm1488, %v1383
  %1585 = vst.msk [vmem:[%s3 + $0x180] sm:$0xf] %vm1488, %v1384
  %1586 = vst.msk [vmem:[%s3 + $0x184] sm:$0xf] %vm1488, %v1385
  %1587 = vst.msk [vmem:[%s3 + $0x188] sm:$0xf] %vm1488, %v1386
  %1588 = vst.msk [vmem:[%s3 + $0x18c] sm:$0xf] %vm1488, %v1387
  // Predicated region
  $region14: #{cnn_model_forward.2} parent=0 // pred_check
    _
  $region15: #{cnn_model_forward.2} parent=0 // pred_check_branch
    %1590 = sbr.rel (0) target = $region17
  $region16: #{cnn_model_forward.2} parent=0 // pred_region
    _
  $region17: #{cnn_model_forward.2} parent=0 // pred_fallthru
    _
  // Predicated region
  $region18: #{cnn_model_forward.2} parent=0 // pred_check
    _
  $region19: #{cnn_model_forward.2} parent=0 // pred_check_branch
    %1592 = sbr.rel (0) target = $region21
  $region20: #{cnn_model_forward.2} parent=0 // pred_region
    _
  $region21: #{cnn_model_forward.2} parent=0 // pred_fallthru
    _

// kernel: cnn_model_forward.3
$region0: #{cnn_model_forward.3}
  #allocation0 [shape = 'u32[]', space=smem, size = 0x4, offset = 0x4, fixed_abs, tag = 'smem constant byte address 0x4 - core index']
  #allocation1 [shape = 'u32[144,128]{1,0:T(1,128)}', space=vmem, size = 0x12000, scoped, tag = 'internal scratch']
  #allocation2 [shape = 'f32[2,4096]{1,0:T(2,128)}', space=vmem, size = 0x8000, scoped, tag = 'scratch operand']
  %s0 = inlined_call_operand.vmem [shape: bf16[256,256], index: 0, kind: input, shape index: {}]
  %s1 = inlined_call_operand.vmem [shape: bf16[32,256], index: 1, kind: input, shape index: {}]
  %s2 = inlined_call_operand.vmem [shape: f32[32,1], index: 2, kind: input, shape index: {}]
  %s3 = inlined_call_operand.vmem [shape: bf16[4096,200], index: 3, kind: input, shape index: {}]
  %s4 = inlined_call_operand.vmem [shape: f32[1,200], index: 4, kind: input, shape index: {}]
  %s5 = inlined_call_operand.vmem [shape: bf16[200,128], index: 5, kind: input, shape index: {}]
  %s6 = inlined_call_operand.vmem [shape: f32[1,128], index: 6, kind: input, shape index: {}]
  %s7 = inlined_call_operand.hbm [shape: f32[2,128], index: 7, kind: output, shape index: {}]
  %s8 = sld [smem:[#allocation0]]
  $region38: #{cnn_model_forward.3} parent=0
    _
  %s10 = ssub.s32 1, %s8
  %s11 = scalar_select 0, %s10, %s8
  $region1: #{cnn_model_forward.3} parent=0
    #allocation3 [shape = 'u8[1024]{0}', space=vmem, size = 0x400, scoped, tag = 'output window, operand 0, single buffered']
    #allocation4 [shape = 's32[1]{0}', space=sflag, size = 0x4, scoped, tag = 'scoped memory for cnn_model_forward.3']
    %12 = vsyncpa [#allocation4], 0
    // Predicated region
    $region2: #{cnn_model_forward.3} parent=1 // pred_check
      _
    $region3: #{cnn_model_forward.3} parent=1 // pred_check_branch
      %14 = sbr.rel (0) target = $region5
    $region4: #{cnn_model_forward.3} parent=1 // pred_region
      _
    $region5: #{cnn_model_forward.3} parent=1 // pred_fallthru
      _
    // Predicated region
    $region6: #{cnn_model_forward.3} parent=1 // pred_check
      _
    $region7: #{cnn_model_forward.3} parent=1 // pred_check_branch
      %16 = sbr.rel (0) target = $region9
    $region8: #{cnn_model_forward.3} parent=1 // pred_region
      _
    $region9: #{cnn_model_forward.3} parent=1 // pred_fallthru
      _
    // Predicated region
    $region10: #{cnn_model_forward.3} parent=1 // pred_check
      _
    $region11: #{cnn_model_forward.3} parent=1 // pred_check_branch
      %18 = sbr.rel (0) target = $region13
    $region12: #{cnn_model_forward.3} parent=1 // pred_region
      _
    $region13: #{cnn_model_forward.3} parent=1 // pred_fallthru
      _
    // Predicated region
    $region14: #{cnn_model_forward.3} parent=1 // pred_check
      _
    $region15: #{cnn_model_forward.3} parent=1 // pred_check_branch
      %20 = sbr.rel (0) target = $region17
    $region16: #{cnn_model_forward.3} parent=1 // pred_region
      _
    $region17: #{cnn_model_forward.3} parent=1 // pred_fallthru
      _
    // Predicated region
    $region18: #{cnn_model_forward.3} parent=1 // pred_check
      _
    $region19: #{cnn_model_forward.3} parent=1 // pred_check_branch
      %22 = sbr.rel (0) target = $region21
    $region20: #{cnn_model_forward.3} parent=1 // pred_region
      _
    $region21: #{cnn_model_forward.3} parent=1 // pred_fallthru
      _
    // Predicated region
    $region22: #{cnn_model_forward.3} parent=1 // pred_check
      _
    $region23: #{cnn_model_forward.3} parent=1 // pred_check_branch
      %24 = sbr.rel (0) target = $region25
    $region24: #{cnn_model_forward.3} parent=1 // pred_region
      _
    $region25: #{cnn_model_forward.3} parent=1 // pred_fallthru
      _
    // Predicated region
    $region26: #{cnn_model_forward.3} parent=1 // pred_check
      _
    $region27: #{cnn_model_forward.3} parent=1 // pred_check_branch
      %26 = sbr.rel (0) target = $region29
    $region28: #{cnn_model_forward.3} parent=1 // pred_region
      _
    $region29: #{cnn_model_forward.3} parent=1 // pred_fallthru
      _
    %v28 = vld [vmem:[%s1] sm:$0xff]
    %v29 = vld [vmem:[%s1 + $0x8] sm:$0xff]
    %v30 = vld [vmem:[%s1 + $0x10] sm:$0xff]
    %v31 = vld [vmem:[%s1 + $0x18] sm:$0xff]
    %v32 = vld [vmem:[%s0] sm:$0xff]
    %v33 = vld [vmem:[%s0 + $0x8] sm:$0xff]
    %v34 = vld [vmem:[%s0 + $0x10] sm:$0xff]
    %v35 = vld [vmem:[%s0 + $0x18] sm:$0xff]
    %v36 = vld [vmem:[%s0 + $0x20] sm:$0xff]
    %v37 = vld [vmem:[%s0 + $0x28] sm:$0xff]
    %v38 = vld [vmem:[%s0 + $0x30] sm:$0xff]
    %v39 = vld [vmem:[%s0 + $0x38] sm:$0xff]
    %v40 = vld [vmem:[%s0 + $0x40] sm:$0xff]
    %v41 = vld [vmem:[%s0 + $0x48] sm:$0xff]
    %v42 = vld [vmem:[%s0 + $0x50] sm:$0xff]
    %v43 = vld [vmem:[%s0 + $0x58] sm:$0xff]
    %v44 = vld [vmem:[%s0 + $0x60] sm:$0xff]
    %v45 = vld [vmem:[%s0 + $0x68] sm:$0xff]
    %v46 = vld [vmem:[%s0 + $0x70] sm:$0xff]
    %v47 = vld [vmem:[%s0 + $0x78] sm:$0xff]
    %v48 = vld [vmem:[%s0 + $0x80] sm:$0xff]
    %v49 = vld [vmem:[%s0 + $0x88] sm:$0xff]
    %v50 = vld [vmem:[%s0 + $0x90] sm:$0xff]
    %v51 = vld [vmem:[%s0 + $0x98] sm:$0xff]
    %v52 = vld [vmem:[%s0 + $0xa0] sm:$0xff]
    %v53 = vld [vmem:[%s0 + $0xa8] sm:$0xff]
    %v54 = vld [vmem:[%s0 + $0xb0] sm:$0xff]
    %v55 = vld [vmem:[%s0 + $0xb8] sm:$0xff]
    %v56 = vld [vmem:[%s0 + $0xc0] sm:$0xff]
    %v57 = vld [vmem:[%s0 + $0xc8] sm:$0xff]
    %v58 = vld [vmem:[%s0 + $0xd0] sm:$0xff]
    %v59 = vld [vmem:[%s0 + $0xd8] sm:$0xff]
    %v60 = vld [vmem:[%s0 + $0xe0] sm:$0xff]
    %v61 = vld [vmem:[%s0 + $0xe8] sm:$0xff]
    %v62 = vld [vmem:[%s0 + $0xf0] sm:$0xff]
    %v63 = vld [vmem:[%s0 + $0xf8] sm:$0xff]
    %v64 = vld [vmem:[%s2] sm:$0xff]
    %v65 = vld [vmem:[%s2 + $0x8] sm:$0xff]
    %v66 = vld [vmem:[%s2 + $0x10] sm:$0xff]
    %v67 = vld [vmem:[%s2 + $0x18] sm:$0xff]
    %69 = vset.pattern.permute.xlu0 0
    %70 = vperm.xlu0 %69, %v64
    %v71 = vpop.permute.xlu0 %70
    %74 = vset.pattern.permute.xlu0 0
    %75 = vperm.xlu0 %74, %v65
    %v76 = vpop.permute.xlu0 %75
    %79 = vset.pattern.permute.xlu0 0
    %80 = vperm.xlu0 %79, %v66
    %v81 = vpop.permute.xlu0 %80
    %84 = vset.pattern.permute.xlu0 0
    %85 = vperm.xlu0 %84, %v67
    %v86 = vpop.permute.xlu0 %85
    %v92 = vunpack.c.l.b16 %v28
    %v93 = vunpack.c.h.b16 %v28
    %v94 = vunpack.c.l.b16 %v29
    %v95 = vunpack.c.h.b16 %v29
    %v96 = vunpack.c.l.b16 %v30
    %v97 = vunpack.c.h.b16 %v30
    %v98 = vunpack.c.l.b16 %v31
    %v99 = vunpack.c.h.b16 %v31
    %v100 = vpack.c.b16 %v94, %v92
    %v101 = vpack.c.b16 %v95, %v93
    %v102 = vpack.c.b16 %v98, %v96
    %v103 = vpack.c.b16 %v99, %v97
    %v140 = vunpack.c.l.b16 %v32
    %v141 = vunpack.c.h.b16 %v32
    %v142 = vunpack.c.l.b16 %v33
    %v143 = vunpack.c.h.b16 %v33
    %v144 = vunpack.c.l.b16 %v34
    %v145 = vunpack.c.h.b16 %v34
    %v146 = vunpack.c.l.b16 %v35
    %v147 = vunpack.c.h.b16 %v35
    %v148 = vunpack.c.l.b16 %v36
    %v149 = vunpack.c.h.b16 %v36
    %v150 = vunpack.c.l.b16 %v37
    %v151 = vunpack.c.h.b16 %v37
    %v152 = vunpack.c.l.b16 %v38
    %v153 = vunpack.c.h.b16 %v38
    %v154 = vunpack.c.l.b16 %v39
    %v155 = vunpack.c.h.b16 %v39
    %v156 = vunpack.c.l.b16 %v40
    %v157 = vunpack.c.h.b16 %v40
    %v158 = vunpack.c.l.b16 %v41
    %v159 = vunpack.c.h.b16 %v41
    %v160 = vunpack.c.l.b16 %v42
    %v161 = vunpack.c.h.b16 %v42
    %v162 = vunpack.c.l.b16 %v43
    %v163 = vunpack.c.h.b16 %v43
    %v164 = vunpack.c.l.b16 %v44
    %v165 = vunpack.c.h.b16 %v44
    %v166 = vunpack.c.l.b16 %v45
    %v167 = vunpack.c.h.b16 %v45
    %v168 = vunpack.c.l.b16 %v46
    %v169 = vunpack.c.h.b16 %v46
    %v170 = vunpack.c.l.b16 %v47
    %v171 = vunpack.c.h.b16 %v47
    %v172 = vunpack.c.l.b16 %v48
    %v173 = vunpack.c.h.b16 %v48
    %v174 = vunpack.c.l.b16 %v49
    %v175 = vunpack.c.h.b16 %v49
    %v176 = vunpack.c.l.b16 %v50
    %v177 = vunpack.c.h.b16 %v50
    %v178 = vunpack.c.l.b16 %v51
    %v179 = vunpack.c.h.b16 %v51
    %v180 = vunpack.c.l.b16 %v52
    %v181 = vunpack.c.h.b16 %v52
    %v182 = vunpack.c.l.b16 %v53
    %v183 = vunpack.c.h.b16 %v53
    %v184 = vunpack.c.l.b16 %v54
    %v185 = vunpack.c.h.b16 %v54
    %v186 = vunpack.c.l.b16 %v55
    %v187 = vunpack.c.h.b16 %v55
    %v188 = vunpack.c.l.b16 %v56
    %v189 = vunpack.c.h.b16 %v56
    %v190 = vunpack.c.l.b16 %v57
    %v191 = vunpack.c.h.b16 %v57
    %v192 = vunpack.c.l.b16 %v58
    %v193 = vunpack.c.h.b16 %v58
    %v194 = vunpack.c.l.b16 %v59
    %v195 = vunpack.c.h.b16 %v59
    %v196 = vunpack.c.l.b16 %v60
    %v197 = vunpack.c.h.b16 %v60
    %v198 = vunpack.c.l.b16 %v61
    %v199 = vunpack.c.h.b16 %v61
    %v200 = vunpack.c.l.b16 %v62
    %v201 = vunpack.c.h.b16 %v62
    %v202 = vunpack.c.l.b16 %v63
    %v203 = vunpack.c.h.b16 %v63
    %v204 = vpack.c.b16 %v142, %v140
    %v205 = vpack.c.b16 %v143, %v141
    %v206 = vpack.c.b16 %v146, %v144
    %v207 = vpack.c.b16 %v147, %v145
    %v208 = vpack.c.b16 %v150, %v148
    %v209 = vpack.c.b16 %v151, %v149
    %v210 = vpack.c.b16 %v154, %v152
    %v211 = vpack.c.b16 %v155, %v153
    %v212 = vpack.c.b16 %v158, %v156
    %v213 = vpack.c.b16 %v159, %v157
    %v214 = vpack.c.b16 %v162, %v160
    %v215 = vpack.c.b16 %v163, %v161
    %v216 = vpack.c.b16 %v166, %v164
    %v217 = vpack.c.b16 %v167, %v165
    %v218 = vpack.c.b16 %v170, %v168
    %v219 = vpack.c.b16 %v171, %v169
    %v220 = vpack.c.b16 %v174, %v172
    %v221 = vpack.c.b16 %v175, %v173
    %v222 = vpack.c.b16 %v178, %v176
    %v223 = vpack.c.b16 %v179, %v177
    %v224 = vpack.c.b16 %v182, %v180
    %v225 = vpack.c.b16 %v183, %v181
    %v226 = vpack.c.b16 %v186, %v184
    %v227 = vpack.c.b16 %v187, %v185
    %v228 = vpack.c.b16 %v190, %v188
    %v229 = vpack.c.b16 %v191, %v189
    %v230 = vpack.c.b16 %v194, %v192
    %v231 = vpack.c.b16 %v195, %v193
    %v232 = vpack.c.b16 %v198, %v196
    %v233 = vpack.c.b16 %v199, %v197
    %v234 = vpack.c.b16 %v202, %v200
    %v235 = vpack.c.b16 %v203, %v201
    %268 = vmatprep.subr.bf16.mxu0 %v205
    %269 = vmatpush1.bf16.msra.mxu0 %v204
    %270 = vmatprep.subr.bf16.mxu0 %v207
    %271 = vmatpush1.bf16.msra.mxu0 %v206
    %272 = vmatprep.subr.bf16.mxu0 %v209
    %273 = vmatpush1.bf16.msra.mxu0 %v208
    %274 = vmatprep.subr.bf16.mxu0 %v211
    %275 = vmatpush1.bf16.msra.mxu0 %v210
    %276 = vmatprep.subr.bf16.mxu0 %v213
    %277 = vmatpush1.bf16.msra.mxu0 %v212
    %278 = vmatprep.subr.bf16.mxu0 %v215
    %279 = vmatpush1.bf16.msra.mxu0 %v214
    %280 = vmatprep.subr.bf16.mxu0 %v217
    %281 = vmatpush1.bf16.msra.mxu0 %v216
    %282 = vmatprep.subr.bf16.mxu0 %v219
    %283 = vmatpush1.bf16.msra.mxu0 %v218
    %284 = vmatprep.subr.bf16.mxu0 %v221
    %285 = vmatpush1.bf16.msra.mxu0 %v220
    %286 = vmatprep.subr.bf16.mxu0 %v223
    %287 = vmatpush1.bf16.msra.mxu0 %v222
    %288 = vmatprep.subr.bf16.mxu0 %v225
    %289 = vmatpush1.bf16.msra.mxu0 %v224
    %290 = vmatprep.subr.bf16.mxu0 %v227
    %291 = vmatpush1.bf16.msra.mxu0 %v226
    %292 = vmatprep.subr.bf16.mxu0 %v229
    %293 = vmatpush1.bf16.msra.mxu0 %v228
    %294 = vmatprep.subr.bf16.mxu0 %v231
    %295 = vmatpush1.bf16.msra.mxu0 %v230
    %296 = vmatprep.subr.bf16.mxu0 %v233
    %297 = vmatpush1.bf16.msra.mxu0 %v232
    %298 = vmatprep.subr.bf16.mxu0 %v235
    %299 = vmatpush1.bf16.msra.mxu0 %v234
    %300 = vmatprep.mubr.bf16.mxu0 %v101
    %301 = vmatmul.mubr.bf16.gmra.mrb[0].mxu0 %v100
    %v302 = vpop.f32.mrb[0].mxu0
    %v303 = vadd.f32 %v71, %v302
    %v304 = vpop.f32.mrb[0].mxu0
    %v305 = vadd.f32 %v71, %v304
    %v306 = vpop.f32.mrb[0].mxu0
    %v307 = vadd.f32 %v76, %v306
    %v308 = vpop.f32.mrb[0].mxu0
    %v309 = vadd.f32 %v76, %v308
    %310 = vmatprep.mubr.bf16.mxu0 %v103
    %311 = vmatmul.mubr.bf16.gmra.mrb[0].mxu0 %v102
    %v312 = vpop.f32.mrb[0].mxu0
    %v313 = vadd.f32 %v81, %v312
    %v314 = vpop.f32.mrb[0].mxu0
    %v315 = vadd.f32 %v81, %v314
    %v316 = vpop.f32.mrb[0].mxu0
    %v317 = vadd.f32 %v86, %v316
    %v318 = vpop.f32.mrb[0].mxu0
    %v319 = vadd.f32 %v86, %v318
    %320 = vdwg.mxu0
    %v321 = vmax.f32 %v303, 0.0
    %v322 = vmax.f32 %v305, 0.0
    %v323 = vmax.f32 %v307, 0.0
    %v324 = vmax.f32 %v309, 0.0
    %v325 = vmax.f32 %v313, 0.0
    %v326 = vmax.f32 %v315, 0.0
    %v327 = vmax.f32 %v317, 0.0
    %v328 = vmax.f32 %v319, 0.0
    %329 = vst [vmem:[#allocation2] sm:$0x1] %v321
    %v332 = vunpack.c.l.s4 1983009808
    %v333 = vunpack.c.0.s8 %v332
    %v334 = vlaneseq
    %v335 = vshrl.u32 %v334, 7
    %v336 = vsub.s32 %v333, %v335
    %v337 = vrot.slane %v321, %v336
    %v338 = vrot.slane %v337, 7
    %v339 = vrot.slane %v338, 2
    %341 = vst [vmem:[#allocation2 + $0x2] sm:$0x1] %v339
    %v342 = vcombine.high %v337, %v337
    %344 = vst [vmem:[#allocation2 + $0x4] sm:$0x1] %v342
    %v345 = vrot.slane %v342, 7
    %v346 = vrot.slane %v345, 2
    %348 = vst [vmem:[#allocation2 + $0x6] sm:$0x1] %v346
    %v349 = vcombine.high %v321, %v321
    %v351 = vunpack.c.l.s4 1983009808
    %v352 = vunpack.c.0.s8 %v351
    %v353 = vlaneseq
    %v354 = vshrl.u32 %v353, 7
    %v355 = vsub.s32 %v352, %v354
    %v356 = vrot.slane %v349, %v355
    %358 = vst [vmem:[#allocation2 + $0x8] sm:$0x1] %v356
    %v359 = vrot.slane %v356, 7
    %v360 = vrot.slane %v359, 2
    %362 = vst [vmem:[#allocation2 + $0xa] sm:$0x1] %v360
    %v363 = vcombine.high %v356, %v356
    %365 = vst [vmem:[#allocation2 + $0xc] sm:$0x1] %v363
    %v366 = vrot.slane %v363, 7
    %v367 = vrot.slane %v366, 2
    %369 = vst [vmem:[#allocation2 + $0xe] sm:$0x1] %v367
    %370 = vst [vmem:[#allocation2 + $0x10] sm:$0x1] %v323
    %v373 = vunpack.c.l.s4 1983009808
    %v374 = vunpack.c.0.s8 %v373
    %v375 = vlaneseq
    %v376 = vshrl.u32 %v375, 7
    %v377 = vsub.s32 %v374, %v376
    %v378 = vrot.slane %v323, %v377
    %v379 = vrot.slane %v378, 7
    %v380 = vrot.slane %v379, 2
    %382 = vst [vmem:[#allocation2 + $0x12] sm:$0x1] %v380
    %v383 = vcombine.high %v378, %v378
    %385 = vst [vmem:[#allocation2 + $0x14] sm:$0x1] %v383
    %v386 = vrot.slane %v383, 7
    %v387 = vrot.slane %v386, 2
    %389 = vst [vmem:[#allocation2 + $0x16] sm:$0x1] %v387
    %v390 = vcombine.high %v323, %v323
    %v392 = vunpack.c.l.s4 1983009808
    %v393 = vunpack.c.0.s8 %v392
    %v394 = vlaneseq
    %v395 = vshrl.u32 %v394, 7
    %v396 = vsub.s32 %v393, %v395
    %v397 = vrot.slane %v390, %v396
    %399 = vst [vmem:[#allocation2 + $0x18] sm:$0x1] %v397
    %v400 = vrot.slane %v397, 7
    %v401 = vrot.slane %v400, 2
    %403 = vst [vmem:[#allocation2 + $0x1a] sm:$0x1] %v401
    %v404 = vcombine.high %v397, %v397
    %406 = vst [vmem:[#allocation2 + $0x1c] sm:$0x1] %v404
    %v407 = vrot.slane %v404, 7
    %v408 = vrot.slane %v407, 2
    %410 = vst [vmem:[#allocation2 + $0x1e] sm:$0x1] %v408
    %411 = vst [vmem:[#allocation2 + $0x20] sm:$0x1] %v325
    %v414 = vunpack.c.l.s4 1983009808
    %v415 = vunpack.c.0.s8 %v414
    %v416 = vlaneseq
    %v417 = vshrl.u32 %v416, 7
    %v418 = vsub.s32 %v415, %v417
    %v419 = vrot.slane %v325, %v418
    %v420 = vrot.slane %v419, 7
    %v421 = vrot.slane %v420, 2
    %423 = vst [vmem:[#allocation2 + $0x22] sm:$0x1] %v421
    %v424 = vcombine.high %v419, %v419
    %426 = vst [vmem:[#allocation2 + $0x24] sm:$0x1] %v424
    %v427 = vrot.slane %v424, 7
    %v428 = vrot.slane %v427, 2
    %430 = vst [vmem:[#allocation2 + $0x26] sm:$0x1] %v428
    %v431 = vcombine.high %v325, %v325
    %v433 = vunpack.c.l.s4 1983009808
    %v434 = vunpack.c.0.s8 %v433
    %v435 = vlaneseq
    %v436 = vshrl.u32 %v435, 7
    %v437 = vsub.s32 %v434, %v436
    %v438 = vrot.slane %v431, %v437
    %440 = vst [vmem:[#allocation2 + $0x28] sm:$0x1] %v438
    %v441 = vrot.slane %v438, 7
    %v442 = vrot.slane %v441, 2
    %444 = vst [vmem:[#allocation2 + $0x2a] sm:$0x1] %v442
    %v445 = vcombine.high %v438, %v438
    %447 = vst [vmem:[#allocation2 + $0x2c] sm:$0x1] %v445
    %v448 = vrot.slane %v445, 7
    %v449 = vrot.slane %v448, 2
    %451 = vst [vmem:[#allocation2 + $0x2e] sm:$0x1] %v449
    %452 = vst [vmem:[#allocation2 + $0x30] sm:$0x1] %v327
    %v455 = vunpack.c.l.s4 1983009808
    %v456 = vunpack.c.0.s8 %v455
    %v457 = vlaneseq
    %v458 = vshrl.u32 %v457, 7
    %v459 = vsub.s32 %v456, %v458
    %v460 = vrot.slane %v327, %v459
    %v461 = vrot.slane %v460, 7
    %v462 = vrot.slane %v461, 2
    %464 = vst [vmem:[#allocation2 + $0x32] sm:$0x1] %v462
    %v465 = vcombine.high %v460, %v460
    %467 = vst [vmem:[#allocation2 + $0x34] sm:$0x1] %v465
    %v468 = vrot.slane %v465, 7
    %v469 = vrot.slane %v468, 2
    %471 = vst [vmem:[#allocation2 + $0x36] sm:$0x1] %v469
    %v472 = vcombine.high %v327, %v327
    %v474 = vunpack.c.l.s4 1983009808
    %v475 = vunpack.c.0.s8 %v474
    %v476 = vlaneseq
    %v477 = vshrl.u32 %v476, 7
    %v478 = vsub.s32 %v475, %v477
    %v479 = vrot.slane %v472, %v478
    %481 = vst [vmem:[#allocation2 + $0x38] sm:$0x1] %v479
    %v482 = vrot.slane %v479, 7
    %v483 = vrot.slane %v482, 2
    %485 = vst [vmem:[#allocation2 + $0x3a] sm:$0x1] %v483
    %v486 = vcombine.high %v479, %v479
    %488 = vst [vmem:[#allocation2 + $0x3c] sm:$0x1] %v486
    %v489 = vrot.slane %v486, 7
    %v490 = vrot.slane %v489, 2
    %492 = vst [vmem:[#allocation2 + $0x3e] sm:$0x1] %v490
    %493 = vst [vmem:[#allocation2 + $0x1] sm:$0x1] %v322
    %v496 = vunpack.c.l.s4 1983009808
    %v497 = vunpack.c.0.s8 %v496
    %v498 = vlaneseq
    %v499 = vshrl.u32 %v498, 7
    %v500 = vsub.s32 %v497, %v499
    %v501 = vrot.slane %v322, %v500
    %v502 = vrot.slane %v501, 7
    %v503 = vrot.slane %v502, 2
    %505 = vst [vmem:[#allocation2 + $0x3] sm:$0x1] %v503
    %v506 = vcombine.high %v501, %v501
    %508 = vst [vmem:[#allocation2 + $0x5] sm:$0x1] %v506
    %v509 = vrot.slane %v506, 7
    %v510 = vrot.slane %v509, 2
    %512 = vst [vmem:[#allocation2 + $0x7] sm:$0x1] %v510
    %v513 = vcombine.high %v322, %v322
    %v515 = vunpack.c.l.s4 1983009808
    %v516 = vunpack.c.0.s8 %v515
    %v517 = vlaneseq
    %v518 = vshrl.u32 %v517, 7
    %v519 = vsub.s32 %v516, %v518
    %v520 = vrot.slane %v513, %v519
    %522 = vst [vmem:[#allocation2 + $0x9] sm:$0x1] %v520
    %v523 = vrot.slane %v520, 7
    %v524 = vrot.slane %v523, 2
    %526 = vst [vmem:[#allocation2 + $0xb] sm:$0x1] %v524
    %v527 = vcombine.high %v520, %v520
    %529 = vst [vmem:[#allocation2 + $0xd] sm:$0x1] %v527
    %v530 = vrot.slane %v527, 7
    %v531 = vrot.slane %v530, 2
    %533 = vst [vmem:[#allocation2 + $0xf] sm:$0x1] %v531
    %534 = vst [vmem:[#allocation2 + $0x11] sm:$0x1] %v324
    %v537 = vunpack.c.l.s4 1983009808
    %v538 = vunpack.c.0.s8 %v537
    %v539 = vlaneseq
    %v540 = vshrl.u32 %v539, 7
    %v541 = vsub.s32 %v538, %v540
    %v542 = vrot.slane %v324, %v541
    %v543 = vrot.slane %v542, 7
    %v544 = vrot.slane %v543, 2
    %546 = vst [vmem:[#allocation2 + $0x13] sm:$0x1] %v544
    %v547 = vcombine.high %v542, %v542
    %549 = vst [vmem:[#allocation2 + $0x15] sm:$0x1] %v547
    %v550 = vrot.slane %v547, 7
    %v551 = vrot.slane %v550, 2
    %553 = vst [vmem:[#allocation2 + $0x17] sm:$0x1] %v551
    %v554 = vcombine.high %v324, %v324
    %v556 = vunpack.c.l.s4 1983009808
    %v557 = vunpack.c.0.s8 %v556
    %v558 = vlaneseq
    %v559 = vshrl.u32 %v558, 7
    %v560 = vsub.s32 %v557, %v559
    %v561 = vrot.slane %v554, %v560
    %563 = vst [vmem:[#allocation2 + $0x19] sm:$0x1] %v561
    %v564 = vrot.slane %v561, 7
    %v565 = vrot.slane %v564, 2
    %567 = vst [vmem:[#allocation2 + $0x1b] sm:$0x1] %v565
    %v568 = vcombine.high %v561, %v561
    %570 = vst [vmem:[#allocation2 + $0x1d] sm:$0x1] %v568
    %v571 = vrot.slane %v568, 7
    %v572 = vrot.slane %v571, 2
    %574 = vst [vmem:[#allocation2 + $0x1f] sm:$0x1] %v572
    %575 = vst [vmem:[#allocation2 + $0x21] sm:$0x1] %v326
    %v578 = vunpack.c.l.s4 1983009808
    %v579 = vunpack.c.0.s8 %v578
    %v580 = vlaneseq
    %v581 = vshrl.u32 %v580, 7
    %v582 = vsub.s32 %v579, %v581
    %v583 = vrot.slane %v326, %v582
    %v584 = vrot.slane %v583, 7
    %v585 = vrot.slane %v584, 2
    %587 = vst [vmem:[#allocation2 + $0x23] sm:$0x1] %v585
    %v588 = vcombine.high %v583, %v583
    %590 = vst [vmem:[#allocation2 + $0x25] sm:$0x1] %v588
    %v591 = vrot.slane %v588, 7
    %v592 = vrot.slane %v591, 2
    %594 = vst [vmem:[#allocation2 + $0x27] sm:$0x1] %v592
    %v595 = vcombine.high %v326, %v326
    %v597 = vunpack.c.l.s4 1983009808
    %v598 = vunpack.c.0.s8 %v597
    %v599 = vlaneseq
    %v600 = vshrl.u32 %v599, 7
    %v601 = vsub.s32 %v598, %v600
    %v602 = vrot.slane %v595, %v601
    %604 = vst [vmem:[#allocation2 + $0x29] sm:$0x1] %v602
    %v605 = vrot.slane %v602, 7
    %v606 = vrot.slane %v605, 2
    %608 = vst [vmem:[#allocation2 + $0x2b] sm:$0x1] %v606
    %v609 = vcombine.high %v602, %v602
    %611 = vst [vmem:[#allocation2 + $0x2d] sm:$0x1] %v609
    %v612 = vrot.slane %v609, 7
    %v613 = vrot.slane %v612, 2
    %615 = vst [vmem:[#allocation2 + $0x2f] sm:$0x1] %v613
    %616 = vst [vmem:[#allocation2 + $0x31] sm:$0x1] %v328
    %v619 = vunpack.c.l.s4 1983009808
    %v620 = vunpack.c.0.s8 %v619
    %v621 = vlaneseq
    %v622 = vshrl.u32 %v621, 7
    %v623 = vsub.s32 %v620, %v622
    %v624 = vrot.slane %v328, %v623
    %v625 = vrot.slane %v624, 7
    %v626 = vrot.slane %v625, 2
    %628 = vst [vmem:[#allocation2 + $0x33] sm:$0x1] %v626
    %v629 = vcombine.high %v624, %v624
    %631 = vst [vmem:[#allocation2 + $0x35] sm:$0x1] %v629
    %v632 = vrot.slane %v629, 7
    %v633 = vrot.slane %v632, 2
    %635 = vst [vmem:[#allocation2 + $0x37] sm:$0x1] %v633
    %v636 = vcombine.high %v328, %v328
    %v638 = vunpack.c.l.s4 1983009808
    %v639 = vunpack.c.0.s8 %v638
    %v640 = vlaneseq
    %v641 = vshrl.u32 %v640, 7
    %v642 = vsub.s32 %v639, %v641
    %v643 = vrot.slane %v636, %v642
    %645 = vst [vmem:[#allocation2 + $0x39] sm:$0x1] %v643
    %v646 = vrot.slane %v643, 7
    %v647 = vrot.slane %v646, 2
    %649 = vst [vmem:[#allocation2 + $0x3b] sm:$0x1] %v647
    %v650 = vcombine.high %v643, %v643
    %652 = vst [vmem:[#allocation2 + $0x3d] sm:$0x1] %v650
    %v653 = vrot.slane %v650, 7
    %v654 = vrot.slane %v653, 2
    %656 = vst [vmem:[#allocation2 + $0x3f] sm:$0x1] %v654
    %v657 = vld [vmem:[#allocation2] sm:$0xff]
    %v658 = vld [vmem:[#allocation2 + $0x8] sm:$0xff]
    %v659 = vld [vmem:[#allocation2 + $0x10] sm:$0xff]
    %v660 = vld [vmem:[#allocation2 + $0x18] sm:$0xff]
    %v661 = vld [vmem:[#allocation2 + $0x20] sm:$0xff]
    %v662 = vld [vmem:[#allocation2 + $0x28] sm:$0xff]
    %v663 = vld [vmem:[#allocation2 + $0x30] sm:$0xff]
    %v664 = vld [vmem:[#allocation2 + $0x38] sm:$0xff]
    %v673 = vcombine.high %v657, %v657
    %v675 = vunpack.c.l.s4 1983009808
    %v676 = vunpack.c.0.s8 %v675
    %v677 = vlaneseq
    %v678 = vshrl.u32 %v677, 7
    %v679 = vsub.s32 %v676, %v678
    %v680 = vrot.slane %v657, %v679
    %v682 = vunpack.c.l.s4 1983009808
    %v683 = vunpack.c.0.s8 %v682
    %v684 = vlaneseq
    %v685 = vshrl.u32 %v684, 7
    %v686 = vsub.s32 %v683, %v685
    %v687 = vrot.slane %v673, %v686
    %v688 = vcombine.high %v680, %v680
    %v689 = vcombine.high %v687, %v687
    %v690 = vcombine.high %v658, %v658
    %v692 = vunpack.c.l.s4 1983009808
    %v693 = vunpack.c.0.s8 %v692
    %v694 = vlaneseq
    %v695 = vshrl.u32 %v694, 7
    %v696 = vsub.s32 %v693, %v695
    %v697 = vrot.slane %v658, %v696
    %v699 = vunpack.c.l.s4 1983009808
    %v700 = vunpack.c.0.s8 %v699
    %v701 = vlaneseq
    %v702 = vshrl.u32 %v701, 7
    %v703 = vsub.s32 %v700, %v702
    %v704 = vrot.slane %v690, %v703
    %v705 = vcombine.high %v697, %v697
    %v706 = vcombine.high %v704, %v704
    %v707 = vcombine.high %v659, %v659
    %v709 = vunpack.c.l.s4 1983009808
    %v710 = vunpack.c.0.s8 %v709
    %v711 = vlaneseq
    %v712 = vshrl.u32 %v711, 7
    %v713 = vsub.s32 %v710, %v712
    %v714 = vrot.slane %v659, %v713
    %v716 = vunpack.c.l.s4 1983009808
    %v717 = vunpack.c.0.s8 %v716
    %v718 = vlaneseq
    %v719 = vshrl.u32 %v718, 7
    %v720 = vsub.s32 %v717, %v719
    %v721 = vrot.slane %v707, %v720
    %v722 = vcombine.high %v714, %v714
    %v723 = vcombine.high %v721, %v721
    %v724 = vcombine.high %v660, %v660
    %v726 = vunpack.c.l.s4 1983009808
    %v727 = vunpack.c.0.s8 %v726
    %v728 = vlaneseq
    %v729 = vshrl.u32 %v728, 7
    %v730 = vsub.s32 %v727, %v729
    %v731 = vrot.slane %v660, %v730
    %v733 = vunpack.c.l.s4 1983009808
    %v734 = vunpack.c.0.s8 %v733
    %v735 = vlaneseq
    %v736 = vshrl.u32 %v735, 7
    %v737 = vsub.s32 %v734, %v736
    %v738 = vrot.slane %v724, %v737
    %v739 = vcombine.high %v731, %v731
    %v740 = vcombine.high %v738, %v738
    %v741 = vcombine.high %v661, %v661
    %v743 = vunpack.c.l.s4 1983009808
    %v744 = vunpack.c.0.s8 %v743
    %v745 = vlaneseq
    %v746 = vshrl.u32 %v745, 7
    %v747 = vsub.s32 %v744, %v746
    %v748 = vrot.slane %v661, %v747
    %v750 = vunpack.c.l.s4 1983009808
    %v751 = vunpack.c.0.s8 %v750
    %v752 = vlaneseq
    %v753 = vshrl.u32 %v752, 7
    %v754 = vsub.s32 %v751, %v753
    %v755 = vrot.slane %v741, %v754
    %v756 = vcombine.high %v748, %v748
    %v757 = vcombine.high %v755, %v755
    %v758 = vcombine.high %v662, %v662
    %v760 = vunpack.c.l.s4 1983009808
    %v761 = vunpack.c.0.s8 %v760
    %v762 = vlaneseq
    %v763 = vshrl.u32 %v762, 7
    %v764 = vsub.s32 %v761, %v763
    %v765 = vrot.slane %v662, %v764
    %v767 = vunpack.c.l.s4 1983009808
    %v768 = vunpack.c.0.s8 %v767
    %v769 = vlaneseq
    %v770 = vshrl.u32 %v769, 7
    %v771 = vsub.s32 %v768, %v770
    %v772 = vrot.slane %v758, %v771
    %v773 = vcombine.high %v765, %v765
    %v774 = vcombine.high %v772, %v772
    %v775 = vcombine.high %v663, %v663
    %v777 = vunpack.c.l.s4 1983009808
    %v778 = vunpack.c.0.s8 %v777
    %v779 = vlaneseq
    %v780 = vshrl.u32 %v779, 7
    %v781 = vsub.s32 %v778, %v780
    %v782 = vrot.slane %v663, %v781
    %v784 = vunpack.c.l.s4 1983009808
    %v785 = vunpack.c.0.s8 %v784
    %v786 = vlaneseq
    %v787 = vshrl.u32 %v786, 7
    %v788 = vsub.s32 %v785, %v787
    %v789 = vrot.slane %v775, %v788
    %v790 = vcombine.high %v782, %v782
    %v791 = vcombine.high %v789, %v789
    %v792 = vcombine.high %v664, %v664
    %v794 = vunpack.c.l.s4 1983009808
    %v795 = vunpack.c.0.s8 %v794
    %v796 = vlaneseq
    %v797 = vshrl.u32 %v796, 7
    %v798 = vsub.s32 %v795, %v797
    %v799 = vrot.slane %v664, %v798
    %v801 = vunpack.c.l.s4 1983009808
    %v802 = vunpack.c.0.s8 %v801
    %v803 = vlaneseq
    %v804 = vshrl.u32 %v803, 7
    %v805 = vsub.s32 %v802, %v804
    %v806 = vrot.slane %v792, %v805
    %v807 = vcombine.high %v799, %v799
    %v808 = vcombine.high %v806, %v806
    %v841 = vpack.c.bf16 %v680, %v680
    %v842 = vpack.c.bf16 %v688, %v688
    %v843 = vpack.c.bf16 %v687, %v687
    %v844 = vpack.c.bf16 %v689, %v689
    %v845 = vpack.c.bf16 %v697, %v697
    %v846 = vpack.c.bf16 %v705, %v705
    %v847 = vpack.c.bf16 %v704, %v704
    %v848 = vpack.c.bf16 %v706, %v706
    %v849 = vpack.c.bf16 %v714, %v714
    %v850 = vpack.c.bf16 %v722, %v722
    %v851 = vpack.c.bf16 %v721, %v721
    %v852 = vpack.c.bf16 %v723, %v723
    %v853 = vpack.c.bf16 %v731, %v731
    %v854 = vpack.c.bf16 %v739, %v739
    %v855 = vpack.c.bf16 %v738, %v738
    %v856 = vpack.c.bf16 %v740, %v740
    %v857 = vpack.c.bf16 %v748, %v748
    %v858 = vpack.c.bf16 %v756, %v756
    %v859 = vpack.c.bf16 %v755, %v755
    %v860 = vpack.c.bf16 %v757, %v757
    %v861 = vpack.c.bf16 %v765, %v765
    %v862 = vpack.c.bf16 %v773, %v773
    %v863 = vpack.c.bf16 %v772, %v772
    %v864 = vpack.c.bf16 %v774, %v774
    %v865 = vpack.c.bf16 %v782, %v782
    %v866 = vpack.c.bf16 %v790, %v790
    %v867 = vpack.c.bf16 %v789, %v789
    %v868 = vpack.c.bf16 %v791, %v791
    %v869 = vpack.c.bf16 %v799, %v799
    %v870 = vpack.c.bf16 %v807, %v807
    %v871 = vpack.c.bf16 %v806, %v806
    %v872 = vpack.c.bf16 %v808, %v808
    %v873 = vld [vmem:[%s3] sm:$0xff]
    %v874 = vld [vmem:[%s3 + $0x8] sm:$0xff]
    %v875 = vld [vmem:[%s3 + $0x10] sm:$0xff]
    %v876 = vld [vmem:[%s3 + $0x18] sm:$0xff]
    %v877 = vld [vmem:[%s3 + $0x20] sm:$0xff]
    %v878 = vld [vmem:[%s3 + $0x28] sm:$0xff]
    %v879 = vld [vmem:[%s3 + $0x30] sm:$0xff]
    %v880 = vld [vmem:[%s3 + $0x38] sm:$0xff]
    %v881 = vld [vmem:[%s3 + $0x40] sm:$0xff]
    %v882 = vld [vmem:[%s3 + $0x48] sm:$0xff]
    %v883 = vld [vmem:[%s3 + $0x50] sm:$0xff]
    %v884 = vld [vmem:[%s3 + $0x58] sm:$0xff]
    %v885 = vld [vmem:[%s3 + $0x60] sm:$0xff]
    %v886 = vld [vmem:[%s3 + $0x68] sm:$0xff]
    %v887 = vld [vmem:[%s3 + $0x70] sm:$0xff]
    %v888 = vld [vmem:[%s3 + $0x78] sm:$0xff]
    %v889 = vld [vmem:[%s3 + $0x80] sm:$0xff]
    %v890 = vld [vmem:[%s3 + $0x88] sm:$0xff]
    %v891 = vld [vmem:[%s3 + $0x90] sm:$0xff]
    %v892 = vld [vmem:[%s3 + $0x98] sm:$0xff]
    %v893 = vld [vmem:[%s3 + $0xa0] sm:$0xff]
    %v894 = vld [vmem:[%s3 + $0xa8] sm:$0xff]
    %v895 = vld [vmem:[%s3 + $0xb0] sm:$0xff]
    %v896 = vld [vmem:[%s3 + $0xb8] sm:$0xff]
    %v897 = vld [vmem:[%s3 + $0xc0] sm:$0xff]
    %v898 = vld [vmem:[%s3 + $0xc8] sm:$0xff]
    %v899 = vld [vmem:[%s3 + $0xd0] sm:$0xff]
    %v900 = vld [vmem:[%s3 + $0xd8] sm:$0xff]
    %v901 = vld [vmem:[%s3 + $0xe0] sm:$0xff]
    %v902 = vld [vmem:[%s3 + $0xe8] sm:$0xff]
    %v903 = vld [vmem:[%s3 + $0xf0] sm:$0xff]
    %v904 = vld [vmem:[%s3 + $0xf8] sm:$0xff]
    %v905 = vld [vmem:[%s3 + $0x100] sm:$0xff]
    %v906 = vld [vmem:[%s3 + $0x108] sm:$0xff]
    %v907 = vld [vmem:[%s3 + $0x110] sm:$0xff]
    %v908 = vld [vmem:[%s3 + $0x118] sm:$0xff]
    %v909 = vld [vmem:[%s3 + $0x120] sm:$0xff]
    %v910 = vld [vmem:[%s3 + $0x128] sm:$0xff]
    %v911 = vld [vmem:[%s3 + $0x130] sm:$0xff]
    %v912 = vld [vmem:[%s3 + $0x138] sm:$0xff]
    %v913 = vld [vmem:[%s3 + $0x140] sm:$0xff]
    %v914 = vld [vmem:[%s3 + $0x148] sm:$0xff]
    %v915 = vld [vmem:[%s3 + $0x150] sm:$0xff]
    %v916 = vld [vmem:[%s3 + $0x158] sm:$0xff]
    %v917 = vld [vmem:[%s3 + $0x160] sm:$0xff]
    %v918 = vld [vmem:[%s3 + $0x168] sm:$0xff]
    %v919 = vld [vmem:[%s3 + $0x170] sm:$0xff]
    %v920 = vld [vmem:[%s3 + $0x178] sm:$0xff]
    %v921 = vld [vmem:[%s3 + $0x180] sm:$0xff]
    %v922 = vld [vmem:[%s3 + $0x188] sm:$0xff]
    %v923 = vld [vmem:[%s3 + $0x190] sm:$0xff]
    %v924 = vld [vmem:[%s3 + $0x198] sm:$0xff]
    %v925 = vld [vmem:[%s3 + $0x1a0] sm:$0xff]
    %v926 = vld [vmem:[%s3 + $0x1a8] sm:$0xff]
    %v927 = vld [vmem:[%s3 + $0x1b0] sm:$0xff]
    %v928 = vld [vmem:[%s3 + $0x1b8] sm:$0xff]
    %v929 = vld [vmem:[%s3 + $0x1c0] sm:$0xff]
    %v930 = vld [vmem:[%s3 + $0x1c8] sm:$0xff]
    %v931 = vld [vmem:[%s3 + $0x1d0] sm:$0xff]
    %v932 = vld [vmem:[%s3 + $0x1d8] sm:$0xff]
    %v933 = vld [vmem:[%s3 + $0x1e0] sm:$0xff]
    %v934 = vld [vmem:[%s3 + $0x1e8] sm:$0xff]
    %v935 = vld [vmem:[%s3 + $0x1f0] sm:$0xff]
    %v936 = vld [vmem:[%s3 + $0x1f8] sm:$0xff]
    %v937 = vld [vmem:[%s3 + $0x200] sm:$0xff]
    %v938 = vld [vmem:[%s3 + $0x208] sm:$0xff]
    %v939 = vld [vmem:[%s3 + $0x210] sm:$0xff]
    %v940 = vld [vmem:[%s3 + $0x218] sm:$0xff]
    %v941 = vld [vmem:[%s3 + $0x220] sm:$0xff]
    %v942 = vld [vmem:[%s3 + $0x228] sm:$0xff]
    %v943 = vld [vmem:[%s3 + $0x230] sm:$0xff]
    %v944 = vld [vmem:[%s3 + $0x238] sm:$0xff]
    %v945 = vld [vmem:[%s3 + $0x240] sm:$0xff]
    %v946 = vld [vmem:[%s3 + $0x248] sm:$0xff]
    %v947 = vld [vmem:[%s3 + $0x250] sm:$0xff]
    %v948 = vld [vmem:[%s3 + $0x258] sm:$0xff]
    %v949 = vld [vmem:[%s3 + $0x260] sm:$0xff]
    %v950 = vld [vmem:[%s3 + $0x268] sm:$0xff]
    %v951 = vld [vmem:[%s3 + $0x270] sm:$0xff]
    %v952 = vld [vmem:[%s3 + $0x278] sm:$0xff]
    %v953 = vld [vmem:[%s3 + $0x280] sm:$0xff]
    %v954 = vld [vmem:[%s3 + $0x288] sm:$0xff]
    %v955 = vld [vmem:[%s3 + $0x290] sm:$0xff]
    %v956 = vld [vmem:[%s3 + $0x298] sm:$0xff]
    %v957 = vld [vmem:[%s3 + $0x2a0] sm:$0xff]
    %v958 = vld [vmem:[%s3 + $0x2a8] sm:$0xff]
    %v959 = vld [vmem:[%s3 + $0x2b0] sm:$0xff]
    %v960 = vld [vmem:[%s3 + $0x2b8] sm:$0xff]
    %v961 = vld [vmem:[%s3 + $0x2c0] sm:$0xff]
    %v962 = vld [vmem:[%s3 + $0x2c8] sm:$0xff]
    %v963 = vld [vmem:[%s3 + $0x2d0] sm:$0xff]
    %v964 = vld [vmem:[%s3 + $0x2d8] sm:$0xff]
    %v965 = vld [vmem:[%s3 + $0x2e0] sm:$0xff]
    %v966 = vld [vmem:[%s3 + $0x2e8] sm:$0xff]
    %v967 = vld [vmem:[%s3 + $0x2f0] sm:$0xff]
    %v968 = vld [vmem:[%s3 + $0x2f8] sm:$0xff]
    %v969 = vld [vmem:[%s3 + $0x300] sm:$0xff]
    %v970 = vld [vmem:[%s3 + $0x308] sm:$0xff]
    %v971 = vld [vmem:[%s3 + $0x310] sm:$0xff]
    %v972 = vld [vmem:[%s3 + $0x318] sm:$0xff]
    %v973 = vld [vmem:[%s3 + $0x320] sm:$0xff]
    %v974 = vld [vmem:[%s3 + $0x328] sm:$0xff]
    %v975 = vld [vmem:[%s3 + $0x330] sm:$0xff]
    %v976 = vld [vmem:[%s3 + $0x338] sm:$0xff]
    %v977 = vld [vmem:[%s3 + $0x340] sm:$0xff]
    %v978 = vld [vmem:[%s3 + $0x348] sm:$0xff]
    %v979 = vld [vmem:[%s3 + $0x350] sm:$0xff]
    %v980 = vld [vmem:[%s3 + $0x358] sm:$0xff]
    %v981 = vld [vmem:[%s3 + $0x360] sm:$0xff]
    %v982 = vld [vmem:[%s3 + $0x368] sm:$0xff]
    %v983 = vld [vmem:[%s3 + $0x370] sm:$0xff]
    %v984 = vld [vmem:[%s3 + $0x378] sm:$0xff]
    %v985 = vld [vmem:[%s3 + $0x380] sm:$0xff]
    %v986 = vld [vmem:[%s3 + $0x388] sm:$0xff]
    %v987 = vld [vmem:[%s3 + $0x390] sm:$0xff]
    %v988 = vld [vmem:[%s3 + $0x398] sm:$0xff]
    %v989 = vld [vmem:[%s3 + $0x3a0] sm:$0xff]
    %v990 = vld [vmem:[%s3 + $0x3a8] sm:$0xff]
    %v991 = vld [vmem:[%s3 + $0x3b0] sm:$0xff]
    %v992 = vld [vmem:[%s3 + $0x3b8] sm:$0xff]
    %v993 = vld [vmem:[%s3 + $0x3c0] sm:$0xff]
    %v994 = vld [vmem:[%s3 + $0x3c8] sm:$0xff]
    %v995 = vld [vmem:[%s3 + $0x3d0] sm:$0xff]
    %v996 = vld [vmem:[%s3 + $0x3d8] sm:$0xff]
    %v997 = vld [vmem:[%s3 + $0x3e0] sm:$0xff]
    %v998 = vld [vmem:[%s3 + $0x3e8] sm:$0xff]
    %v999 = vld [vmem:[%s3 + $0x3f0] sm:$0xff]
    %v1000 = vld [vmem:[%s3 + $0x3f8] sm:$0xff]
    %v1001 = vld [vmem:[%s3 + $0x400] sm:$0xff]
    %v1002 = vld [vmem:[%s3 + $0x408] sm:$0xff]
    %v1003 = vld [vmem:[%s3 + $0x410] sm:$0xff]
    %v1004 = vld [vmem:[%s3 + $0x418] sm:$0xff]
    %v1005 = vld [vmem:[%s3 + $0x420] sm:$0xff]
    %v1006 = vld [vmem:[%s3 + $0x428] sm:$0xff]
    %v1007 = vld [vmem:[%s3 + $0x430] sm:$0xff]
    %v1008 = vld [vmem:[%s3 + $0x438] sm:$0xff]
    %v1009 = vld [vmem:[%s3 + $0x440] sm:$0xff]
    %v1010 = vld [vmem:[%s3 + $0x448] sm:$0xff]
    %v1011 = vld [vmem:[%s3 + $0x450] sm:$0xff]
    %v1012 = vld [vmem:[%s3 + $0x458] sm:$0xff]
    %v1013 = vld [vmem:[%s3 + $0x460] sm:$0xff]
    %v1014 = vld [vmem:[%s3 + $0x468] sm:$0xff]
    %v1015 = vld [vmem:[%s3 + $0x470] sm:$0xff]
    %v1016 = vld [vmem:[%s3 + $0x478] sm:$0xff]
    %v1017 = vld [vmem:[%s3 + $0x480] sm:$0xff]
    %v1018 = vld [vmem:[%s3 + $0x488] sm:$0xff]
    %v1019 = vld [vmem:[%s3 + $0x490] sm:$0xff]
    %v1020 = vld [vmem:[%s3 + $0x498] sm:$0xff]
    %v1021 = vld [vmem:[%s3 + $0x4a0] sm:$0xff]
    %v1022 = vld [vmem:[%s3 + $0x4a8] sm:$0xff]
    %v1023 = vld [vmem:[%s3 + $0x4b0] sm:$0xff]
    %v1024 = vld [vmem:[%s3 + $0x4b8] sm:$0xff]
    %v1025 = vld [vmem:[%s3 + $0x4c0] sm:$0xff]
    %v1026 = vld [vmem:[%s3 + $0x4c8] sm:$0xff]
    %v1027 = vld [vmem:[%s3 + $0x4d0] sm:$0xff]
    %v1028 = vld [vmem:[%s3 + $0x4d8] sm:$0xff]
    %v1029 = vld [vmem:[%s3 + $0x4e0] sm:$0xff]
    %v1030 = vld [vmem:[%s3 + $0x4e8] sm:$0xff]
    %v1031 = vld [vmem:[%s3 + $0x4f0] sm:$0xff]
    %v1032 = vld [vmem:[%s3 + $0x4f8] sm:$0xff]
    %v1033 = vld [vmem:[%s3 + $0x500] sm:$0xff]
    %v1034 = vld [vmem:[%s3 + $0x508] sm:$0xff]
    %v1035 = vld [vmem:[%s3 + $0x510] sm:$0xff]
    %v1036 = vld [vmem:[%s3 + $0x518] sm:$0xff]
    %v1037 = vld [vmem:[%s3 + $0x520] sm:$0xff]
    %v1038 = vld [vmem:[%s3 + $0x528] sm:$0xff]
    %v1039 = vld [vmem:[%s3 + $0x530] sm:$0xff]
    %v1040 = vld [vmem:[%s3 + $0x538] sm:$0xff]
    %v1041 = vld [vmem:[%s3 + $0x540] sm:$0xff]
    %v1042 = vld [vmem:[%s3 + $0x548] sm:$0xff]
    %v1043 = vld [vmem:[%s3 + $0x550] sm:$0xff]
    %v1044 = vld [vmem:[%s3 + $0x558] sm:$0xff]
    %v1045 = vld [vmem:[%s3 + $0x560] sm:$0xff]
    %v1046 = vld [vmem:[%s3 + $0x568] sm:$0xff]
    %v1047 = vld [vmem:[%s3 + $0x570] sm:$0xff]
    %v1048 = vld [vmem:[%s3 + $0x578] sm:$0xff]
    %v1049 = vld [vmem:[%s3 + $0x580] sm:$0xff]
    %v1050 = vld [vmem:[%s3 + $0x588] sm:$0xff]
    %v1051 = vld [vmem:[%s3 + $0x590] sm:$0xff]
    %v1052 = vld [vmem:[%s3 + $0x598] sm:$0xff]
    %v1053 = vld [vmem:[%s3 + $0x5a0] sm:$0xff]
    %v1054 = vld [vmem:[%s3 + $0x5a8] sm:$0xff]
    %v1055 = vld [vmem:[%s3 + $0x5b0] sm:$0xff]
    %v1056 = vld [vmem:[%s3 + $0x5b8] sm:$0xff]
    %v1057 = vld [vmem:[%s3 + $0x5c0] sm:$0xff]
    %v1058 = vld [vmem:[%s3 + $0x5c8] sm:$0xff]
    %v1059 = vld [vmem:[%s3 + $0x5d0] sm:$0xff]
    %v1060 = vld [vmem:[%s3 + $0x5d8] sm:$0xff]
    %v1061 = vld [vmem:[%s3 + $0x5e0] sm:$0xff]
    %v1062 = vld [vmem:[%s3 + $0x5e8] sm:$0xff]
    %v1063 = vld [vmem:[%s3 + $0x5f0] sm:$0xff]
    %v1064 = vld [vmem:[%s3 + $0x5f8] sm:$0xff]
    %v1065 = vld [vmem:[%s3 + $0x600] sm:$0xff]
    %v1066 = vld [vmem:[%s3 + $0x608] sm:$0xff]
    %v1067 = vld [vmem:[%s3 + $0x610] sm:$0xff]
    %v1068 = vld [vmem:[%s3 + $0x618] sm:$0xff]
    %v1069 = vld [vmem:[%s3 + $0x620] sm:$0xff]
    %v1070 = vld [vmem:[%s3 + $0x628] sm:$0xff]
    %v1071 = vld [vmem:[%s3 + $0x630] sm:$0xff]
    %v1072 = vld [vmem:[%s3 + $0x638] sm:$0xff]
    %v1073 = vld [vmem:[%s3 + $0x640] sm:$0xff]
    %v1074 = vld [vmem:[%s3 + $0x648] sm:$0xff]
    %v1075 = vld [vmem:[%s3 + $0x650] sm:$0xff]
    %v1076 = vld [vmem:[%s3 + $0x658] sm:$0xff]
    %v1077 = vld [vmem:[%s3 + $0x660] sm:$0xff]
    %v1078 = vld [vmem:[%s3 + $0x668] sm:$0xff]
    %v1079 = vld [vmem:[%s3 + $0x670] sm:$0xff]
    %v1080 = vld [vmem:[%s3 + $0x678] sm:$0xff]
    %v1081 = vld [vmem:[%s3 + $0x680] sm:$0xff]
    %v1082 = vld [vmem:[%s3 + $0x688] sm:$0xff]
    %v1083 = vld [vmem:[%s3 + $0x690] sm:$0xff]
    %v1084 = vld [vmem:[%s3 + $0x698] sm:$0xff]
    %v1085 = vld [vmem:[%s3 + $0x6a0] sm:$0xff]
    %v1086 = vld [vmem:[%s3 + $0x6a8] sm:$0xff]
    %v1087 = vld [vmem:[%s3 + $0x6b0] sm:$0xff]
    %v1088 = vld [vmem:[%s3 + $0x6b8] sm:$0xff]
    %v1089 = vld [vmem:[%s3 + $0x6c0] sm:$0xff]
    %v1090 = vld [vmem:[%s3 + $0x6c8] sm:$0xff]
    %v1091 = vld [vmem:[%s3 + $0x6d0] sm:$0xff]
    %v1092 = vld [vmem:[%s3 + $0x6d8] sm:$0xff]
    %v1093 = vld [vmem:[%s3 + $0x6e0] sm:$0xff]
    %v1094 = vld [vmem:[%s3 + $0x6e8] sm:$0xff]
    %v1095 = vld [vmem:[%s3 + $0x6f0] sm:$0xff]
    %v1096 = vld [vmem:[%s3 + $0x6f8] sm:$0xff]
    %v1097 = vld [vmem:[%s3 + $0x700] sm:$0xff]
    %v1098 = vld [vmem:[%s3 + $0x708] sm:$0xff]
    %v1099 = vld [vmem:[%s3 + $0x710] sm:$0xff]
    %v1100 = vld [vmem:[%s3 + $0x718] sm:$0xff]
    %v1101 = vld [vmem:[%s3 + $0x720] sm:$0xff]
    %v1102 = vld [vmem:[%s3 + $0x728] sm:$0xff]
    %v1103 = vld [vmem:[%s3 + $0x730] sm:$0xff]
    %v1104 = vld [vmem:[%s3 + $0x738] sm:$0xff]
    %v1105 = vld [vmem:[%s3 + $0x740] sm:$0xff]
    %v1106 = vld [vmem:[%s3 + $0x748] sm:$0xff]
    %v1107 = vld [vmem:[%s3 + $0x750] sm:$0xff]
    %v1108 = vld [vmem:[%s3 + $0x758] sm:$0xff]
    %v1109 = vld [vmem:[%s3 + $0x760] sm:$0xff]
    %v1110 = vld [vmem:[%s3 + $0x768] sm:$0xff]
    %v1111 = vld [vmem:[%s3 + $0x770] sm:$0xff]
    %v1112 = vld [vmem:[%s3 + $0x778] sm:$0xff]
    %v1113 = vld [vmem:[%s3 + $0x780] sm:$0xff]
    %v1114 = vld [vmem:[%s3 + $0x788] sm:$0xff]
    %v1115 = vld [vmem:[%s3 + $0x790] sm:$0xff]
    %v1116 = vld [vmem:[%s3 + $0x798] sm:$0xff]
    %v1117 = vld [vmem:[%s3 + $0x7a0] sm:$0xff]
    %v1118 = vld [vmem:[%s3 + $0x7a8] sm:$0xff]
    %v1119 = vld [vmem:[%s3 + $0x7b0] sm:$0xff]
    %v1120 = vld [vmem:[%s3 + $0x7b8] sm:$0xff]
    %v1121 = vld [vmem:[%s3 + $0x7c0] sm:$0xff]
    %v1122 = vld [vmem:[%s3 + $0x7c8] sm:$0xff]
    %v1123 = vld [vmem:[%s3 + $0x7d0] sm:$0xff]
    %v1124 = vld [vmem:[%s3 + $0x7d8] sm:$0xff]
    %v1125 = vld [vmem:[%s3 + $0x7e0] sm:$0xff]
    %v1126 = vld [vmem:[%s3 + $0x7e8] sm:$0xff]
    %v1127 = vld [vmem:[%s3 + $0x7f0] sm:$0xff]
    %v1128 = vld [vmem:[%s3 + $0x7f8] sm:$0xff]
    %v1129 = vld [vmem:[%s3 + $0x800] sm:$0xff]
    %v1130 = vld [vmem:[%s3 + $0x808] sm:$0xff]
    %v1131 = vld [vmem:[%s3 + $0x810] sm:$0xff]
    %v1132 = vld [vmem:[%s3 + $0x818] sm:$0xff]
    %v1133 = vld [vmem:[%s3 + $0x820] sm:$0xff]
    %v1134 = vld [vmem:[%s3 + $0x828] sm:$0xff]
    %v1135 = vld [vmem:[%s3 + $0x830] sm:$0xff]
    %v1136 = vld [vmem:[%s3 + $0x838] sm:$0xff]
    %v1137 = vld [vmem:[%s3 + $0x840] sm:$0xff]
    %v1138 = vld [vmem:[%s3 + $0x848] sm:$0xff]
    %v1139 = vld [vmem:[%s3 + $0x850] sm:$0xff]
    %v1140 = vld [vmem:[%s3 + $0x858] sm:$0xff]
    %v1141 = vld [vmem:[%s3 + $0x860] sm:$0xff]
    %v1142 = vld [vmem:[%s3 + $0x868] sm:$0xff]
    %v1143 = vld [vmem:[%s3 + $0x870] sm:$0xff]
    %v1144 = vld [vmem:[%s3 + $0x878] sm:$0xff]
    %v1145 = vld [vmem:[%s3 + $0x880] sm:$0xff]
    %v1146 = vld [vmem:[%s3 + $0x888] sm:$0xff]
    %v1147 = vld [vmem:[%s3 + $0x890] sm:$0xff]
    %v1148 = vld [vmem:[%s3 + $0x898] sm:$0xff]
    %v1149 = vld [vmem:[%s3 + $0x8a0] sm:$0xff]
    %v1150 = vld [vmem:[%s3 + $0x8a8] sm:$0xff]
    %v1151 = vld [vmem:[%s3 + $0x8b0] sm:$0xff]
    %v1152 = vld [vmem:[%s3 + $0x8b8] sm:$0xff]
    %v1153 = vld [vmem:[%s3 + $0x8c0] sm:$0xff]
    %v1154 = vld [vmem:[%s3 + $0x8c8] sm:$0xff]
    %v1155 = vld [vmem:[%s3 + $0x8d0] sm:$0xff]
    %v1156 = vld [vmem:[%s3 + $0x8d8] sm:$0xff]
    %v1157 = vld [vmem:[%s3 + $0x8e0] sm:$0xff]
    %v1158 = vld [vmem:[%s3 + $0x8e8] sm:$0xff]
    %v1159 = vld [vmem:[%s3 + $0x8f0] sm:$0xff]
    %v1160 = vld [vmem:[%s3 + $0x8f8] sm:$0xff]
    %v1161 = vld [vmem:[%s3 + $0x900] sm:$0xff]
    %v1162 = vld [vmem:[%s3 + $0x908] sm:$0xff]
    %v1163 = vld [vmem:[%s3 + $0x910] sm:$0xff]
    %v1164 = vld [vmem:[%s3 + $0x918] sm:$0xff]
    %v1165 = vld [vmem:[%s3 + $0x920] sm:$0xff]
    %v1166 = vld [vmem:[%s3 + $0x928] sm:$0xff]
    %v1167 = vld [vmem:[%s3 + $0x930] sm:$0xff]
    %v1168 = vld [vmem:[%s3 + $0x938] sm:$0xff]
    %v1169 = vld [vmem:[%s3 + $0x940] sm:$0xff]
    %v1170 = vld [vmem:[%s3 + $0x948] sm:$0xff]
    %v1171 = vld [vmem:[%s3 + $0x950] sm:$0xff]
    %v1172 = vld [vmem:[%s3 + $0x958] sm:$0xff]
    %v1173 = vld [vmem:[%s3 + $0x960] sm:$0xff]
    %v1174 = vld [vmem:[%s3 + $0x968] sm:$0xff]
    %v1175 = vld [vmem:[%s3 + $0x970] sm:$0xff]
    %v1176 = vld [vmem:[%s3 + $0x978] sm:$0xff]
    %v1177 = vld [vmem:[%s3 + $0x980] sm:$0xff]
    %v1178 = vld [vmem:[%s3 + $0x988] sm:$0xff]
    %v1179 = vld [vmem:[%s3 + $0x990] sm:$0xff]
    %v1180 = vld [vmem:[%s3 + $0x998] sm:$0xff]
    %v1181 = vld [vmem:[%s3 + $0x9a0] sm:$0xff]
    %v1182 = vld [vmem:[%s3 + $0x9a8] sm:$0xff]
    %v1183 = vld [vmem:[%s3 + $0x9b0] sm:$0xff]
    %v1184 = vld [vmem:[%s3 + $0x9b8] sm:$0xff]
    %v1185 = vld [vmem:[%s3 + $0x9c0] sm:$0xff]
    %v1186 = vld [vmem:[%s3 + $0x9c8] sm:$0xff]
    %v1187 = vld [vmem:[%s3 + $0x9d0] sm:$0xff]
    %v1188 = vld [vmem:[%s3 + $0x9d8] sm:$0xff]
    %v1189 = vld [vmem:[%s3 + $0x9e0] sm:$0xff]
    %v1190 = vld [vmem:[%s3 + $0x9e8] sm:$0xff]
    %v1191 = vld [vmem:[%s3 + $0x9f0] sm:$0xff]
    %v1192 = vld [vmem:[%s3 + $0x9f8] sm:$0xff]
    %v1193 = vld [vmem:[%s3 + $0xa00] sm:$0xff]
    %v1194 = vld [vmem:[%s3 + $0xa08] sm:$0xff]
    %v1195 = vld [vmem:[%s3 + $0xa10] sm:$0xff]
    %v1196 = vld [vmem:[%s3 + $0xa18] sm:$0xff]
    %v1197 = vld [vmem:[%s3 + $0xa20] sm:$0xff]
    %v1198 = vld [vmem:[%s3 + $0xa28] sm:$0xff]
    %v1199 = vld [vmem:[%s3 + $0xa30] sm:$0xff]
    %v1200 = vld [vmem:[%s3 + $0xa38] sm:$0xff]
    %v1201 = vld [vmem:[%s3 + $0xa40] sm:$0xff]
    %v1202 = vld [vmem:[%s3 + $0xa48] sm:$0xff]
    %v1203 = vld [vmem:[%s3 + $0xa50] sm:$0xff]
    %v1204 = vld [vmem:[%s3 + $0xa58] sm:$0xff]
    %v1205 = vld [vmem:[%s3 + $0xa60] sm:$0xff]
    %v1206 = vld [vmem:[%s3 + $0xa68] sm:$0xff]
    %v1207 = vld [vmem:[%s3 + $0xa70] sm:$0xff]
    %v1208 = vld [vmem:[%s3 + $0xa78] sm:$0xff]
    %v1209 = vld [vmem:[%s3 + $0xa80] sm:$0xff]
    %v1210 = vld [vmem:[%s3 + $0xa88] sm:$0xff]
    %v1211 = vld [vmem:[%s3 + $0xa90] sm:$0xff]
    %v1212 = vld [vmem:[%s3 + $0xa98] sm:$0xff]
    %v1213 = vld [vmem:[%s3 + $0xaa0] sm:$0xff]
    %v1214 = vld [vmem:[%s3 + $0xaa8] sm:$0xff]
    %v1215 = vld [vmem:[%s3 + $0xab0] sm:$0xff]
    %v1216 = vld [vmem:[%s3 + $0xab8] sm:$0xff]
    %v1217 = vld [vmem:[%s3 + $0xac0] sm:$0xff]
    %v1218 = vld [vmem:[%s3 + $0xac8] sm:$0xff]
    %v1219 = vld [vmem:[%s3 + $0xad0] sm:$0xff]
    %v1220 = vld [vmem:[%s3 + $0xad8] sm:$0xff]
    %v1221 = vld [vmem:[%s3 + $0xae0] sm:$0xff]
    %v1222 = vld [vmem:[%s3 + $0xae8] sm:$0xff]
    %v1223 = vld [vmem:[%s3 + $0xaf0] sm:$0xff]
    %v1224 = vld [vmem:[%s3 + $0xaf8] sm:$0xff]
    %v1225 = vld [vmem:[%s3 + $0xb00] sm:$0xff]
    %v1226 = vld [vmem:[%s3 + $0xb08] sm:$0xff]
    %v1227 = vld [vmem:[%s3 + $0xb10] sm:$0xff]
    %v1228 = vld [vmem:[%s3 + $0xb18] sm:$0xff]
    %v1229 = vld [vmem:[%s3 + $0xb20] sm:$0xff]
    %v1230 = vld [vmem:[%s3 + $0xb28] sm:$0xff]
    %v1231 = vld [vmem:[%s3 + $0xb30] sm:$0xff]
    %v1232 = vld [vmem:[%s3 + $0xb38] sm:$0xff]
    %v1233 = vld [vmem:[%s3 + $0xb40] sm:$0xff]
    %v1234 = vld [vmem:[%s3 + $0xb48] sm:$0xff]
    %v1235 = vld [vmem:[%s3 + $0xb50] sm:$0xff]
    %v1236 = vld [vmem:[%s3 + $0xb58] sm:$0xff]
    %v1237 = vld [vmem:[%s3 + $0xb60] sm:$0xff]
    %v1238 = vld [vmem:[%s3 + $0xb68] sm:$0xff]
    %v1239 = vld [vmem:[%s3 + $0xb70] sm:$0xff]
    %v1240 = vld [vmem:[%s3 + $0xb78] sm:$0xff]
    %v1241 = vld [vmem:[%s3 + $0xb80] sm:$0xff]
    %v1242 = vld [vmem:[%s3 + $0xb88] sm:$0xff]
    %v1243 = vld [vmem:[%s3 + $0xb90] sm:$0xff]
    %v1244 = vld [vmem:[%s3 + $0xb98] sm:$0xff]
    %v1245 = vld [vmem:[%s3 + $0xba0] sm:$0xff]
    %v1246 = vld [vmem:[%s3 + $0xba8] sm:$0xff]
    %v1247 = vld [vmem:[%s3 + $0xbb0] sm:$0xff]
    %v1248 = vld [vmem:[%s3 + $0xbb8] sm:$0xff]
    %v1249 = vld [vmem:[%s3 + $0xbc0] sm:$0xff]
    %v1250 = vld [vmem:[%s3 + $0xbc8] sm:$0xff]
    %v1251 = vld [vmem:[%s3 + $0xbd0] sm:$0xff]
    %v1252 = vld [vmem:[%s3 + $0xbd8] sm:$0xff]
    %v1253 = vld [vmem:[%s3 + $0xbe0] sm:$0xff]
    %v1254 = vld [vmem:[%s3 + $0xbe8] sm:$0xff]
    %v1255 = vld [vmem:[%s3 + $0xbf0] sm:$0xff]
    %v1256 = vld [vmem:[%s3 + $0xbf8] sm:$0xff]
    %v1257 = vld [vmem:[%s3 + $0xc00] sm:$0xff]
    %v1258 = vld [vmem:[%s3 + $0xc08] sm:$0xff]
    %v1259 = vld [vmem:[%s3 + $0xc10] sm:$0xff]
    %v1260 = vld [vmem:[%s3 + $0xc18] sm:$0xff]
    %v1261 = vld [vmem:[%s3 + $0xc20] sm:$0xff]
    %v1262 = vld [vmem:[%s3 + $0xc28] sm:$0xff]
    %v1263 = vld [vmem:[%s3 + $0xc30] sm:$0xff]
    %v1264 = vld [vmem:[%s3 + $0xc38] sm:$0xff]
    %v1265 = vld [vmem:[%s3 + $0xc40] sm:$0xff]
    %v1266 = vld [vmem:[%s3 + $0xc48] sm:$0xff]
    %v1267 = vld [vmem:[%s3 + $0xc50] sm:$0xff]
    %v1268 = vld [vmem:[%s3 + $0xc58] sm:$0xff]
    %v1269 = vld [vmem:[%s3 + $0xc60] sm:$0xff]
    %v1270 = vld [vmem:[%s3 + $0xc68] sm:$0xff]
    %v1271 = vld [vmem:[%s3 + $0xc70] sm:$0xff]
    %v1272 = vld [vmem:[%s3 + $0xc78] sm:$0xff]
    %v1273 = vld [vmem:[%s3 + $0xc80] sm:$0xff]
    %v1274 = vld [vmem:[%s3 + $0xc88] sm:$0xff]
    %v1275 = vld [vmem:[%s3 + $0xc90] sm:$0xff]
    %v1276 = vld [vmem:[%s3 + $0xc98] sm:$0xff]
    %v1277 = vld [vmem:[%s3 + $0xca0] sm:$0xff]
    %v1278 = vld [vmem:[%s3 + $0xca8] sm:$0xff]
    %v1279 = vld [vmem:[%s3 + $0xcb0] sm:$0xff]
    %v1280 = vld [vmem:[%s3 + $0xcb8] sm:$0xff]
    %v1281 = vld [vmem:[%s3 + $0xcc0] sm:$0xff]
    %v1282 = vld [vmem:[%s3 + $0xcc8] sm:$0xff]
    %v1283 = vld [vmem:[%s3 + $0xcd0] sm:$0xff]
    %v1284 = vld [vmem:[%s3 + $0xcd8] sm:$0xff]
    %v1285 = vld [vmem:[%s3 + $0xce0] sm:$0xff]
    %v1286 = vld [vmem:[%s3 + $0xce8] sm:$0xff]
    %v1287 = vld [vmem:[%s3 + $0xcf0] sm:$0xff]
    %v1288 = vld [vmem:[%s3 + $0xcf8] sm:$0xff]
    %v1289 = vld [vmem:[%s3 + $0xd00] sm:$0xff]
    %v1290 = vld [vmem:[%s3 + $0xd08] sm:$0xff]
    %v1291 = vld [vmem:[%s3 + $0xd10] sm:$0xff]
    %v1292 = vld [vmem:[%s3 + $0xd18] sm:$0xff]
    %v1293 = vld [vmem:[%s3 + $0xd20] sm:$0xff]
    %v1294 = vld [vmem:[%s3 + $0xd28] sm:$0xff]
    %v1295 = vld [vmem:[%s3 + $0xd30] sm:$0xff]
    %v1296 = vld [vmem:[%s3 + $0xd38] sm:$0xff]
    %v1297 = vld [vmem:[%s3 + $0xd40] sm:$0xff]
    %v1298 = vld [vmem:[%s3 + $0xd48] sm:$0xff]
    %v1299 = vld [vmem:[%s3 + $0xd50] sm:$0xff]
    %v1300 = vld [vmem:[%s3 + $0xd58] sm:$0xff]
    %v1301 = vld [vmem:[%s3 + $0xd60] sm:$0xff]
    %v1302 = vld [vmem:[%s3 + $0xd68] sm:$0xff]
    %v1303 = vld [vmem:[%s3 + $0xd70] sm:$0xff]
    %v1304 = vld [vmem:[%s3 + $0xd78] sm:$0xff]
    %v1305 = vld [vmem:[%s3 + $0xd80] sm:$0xff]
    %v1306 = vld [vmem:[%s3 + $0xd88] sm:$0xff]
    %v1307 = vld [vmem:[%s3 + $0xd90] sm:$0xff]
    %v1308 = vld [vmem:[%s3 + $0xd98] sm:$0xff]
    %v1309 = vld [vmem:[%s3 + $0xda0] sm:$0xff]
    %v1310 = vld [vmem:[%s3 + $0xda8] sm:$0xff]
    %v1311 = vld [vmem:[%s3 + $0xdb0] sm:$0xff]
    %v1312 = vld [vmem:[%s3 + $0xdb8] sm:$0xff]
    %v1313 = vld [vmem:[%s3 + $0xdc0] sm:$0xff]
    %v1314 = vld [vmem:[%s3 + $0xdc8] sm:$0xff]
    %v1315 = vld [vmem:[%s3 + $0xdd0] sm:$0xff]
    %v1316 = vld [vmem:[%s3 + $0xdd8] sm:$0xff]
    %v1317 = vld [vmem:[%s3 + $0xde0] sm:$0xff]
    %v1318 = vld [vmem:[%s3 + $0xde8] sm:$0xff]
    %v1319 = vld [vmem:[%s3 + $0xdf0] sm:$0xff]
    %v1320 = vld [vmem:[%s3 + $0xdf8] sm:$0xff]
    %v1321 = vld [vmem:[%s3 + $0xe00] sm:$0xff]
    %v1322 = vld [vmem:[%s3 + $0xe08] sm:$0xff]
    %v1323 = vld [vmem:[%s3 + $0xe10] sm:$0xff]
    %v1324 = vld [vmem:[%s3 + $0xe18] sm:$0xff]
    %v1325 = vld [vmem:[%s3 + $0xe20] sm:$0xff]
    %v1326 = vld [vmem:[%s3 + $0xe28] sm:$0xff]
    %v1327 = vld [vmem:[%s3 + $0xe30] sm:$0xff]
    %v1328 = vld [vmem:[%s3 + $0xe38] sm:$0xff]
    %v1329 = vld [vmem:[%s3 + $0xe40] sm:$0xff]
    %v1330 = vld [vmem:[%s3 + $0xe48] sm:$0xff]
    %v1331 = vld [vmem:[%s3 + $0xe50] sm:$0xff]
    %v1332 = vld [vmem:[%s3 + $0xe58] sm:$0xff]
    %v1333 = vld [vmem:[%s3 + $0xe60] sm:$0xff]
    %v1334 = vld [vmem:[%s3 + $0xe68] sm:$0xff]
    %v1335 = vld [vmem:[%s3 + $0xe70] sm:$0xff]
    %v1336 = vld [vmem:[%s3 + $0xe78] sm:$0xff]
    %v1337 = vld [vmem:[%s3 + $0xe80] sm:$0xff]
    %v1338 = vld [vmem:[%s3 + $0xe88] sm:$0xff]
    %v1339 = vld [vmem:[%s3 + $0xe90] sm:$0xff]
    %v1340 = vld [vmem:[%s3 + $0xe98] sm:$0xff]
    %v1341 = vld [vmem:[%s3 + $0xea0] sm:$0xff]
    %v1342 = vld [vmem:[%s3 + $0xea8] sm:$0xff]
    %v1343 = vld [vmem:[%s3 + $0xeb0] sm:$0xff]
    %v1344 = vld [vmem:[%s3 + $0xeb8] sm:$0xff]
    %v1345 = vld [vmem:[%s3 + $0xec0] sm:$0xff]
    %v1346 = vld [vmem:[%s3 + $0xec8] sm:$0xff]
    %v1347 = vld [vmem:[%s3 + $0xed0] sm:$0xff]
    %v1348 = vld [vmem:[%s3 + $0xed8] sm:$0xff]
    %v1349 = vld [vmem:[%s3 + $0xee0] sm:$0xff]
    %v1350 = vld [vmem:[%s3 + $0xee8] sm:$0xff]
    %v1351 = vld [vmem:[%s3 + $0xef0] sm:$0xff]
    %v1352 = vld [vmem:[%s3 + $0xef8] sm:$0xff]
    %v1353 = vld [vmem:[%s3 + $0xf00] sm:$0xff]
    %v1354 = vld [vmem:[%s3 + $0xf08] sm:$0xff]
    %v1355 = vld [vmem:[%s3 + $0xf10] sm:$0xff]
    %v1356 = vld [vmem:[%s3 + $0xf18] sm:$0xff]
    %v1357 = vld [vmem:[%s3 + $0xf20] sm:$0xff]
    %v1358 = vld [vmem:[%s3 + $0xf28] sm:$0xff]
    %v1359 = vld [vmem:[%s3 + $0xf30] sm:$0xff]
    %v1360 = vld [vmem:[%s3 + $0xf38] sm:$0xff]
    %v1361 = vld [vmem:[%s3 + $0xf40] sm:$0xff]
    %v1362 = vld [vmem:[%s3 + $0xf48] sm:$0xff]
    %v1363 = vld [vmem:[%s3 + $0xf50] sm:$0xff]
    %v1364 = vld [vmem:[%s3 + $0xf58] sm:$0xff]
    %v1365 = vld [vmem:[%s3 + $0xf60] sm:$0xff]
    %v1366 = vld [vmem:[%s3 + $0xf68] sm:$0xff]
    %v1367 = vld [vmem:[%s3 + $0xf70] sm:$0xff]
    %v1368 = vld [vmem:[%s3 + $0xf78] sm:$0xff]
    %v1369 = vld [vmem:[%s3 + $0xf80] sm:$0xff]
    %v1370 = vld [vmem:[%s3 + $0xf88] sm:$0xff]
    %v1371 = vld [vmem:[%s3 + $0xf90] sm:$0xff]
    %v1372 = vld [vmem:[%s3 + $0xf98] sm:$0xff]
    %v1373 = vld [vmem:[%s3 + $0xfa0] sm:$0xff]
    %v1374 = vld [vmem:[%s3 + $0xfa8] sm:$0xff]
    %v1375 = vld [vmem:[%s3 + $0xfb0] sm:$0xff]
    %v1376 = vld [vmem:[%s3 + $0xfb8] sm:$0xff]
    %v1377 = vld [vmem:[%s3 + $0xfc0] sm:$0xff]
    %v1378 = vld [vmem:[%s3 + $0xfc8] sm:$0xff]
    %v1379 = vld [vmem:[%s3 + $0xfd0] sm:$0xff]
    %v1380 = vld [vmem:[%s3 + $0xfd8] sm:$0xff]
    %v1381 = vld [vmem:[%s3 + $0xfe0] sm:$0xff]
    %v1382 = vld [vmem:[%s3 + $0xfe8] sm:$0xff]
    %v1383 = vld [vmem:[%s3 + $0xff0] sm:$0xff]
    %v1384 = vld [vmem:[%s3 + $0xff8] sm:$0xff]
    %v1385 = vld [vmem:[%s4] sm:$0x3]
    %v1387 = vlaneseq
    %v1388 = vshrl.u32 %v1387, 7
    %v1389 = vsub.s32 0, %v1388
    %v1390 = vrot.slane %v1385, %v1389
    %v1391 = vlaneseq
    %v1392 = vshrl.u32 %v1391, 7
    %v1393 = vsub.s32 1, %v1392
    %v1394 = vrot.slane %v1385, %v1393
    %v1909 = vunpack.c.l.b16 %v873
    %v1910 = vunpack.c.h.b16 %v873
    %v1911 = vunpack.c.l.b16 %v874
    %v1912 = vunpack.c.h.b16 %v874
    %v1913 = vunpack.c.l.b16 %v875
    %v1914 = vunpack.c.h.b16 %v875
    %v1915 = vunpack.c.l.b16 %v876
    %v1916 = vunpack.c.h.b16 %v876
    %v1917 = vunpack.c.l.b16 %v877
    %v1918 = vunpack.c.h.b16 %v877
    %v1919 = vunpack.c.l.b16 %v878
    %v1920 = vunpack.c.h.b16 %v878
    %v1921 = vunpack.c.l.b16 %v879
    %v1922 = vunpack.c.h.b16 %v879
    %v1923 = vunpack.c.l.b16 %v880
    %v1924 = vunpack.c.h.b16 %v880
    %v1925 = vunpack.c.l.b16 %v881
    %v1926 = vunpack.c.h.b16 %v881
    %v1927 = vunpack.c.l.b16 %v882
    %v1928 = vunpack.c.h.b16 %v882
    %v1929 = vunpack.c.l.b16 %v883
    %v1930 = vunpack.c.h.b16 %v883
    %v1931 = vunpack.c.l.b16 %v884
    %v1932 = vunpack.c.h.b16 %v884
    %v1933 = vunpack.c.l.b16 %v885
    %v1934 = vunpack.c.h.b16 %v885
    %v1935 = vunpack.c.l.b16 %v886
    %v1936 = vunpack.c.h.b16 %v886
    %v1937 = vunpack.c.l.b16 %v887
    %v1938 = vunpack.c.h.b16 %v887
    %v1939 = vunpack.c.l.b16 %v888
    %v1940 = vunpack.c.h.b16 %v888
    %v1941 = vunpack.c.l.b16 %v889
    %v1942 = vunpack.c.h.b16 %v889
    %v1943 = vunpack.c.l.b16 %v890
    %v1944 = vunpack.c.h.b16 %v890
    %v1945 = vunpack.c.l.b16 %v891
    %v1946 = vunpack.c.h.b16 %v891
    %v1947 = vunpack.c.l.b16 %v892
    %v1948 = vunpack.c.h.b16 %v892
    %v1949 = vunpack.c.l.b16 %v893
    %v1950 = vunpack.c.h.b16 %v893
    %v1951 = vunpack.c.l.b16 %v894
    %v1952 = vunpack.c.h.b16 %v894
    %v1953 = vunpack.c.l.b16 %v895
    %v1954 = vunpack.c.h.b16 %v895
    %v1955 = vunpack.c.l.b16 %v896
    %v1956 = vunpack.c.h.b16 %v896
    %v1957 = vunpack.c.l.b16 %v897
    %v1958 = vunpack.c.h.b16 %v897
    %v1959 = vunpack.c.l.b16 %v898
    %v1960 = vunpack.c.h.b16 %v898
    %v1961 = vunpack.c.l.b16 %v899
    %v1962 = vunpack.c.h.b16 %v899
    %v1963 = vunpack.c.l.b16 %v900
    %v1964 = vunpack.c.h.b16 %v900
    %v1965 = vunpack.c.l.b16 %v901
    %v1966 = vunpack.c.h.b16 %v901
    %v1967 = vunpack.c.l.b16 %v902
    %v1968 = vunpack.c.h.b16 %v902
    %v1969 = vunpack.c.l.b16 %v903
    %v1970 = vunpack.c.h.b16 %v903
    %v1971 = vunpack.c.l.b16 %v904
    %v1972 = vunpack.c.h.b16 %v904
    %v1973 = vunpack.c.l.b16 %v905
    %v1974 = vunpack.c.h.b16 %v905
    %v1975 = vunpack.c.l.b16 %v906
    %v1976 = vunpack.c.h.b16 %v906
    %v1977 = vunpack.c.l.b16 %v907
    %v1978 = vunpack.c.h.b16 %v907
    %v1979 = vunpack.c.l.b16 %v908
    %v1980 = vunpack.c.h.b16 %v908
    %v1981 = vunpack.c.l.b16 %v909
    %v1982 = vunpack.c.h.b16 %v909
    %v1983 = vunpack.c.l.b16 %v910
    %v1984 = vunpack.c.h.b16 %v910
    %v1985 = vunpack.c.l.b16 %v911
    %v1986 = vunpack.c.h.b16 %v911
    %v1987 = vunpack.c.l.b16 %v912
    %v1988 = vunpack.c.h.b16 %v912
    %v1989 = vunpack.c.l.b16 %v913
    %v1990 = vunpack.c.h.b16 %v913
    %v1991 = vunpack.c.l.b16 %v914
    %v1992 = vunpack.c.h.b16 %v914
    %v1993 = vunpack.c.l.b16 %v915
    %v1994 = vunpack.c.h.b16 %v915
    %v1995 = vunpack.c.l.b16 %v916
    %v1996 = vunpack.c.h.b16 %v916
    %v1997 = vunpack.c.l.b16 %v917
    %v1998 = vunpack.c.h.b16 %v917
    %v1999 = vunpack.c.l.b16 %v918
    %v2000 = vunpack.c.h.b16 %v918
    %v2001 = vunpack.c.l.b16 %v919
    %v2002 = vunpack.c.h.b16 %v919
    %v2003 = vunpack.c.l.b16 %v920
    %v2004 = vunpack.c.h.b16 %v920
    %v2005 = vunpack.c.l.b16 %v921
    %v2006 = vunpack.c.h.b16 %v921
    %v2007 = vunpack.c.l.b16 %v922
    %v2008 = vunpack.c.h.b16 %v922
    %v2009 = vunpack.c.l.b16 %v923
    %v2010 = vunpack.c.h.b16 %v923
    %v2011 = vunpack.c.l.b16 %v924
    %v2012 = vunpack.c.h.b16 %v924
    %v2013 = vunpack.c.l.b16 %v925
    %v2014 = vunpack.c.h.b16 %v925
    %v2015 = vunpack.c.l.b16 %v926
    %v2016 = vunpack.c.h.b16 %v926
    %v2017 = vunpack.c.l.b16 %v927
    %v2018 = vunpack.c.h.b16 %v927
    %v2019 = vunpack.c.l.b16 %v928
    %v2020 = vunpack.c.h.b16 %v928
    %v2021 = vunpack.c.l.b16 %v929
    %v2022 = vunpack.c.h.b16 %v929
    %v2023 = vunpack.c.l.b16 %v930
    %v2024 = vunpack.c.h.b16 %v930
    %v2025 = vunpack.c.l.b16 %v931
    %v2026 = vunpack.c.h.b16 %v931
    %v2027 = vunpack.c.l.b16 %v932
    %v2028 = vunpack.c.h.b16 %v932
    %v2029 = vunpack.c.l.b16 %v933
    %v2030 = vunpack.c.h.b16 %v933
    %v2031 = vunpack.c.l.b16 %v934
    %v2032 = vunpack.c.h.b16 %v934
    %v2033 = vunpack.c.l.b16 %v935
    %v2034 = vunpack.c.h.b16 %v935
    %v2035 = vunpack.c.l.b16 %v936
    %v2036 = vunpack.c.h.b16 %v936
    %v2037 = vunpack.c.l.b16 %v937
    %v2038 = vunpack.c.h.b16 %v937
    %v2039 = vunpack.c.l.b16 %v938
    %v2040 = vunpack.c.h.b16 %v938
    %v2041 = vunpack.c.l.b16 %v939
    %v2042 = vunpack.c.h.b16 %v939
    %v2043 = vunpack.c.l.b16 %v940
    %v2044 = vunpack.c.h.b16 %v940
    %v2045 = vunpack.c.l.b16 %v941
    %v2046 = vunpack.c.h.b16 %v941
    %v2047 = vunpack.c.l.b16 %v942
    %v2048 = vunpack.c.h.b16 %v942
    %v2049 = vunpack.c.l.b16 %v943
    %v2050 = vunpack.c.h.b16 %v943
    %v2051 = vunpack.c.l.b16 %v944
    %v2052 = vunpack.c.h.b16 %v944
    %v2053 = vunpack.c.l.b16 %v945
    %v2054 = vunpack.c.h.b16 %v945
    %v2055 = vunpack.c.l.b16 %v946
    %v2056 = vunpack.c.h.b16 %v946
    %v2057 = vunpack.c.l.b16 %v947
    %v2058 = vunpack.c.h.b16 %v947
    %v2059 = vunpack.c.l.b16 %v948
    %v2060 = vunpack.c.h.b16 %v948
    %v2061 = vunpack.c.l.b16 %v949
    %v2062 = vunpack.c.h.b16 %v949
    %v2063 = vunpack.c.l.b16 %v950
    %v2064 = vunpack.c.h.b16 %v950
    %v2065 = vunpack.c.l.b16 %v951
    %v2066 = vunpack.c.h.b16 %v951
    %v2067 = vunpack.c.l.b16 %v952
    %v2068 = vunpack.c.h.b16 %v952
    %v2069 = vunpack.c.l.b16 %v953
    %v2070 = vunpack.c.h.b16 %v953
    %v2071 = vunpack.c.l.b16 %v954
    %v2072 = vunpack.c.h.b16 %v954
    %v2073 = vunpack.c.l.b16 %v955
    %v2074 = vunpack.c.h.b16 %v955
    %v2075 = vunpack.c.l.b16 %v956
    %v2076 = vunpack.c.h.b16 %v956
    %v2077 = vunpack.c.l.b16 %v957
    %v2078 = vunpack.c.h.b16 %v957
    %v2079 = vunpack.c.l.b16 %v958
    %v2080 = vunpack.c.h.b16 %v958
    %v2081 = vunpack.c.l.b16 %v959
    %v2082 = vunpack.c.h.b16 %v959
    %v2083 = vunpack.c.l.b16 %v960
    %v2084 = vunpack.c.h.b16 %v960
    %v2085 = vunpack.c.l.b16 %v961
    %v2086 = vunpack.c.h.b16 %v961
    %v2087 = vunpack.c.l.b16 %v962
    %v2088 = vunpack.c.h.b16 %v962
    %v2089 = vunpack.c.l.b16 %v963
    %v2090 = vunpack.c.h.b16 %v963
    %v2091 = vunpack.c.l.b16 %v964
    %v2092 = vunpack.c.h.b16 %v964
    %v2093 = vunpack.c.l.b16 %v965
    %v2094 = vunpack.c.h.b16 %v965
    %v2095 = vunpack.c.l.b16 %v966
    %v2096 = vunpack.c.h.b16 %v966
    %v2097 = vunpack.c.l.b16 %v967
    %v2098 = vunpack.c.h.b16 %v967
    %v2099 = vunpack.c.l.b16 %v968
    %v2100 = vunpack.c.h.b16 %v968
    %v2101 = vunpack.c.l.b16 %v969
    %v2102 = vunpack.c.h.b16 %v969
    %v2103 = vunpack.c.l.b16 %v970
    %v2104 = vunpack.c.h.b16 %v970
    %v2105 = vunpack.c.l.b16 %v971
    %v2106 = vunpack.c.h.b16 %v971
    %v2107 = vunpack.c.l.b16 %v972
    %v2108 = vunpack.c.h.b16 %v972
    %v2109 = vunpack.c.l.b16 %v973
    %v2110 = vunpack.c.h.b16 %v973
    %v2111 = vunpack.c.l.b16 %v974
    %v2112 = vunpack.c.h.b16 %v974
    %v2113 = vunpack.c.l.b16 %v975
    %v2114 = vunpack.c.h.b16 %v975
    %v2115 = vunpack.c.l.b16 %v976
    %v2116 = vunpack.c.h.b16 %v976
    %v2117 = vunpack.c.l.b16 %v977
    %v2118 = vunpack.c.h.b16 %v977
    %v2119 = vunpack.c.l.b16 %v978
    %v2120 = vunpack.c.h.b16 %v978
    %v2121 = vunpack.c.l.b16 %v979
    %v2122 = vunpack.c.h.b16 %v979
    %v2123 = vunpack.c.l.b16 %v980
    %v2124 = vunpack.c.h.b16 %v980
    %v2125 = vunpack.c.l.b16 %v981
    %v2126 = vunpack.c.h.b16 %v981
    %v2127 = vunpack.c.l.b16 %v982
    %v2128 = vunpack.c.h.b16 %v982
    %v2129 = vunpack.c.l.b16 %v983
    %v2130 = vunpack.c.h.b16 %v983
    %v2131 = vunpack.c.l.b16 %v984
    %v2132 = vunpack.c.h.b16 %v984
    %v2133 = vunpack.c.l.b16 %v985
    %v2134 = vunpack.c.h.b16 %v985
    %v2135 = vunpack.c.l.b16 %v986
    %v2136 = vunpack.c.h.b16 %v986
    %v2137 = vunpack.c.l.b16 %v987
    %v2138 = vunpack.c.h.b16 %v987
    %v2139 = vunpack.c.l.b16 %v988
    %v2140 = vunpack.c.h.b16 %v988
    %v2141 = vunpack.c.l.b16 %v989
    %v2142 = vunpack.c.h.b16 %v989
    %v2143 = vunpack.c.l.b16 %v990
    %v2144 = vunpack.c.h.b16 %v990
    %v2145 = vunpack.c.l.b16 %v991
    %v2146 = vunpack.c.h.b16 %v991
    %v2147 = vunpack.c.l.b16 %v992
    %v2148 = vunpack.c.h.b16 %v992
    %v2149 = vunpack.c.l.b16 %v993
    %v2150 = vunpack.c.h.b16 %v993
    %v2151 = vunpack.c.l.b16 %v994
    %v2152 = vunpack.c.h.b16 %v994
    %v2153 = vunpack.c.l.b16 %v995
    %v2154 = vunpack.c.h.b16 %v995
    %v2155 = vunpack.c.l.b16 %v996
    %v2156 = vunpack.c.h.b16 %v996
    %v2157 = vunpack.c.l.b16 %v997
    %v2158 = vunpack.c.h.b16 %v997
    %v2159 = vunpack.c.l.b16 %v998
    %v2160 = vunpack.c.h.b16 %v998
    %v2161 = vunpack.c.l.b16 %v999
    %v2162 = vunpack.c.h.b16 %v999
    %v2163 = vunpack.c.l.b16 %v1000
    %v2164 = vunpack.c.h.b16 %v1000
    %v2165 = vunpack.c.l.b16 %v1001
    %v2166 = vunpack.c.h.b16 %v1001
    %v2167 = vunpack.c.l.b16 %v1002
    %v2168 = vunpack.c.h.b16 %v1002
    %v2169 = vunpack.c.l.b16 %v1003
    %v2170 = vunpack.c.h.b16 %v1003
    %v2171 = vunpack.c.l.b16 %v1004
    %v2172 = vunpack.c.h.b16 %v1004
    %v2173 = vunpack.c.l.b16 %v1005
    %v2174 = vunpack.c.h.b16 %v1005
    %v2175 = vunpack.c.l.b16 %v1006
    %v2176 = vunpack.c.h.b16 %v1006
    %v2177 = vunpack.c.l.b16 %v1007
    %v2178 = vunpack.c.h.b16 %v1007
    %v2179 = vunpack.c.l.b16 %v1008
    %v2180 = vunpack.c.h.b16 %v1008
    %v2181 = vunpack.c.l.b16 %v1009
    %v2182 = vunpack.c.h.b16 %v1009
    %v2183 = vunpack.c.l.b16 %v1010
    %v2184 = vunpack.c.h.b16 %v1010
    %v2185 = vunpack.c.l.b16 %v1011
    %v2186 = vunpack.c.h.b16 %v1011
    %v2187 = vunpack.c.l.b16 %v1012
    %v2188 = vunpack.c.h.b16 %v1012
    %v2189 = vunpack.c.l.b16 %v1013
    %v2190 = vunpack.c.h.b16 %v1013
    %v2191 = vunpack.c.l.b16 %v1014
    %v2192 = vunpack.c.h.b16 %v1014
    %v2193 = vunpack.c.l.b16 %v1015
    %v2194 = vunpack.c.h.b16 %v1015
    %v2195 = vunpack.c.l.b16 %v1016
    %v2196 = vunpack.c.h.b16 %v1016
    %v2197 = vunpack.c.l.b16 %v1017
    %v2198 = vunpack.c.h.b16 %v1017
    %v2199 = vunpack.c.l.b16 %v1018
    %v2200 = vunpack.c.h.b16 %v1018
    %v2201 = vunpack.c.l.b16 %v1019
    %v2202 = vunpack.c.h.b16 %v1019
    %v2203 = vunpack.c.l.b16 %v1020
    %v2204 = vunpack.c.h.b16 %v1020
    %v2205 = vunpack.c.l.b16 %v1021
    %v2206 = vunpack.c.h.b16 %v1021
    %v2207 = vunpack.c.l.b16 %v1022
    %v2208 = vunpack.c.h.b16 %v1022
    %v2209 = vunpack.c.l.b16 %v1023
    %v2210 = vunpack.c.h.b16 %v1023
    %v2211 = vunpack.c.l.b16 %v1024
    %v2212 = vunpack.c.h.b16 %v1024
    %v2213 = vunpack.c.l.b16 %v1025
    %v2214 = vunpack.c.h.b16 %v1025
    %v2215 = vunpack.c.l.b16 %v1026
    %v2216 = vunpack.c.h.b16 %v1026
    %v2217 = vunpack.c.l.b16 %v1027
    %v2218 = vunpack.c.h.b16 %v1027
    %v2219 = vunpack.c.l.b16 %v1028
    %v2220 = vunpack.c.h.b16 %v1028
    %v2221 = vunpack.c.l.b16 %v1029
    %v2222 = vunpack.c.h.b16 %v1029
    %v2223 = vunpack.c.l.b16 %v1030
    %v2224 = vunpack.c.h.b16 %v1030
    %v2225 = vunpack.c.l.b16 %v1031
    %v2226 = vunpack.c.h.b16 %v1031
    %v2227 = vunpack.c.l.b16 %v1032
    %v2228 = vunpack.c.h.b16 %v1032
    %v2229 = vunpack.c.l.b16 %v1033
    %v2230 = vunpack.c.h.b16 %v1033
    %v2231 = vunpack.c.l.b16 %v1034
    %v2232 = vunpack.c.h.b16 %v1034
    %v2233 = vunpack.c.l.b16 %v1035
    %v2234 = vunpack.c.h.b16 %v1035
    %v2235 = vunpack.c.l.b16 %v1036
    %v2236 = vunpack.c.h.b16 %v1036
    %v2237 = vunpack.c.l.b16 %v1037
    %v2238 = vunpack.c.h.b16 %v1037
    %v2239 = vunpack.c.l.b16 %v1038
    %v2240 = vunpack.c.h.b16 %v1038
    %v2241 = vunpack.c.l.b16 %v1039
    %v2242 = vunpack.c.h.b16 %v1039
    %v2243 = vunpack.c.l.b16 %v1040
    %v2244 = vunpack.c.h.b16 %v1040
    %v2245 = vunpack.c.l.b16 %v1041
    %v2246 = vunpack.c.h.b16 %v1041
    %v2247 = vunpack.c.l.b16 %v1042
    %v2248 = vunpack.c.h.b16 %v1042
    %v2249 = vunpack.c.l.b16 %v1043
    %v2250 = vunpack.c.h.b16 %v1043
    %v2251 = vunpack.c.l.b16 %v1044
    %v2252 = vunpack.c.h.b16 %v1044
    %v2253 = vunpack.c.l.b16 %v1045
    %v2254 = vunpack.c.h.b16 %v1045
    %v2255 = vunpack.c.l.b16 %v1046
    %v2256 = vunpack.c.h.b16 %v1046
    %v2257 = vunpack.c.l.b16 %v1047
    %v2258 = vunpack.c.h.b16 %v1047
    %v2259 = vunpack.c.l.b16 %v1048
    %v2260 = vunpack.c.h.b16 %v1048
    %v2261 = vunpack.c.l.b16 %v1049
    %v2262 = vunpack.c.h.b16 %v1049
    %v2263 = vunpack.c.l.b16 %v1050
    %v2264 = vunpack.c.h.b16 %v1050
    %v2265 = vunpack.c.l.b16 %v1051
    %v2266 = vunpack.c.h.b16 %v1051
    %v2267 = vunpack.c.l.b16 %v1052
    %v2268 = vunpack.c.h.b16 %v1052
    %v2269 = vunpack.c.l.b16 %v1053
    %v2270 = vunpack.c.h.b16 %v1053
    %v2271 = vunpack.c.l.b16 %v1054
    %v2272 = vunpack.c.h.b16 %v1054
    %v2273 = vunpack.c.l.b16 %v1055
    %v2274 = vunpack.c.h.b16 %v1055
    %v2275 = vunpack.c.l.b16 %v1056
    %v2276 = vunpack.c.h.b16 %v1056
    %v2277 = vunpack.c.l.b16 %v1057
    %v2278 = vunpack.c.h.b16 %v1057
    %v2279 = vunpack.c.l.b16 %v1058
    %v2280 = vunpack.c.h.b16 %v1058
    %v2281 = vunpack.c.l.b16 %v1059
    %v2282 = vunpack.c.h.b16 %v1059
    %v2283 = vunpack.c.l.b16 %v1060
    %v2284 = vunpack.c.h.b16 %v1060
    %v2285 = vunpack.c.l.b16 %v1061
    %v2286 = vunpack.c.h.b16 %v1061
    %v2287 = vunpack.c.l.b16 %v1062
    %v2288 = vunpack.c.h.b16 %v1062
    %v2289 = vunpack.c.l.b16 %v1063
    %v2290 = vunpack.c.h.b16 %v1063
    %v2291 = vunpack.c.l.b16 %v1064
    %v2292 = vunpack.c.h.b16 %v1064
    %v2293 = vunpack.c.l.b16 %v1065
    %v2294 = vunpack.c.h.b16 %v1065
    %v2295 = vunpack.c.l.b16 %v1066
    %v2296 = vunpack.c.h.b16 %v1066
    %v2297 = vunpack.c.l.b16 %v1067
    %v2298 = vunpack.c.h.b16 %v1067
    %v2299 = vunpack.c.l.b16 %v1068
    %v2300 = vunpack.c.h.b16 %v1068
    %v2301 = vunpack.c.l.b16 %v1069
    %v2302 = vunpack.c.h.b16 %v1069
    %v2303 = vunpack.c.l.b16 %v1070
    %v2304 = vunpack.c.h.b16 %v1070
    %v2305 = vunpack.c.l.b16 %v1071
    %v2306 = vunpack.c.h.b16 %v1071
    %v2307 = vunpack.c.l.b16 %v1072
    %v2308 = vunpack.c.h.b16 %v1072
    %v2309 = vunpack.c.l.b16 %v1073
    %v2310 = vunpack.c.h.b16 %v1073
    %v2311 = vunpack.c.l.b16 %v1074
    %v2312 = vunpack.c.h.b16 %v1074
    %v2313 = vunpack.c.l.b16 %v1075
    %v2314 = vunpack.c.h.b16 %v1075
    %v2315 = vunpack.c.l.b16 %v1076
    %v2316 = vunpack.c.h.b16 %v1076
    %v2317 = vunpack.c.l.b16 %v1077
    %v2318 = vunpack.c.h.b16 %v1077
    %v2319 = vunpack.c.l.b16 %v1078
    %v2320 = vunpack.c.h.b16 %v1078
    %v2321 = vunpack.c.l.b16 %v1079
    %v2322 = vunpack.c.h.b16 %v1079
    %v2323 = vunpack.c.l.b16 %v1080
    %v2324 = vunpack.c.h.b16 %v1080
    %v2325 = vunpack.c.l.b16 %v1081
    %v2326 = vunpack.c.h.b16 %v1081
    %v2327 = vunpack.c.l.b16 %v1082
    %v2328 = vunpack.c.h.b16 %v1082
    %v2329 = vunpack.c.l.b16 %v1083
    %v2330 = vunpack.c.h.b16 %v1083
    %v2331 = vunpack.c.l.b16 %v1084
    %v2332 = vunpack.c.h.b16 %v1084
    %v2333 = vunpack.c.l.b16 %v1085
    %v2334 = vunpack.c.h.b16 %v1085
    %v2335 = vunpack.c.l.b16 %v1086
    %v2336 = vunpack.c.h.b16 %v1086
    %v2337 = vunpack.c.l.b16 %v1087
    %v2338 = vunpack.c.h.b16 %v1087
    %v2339 = vunpack.c.l.b16 %v1088
    %v2340 = vunpack.c.h.b16 %v1088
    %v2341 = vunpack.c.l.b16 %v1089
    %v2342 = vunpack.c.h.b16 %v1089
    %v2343 = vunpack.c.l.b16 %v1090
    %v2344 = vunpack.c.h.b16 %v1090
    %v2345 = vunpack.c.l.b16 %v1091
    %v2346 = vunpack.c.h.b16 %v1091
    %v2347 = vunpack.c.l.b16 %v1092
    %v2348 = vunpack.c.h.b16 %v1092
    %v2349 = vunpack.c.l.b16 %v1093
    %v2350 = vunpack.c.h.b16 %v1093
    %v2351 = vunpack.c.l.b16 %v1094
    %v2352 = vunpack.c.h.b16 %v1094
    %v2353 = vunpack.c.l.b16 %v1095
    %v2354 = vunpack.c.h.b16 %v1095
    %v2355 = vunpack.c.l.b16 %v1096
    %v2356 = vunpack.c.h.b16 %v1096
    %v2357 = vunpack.c.l.b16 %v1097
    %v2358 = vunpack.c.h.b16 %v1097
    %v2359 = vunpack.c.l.b16 %v1098
    %v2360 = vunpack.c.h.b16 %v1098
    %v2361 = vunpack.c.l.b16 %v1099
    %v2362 = vunpack.c.h.b16 %v1099
    %v2363 = vunpack.c.l.b16 %v1100
    %v2364 = vunpack.c.h.b16 %v1100
    %v2365 = vunpack.c.l.b16 %v1101
    %v2366 = vunpack.c.h.b16 %v1101
    %v2367 = vunpack.c.l.b16 %v1102
    %v2368 = vunpack.c.h.b16 %v1102
    %v2369 = vunpack.c.l.b16 %v1103
    %v2370 = vunpack.c.h.b16 %v1103
    %v2371 = vunpack.c.l.b16 %v1104
    %v2372 = vunpack.c.h.b16 %v1104
    %v2373 = vunpack.c.l.b16 %v1105
    %v2374 = vunpack.c.h.b16 %v1105
    %v2375 = vunpack.c.l.b16 %v1106
    %v2376 = vunpack.c.h.b16 %v1106
    %v2377 = vunpack.c.l.b16 %v1107
    %v2378 = vunpack.c.h.b16 %v1107
    %v2379 = vunpack.c.l.b16 %v1108
    %v2380 = vunpack.c.h.b16 %v1108
    %v2381 = vunpack.c.l.b16 %v1109
    %v2382 = vunpack.c.h.b16 %v1109
    %v2383 = vunpack.c.l.b16 %v1110
    %v2384 = vunpack.c.h.b16 %v1110
    %v2385 = vunpack.c.l.b16 %v1111
    %v2386 = vunpack.c.h.b16 %v1111
    %v2387 = vunpack.c.l.b16 %v1112
    %v2388 = vunpack.c.h.b16 %v1112
    %v2389 = vunpack.c.l.b16 %v1113
    %v2390 = vunpack.c.h.b16 %v1113
    %v2391 = vunpack.c.l.b16 %v1114
    %v2392 = vunpack.c.h.b16 %v1114
    %v2393 = vunpack.c.l.b16 %v1115
    %v2394 = vunpack.c.h.b16 %v1115
    %v2395 = vunpack.c.l.b16 %v1116
    %v2396 = vunpack.c.h.b16 %v1116
    %v2397 = vunpack.c.l.b16 %v1117
    %v2398 = vunpack.c.h.b16 %v1117
    %v2399 = vunpack.c.l.b16 %v1118
    %v2400 = vunpack.c.h.b16 %v1118
    %v2401 = vunpack.c.l.b16 %v1119
    %v2402 = vunpack.c.h.b16 %v1119
    %v2403 = vunpack.c.l.b16 %v1120
    %v2404 = vunpack.c.h.b16 %v1120
    %v2405 = vunpack.c.l.b16 %v1121
    %v2406 = vunpack.c.h.b16 %v1121
    %v2407 = vunpack.c.l.b16 %v1122
    %v2408 = vunpack.c.h.b16 %v1122
    %v2409 = vunpack.c.l.b16 %v1123
    %v2410 = vunpack.c.h.b16 %v1123
    %v2411 = vunpack.c.l.b16 %v1124
    %v2412 = vunpack.c.h.b16 %v1124
    %v2413 = vunpack.c.l.b16 %v1125
    %v2414 = vunpack.c.h.b16 %v1125
    %v2415 = vunpack.c.l.b16 %v1126
    %v2416 = vunpack.c.h.b16 %v1126
    %v2417 = vunpack.c.l.b16 %v1127
    %v2418 = vunpack.c.h.b16 %v1127
    %v2419 = vunpack.c.l.b16 %v1128
    %v2420 = vunpack.c.h.b16 %v1128
    %v2421 = vunpack.c.l.b16 %v1129
    %v2422 = vunpack.c.h.b16 %v1129
    %v2423 = vunpack.c.l.b16 %v1130
    %v2424 = vunpack.c.h.b16 %v1130
    %v2425 = vunpack.c.l.b16 %v1131
    %v2426 = vunpack.c.h.b16 %v1131
    %v2427 = vunpack.c.l.b16 %v1132
    %v2428 = vunpack.c.h.b16 %v1132
    %v2429 = vunpack.c.l.b16 %v1133
    %v2430 = vunpack.c.h.b16 %v1133
    %v2431 = vunpack.c.l.b16 %v1134
    %v2432 = vunpack.c.h.b16 %v1134
    %v2433 = vunpack.c.l.b16 %v1135
    %v2434 = vunpack.c.h.b16 %v1135
    %v2435 = vunpack.c.l.b16 %v1136
    %v2436 = vunpack.c.h.b16 %v1136
    %v2437 = vunpack.c.l.b16 %v1137
    %v2438 = vunpack.c.h.b16 %v1137
    %v2439 = vunpack.c.l.b16 %v1138
    %v2440 = vunpack.c.h.b16 %v1138
    %v2441 = vunpack.c.l.b16 %v1139
    %v2442 = vunpack.c.h.b16 %v1139
    %v2443 = vunpack.c.l.b16 %v1140
    %v2444 = vunpack.c.h.b16 %v1140
    %v2445 = vunpack.c.l.b16 %v1141
    %v2446 = vunpack.c.h.b16 %v1141
    %v2447 = vunpack.c.l.b16 %v1142
    %v2448 = vunpack.c.h.b16 %v1142
    %v2449 = vunpack.c.l.b16 %v1143
    %v2450 = vunpack.c.h.b16 %v1143
    %v2451 = vunpack.c.l.b16 %v1144
    %v2452 = vunpack.c.h.b16 %v1144
    %v2453 = vunpack.c.l.b16 %v1145
    %v2454 = vunpack.c.h.b16 %v1145
    %v2455 = vunpack.c.l.b16 %v1146
    %v2456 = vunpack.c.h.b16 %v1146
    %v2457 = vunpack.c.l.b16 %v1147
    %v2458 = vunpack.c.h.b16 %v1147
    %v2459 = vunpack.c.l.b16 %v1148
    %v2460 = vunpack.c.h.b16 %v1148
    %v2461 = vunpack.c.l.b16 %v1149
    %v2462 = vunpack.c.h.b16 %v1149
    %v2463 = vunpack.c.l.b16 %v1150
    %v2464 = vunpack.c.h.b16 %v1150
    %v2465 = vunpack.c.l.b16 %v1151
    %v2466 = vunpack.c.h.b16 %v1151
    %v2467 = vunpack.c.l.b16 %v1152
    %v2468 = vunpack.c.h.b16 %v1152
    %v2469 = vunpack.c.l.b16 %v1153
    %v2470 = vunpack.c.h.b16 %v1153
    %v2471 = vunpack.c.l.b16 %v1154
    %v2472 = vunpack.c.h.b16 %v1154
    %v2473 = vunpack.c.l.b16 %v1155
    %v2474 = vunpack.c.h.b16 %v1155
    %v2475 = vunpack.c.l.b16 %v1156
    %v2476 = vunpack.c.h.b16 %v1156
    %v2477 = vunpack.c.l.b16 %v1157
    %v2478 = vunpack.c.h.b16 %v1157
    %v2479 = vunpack.c.l.b16 %v1158
    %v2480 = vunpack.c.h.b16 %v1158
    %v2481 = vunpack.c.l.b16 %v1159
    %v2482 = vunpack.c.h.b16 %v1159
    %v2483 = vunpack.c.l.b16 %v1160
    %v2484 = vunpack.c.h.b16 %v1160
    %v2485 = vunpack.c.l.b16 %v1161
    %v2486 = vunpack.c.h.b16 %v1161
    %v2487 = vunpack.c.l.b16 %v1162
    %v2488 = vunpack.c.h.b16 %v1162
    %v2489 = vunpack.c.l.b16 %v1163
    %v2490 = vunpack.c.h.b16 %v1163
    %v2491 = vunpack.c.l.b16 %v1164
    %v2492 = vunpack.c.h.b16 %v1164
    %v2493 = vunpack.c.l.b16 %v1165
    %v2494 = vunpack.c.h.b16 %v1165
    %v2495 = vunpack.c.l.b16 %v1166
    %v2496 = vunpack.c.h.b16 %v1166
    %v2497 = vunpack.c.l.b16 %v1167
    %v2498 = vunpack.c.h.b16 %v1167
    %v2499 = vunpack.c.l.b16 %v1168
    %v2500 = vunpack.c.h.b16 %v1168
    %v2501 = vunpack.c.l.b16 %v1169
    %v2502 = vunpack.c.h.b16 %v1169
    %v2503 = vunpack.c.l.b16 %v1170
    %v2504 = vunpack.c.h.b16 %v1170
    %v2505 = vunpack.c.l.b16 %v1171
    %v2506 = vunpack.c.h.b16 %v1171
    %v2507 = vunpack.c.l.b16 %v1172
    %v2508 = vunpack.c.h.b16 %v1172
    %v2509 = vunpack.c.l.b16 %v1173
    %v2510 = vunpack.c.h.b16 %v1173
    %v2511 = vunpack.c.l.b16 %v1174
    %v2512 = vunpack.c.h.b16 %v1174
    %v2513 = vunpack.c.l.b16 %v1175
    %v2514 = vunpack.c.h.b16 %v1175
    %v2515 = vunpack.c.l.b16 %v1176
    %v2516 = vunpack.c.h.b16 %v1176
    %v2517 = vunpack.c.l.b16 %v1177
    %v2518 = vunpack.c.h.b16 %v1177
    %v2519 = vunpack.c.l.b16 %v1178
    %v2520 = vunpack.c.h.b16 %v1178
    %v2521 = vunpack.c.l.b16 %v1179
    %v2522 = vunpack.c.h.b16 %v1179
    %v2523 = vunpack.c.l.b16 %v1180
    %v2524 = vunpack.c.h.b16 %v1180
    %v2525 = vunpack.c.l.b16 %v1181
    %v2526 = vunpack.c.h.b16 %v1181
    %v2527 = vunpack.c.l.b16 %v1182
    %v2528 = vunpack.c.h.b16 %v1182
    %v2529 = vunpack.c.l.b16 %v1183
    %v2530 = vunpack.c.h.b16 %v1183
    %v2531 = vunpack.c.l.b16 %v1184
    %v2532 = vunpack.c.h.b16 %v1184
    %v2533 = vunpack.c.l.b16 %v1185
    %v2534 = vunpack.c.h.b16 %v1185
    %v2535 = vunpack.c.l.b16 %v1186
    %v2536 = vunpack.c.h.b16 %v1186
    %v2537 = vunpack.c.l.b16 %v1187
    %v2538 = vunpack.c.h.b16 %v1187
    %v2539 = vunpack.c.l.b16 %v1188
    %v2540 = vunpack.c.h.b16 %v1188
    %v2541 = vunpack.c.l.b16 %v1189
    %v2542 = vunpack.c.h.b16 %v1189
    %v2543 = vunpack.c.l.b16 %v1190
    %v2544 = vunpack.c.h.b16 %v1190
    %v2545 = vunpack.c.l.b16 %v1191
    %v2546 = vunpack.c.h.b16 %v1191
    %v2547 = vunpack.c.l.b16 %v1192
    %v2548 = vunpack.c.h.b16 %v1192
    %v2549 = vunpack.c.l.b16 %v1193
    %v2550 = vunpack.c.h.b16 %v1193
    %v2551 = vunpack.c.l.b16 %v1194
    %v2552 = vunpack.c.h.b16 %v1194
    %v2553 = vunpack.c.l.b16 %v1195
    %v2554 = vunpack.c.h.b16 %v1195
    %v2555 = vunpack.c.l.b16 %v1196
    %v2556 = vunpack.c.h.b16 %v1196
    %v2557 = vunpack.c.l.b16 %v1197
    %v2558 = vunpack.c.h.b16 %v1197
    %v2559 = vunpack.c.l.b16 %v1198
    %v2560 = vunpack.c.h.b16 %v1198
    %v2561 = vunpack.c.l.b16 %v1199
    %v2562 = vunpack.c.h.b16 %v1199
    %v2563 = vunpack.c.l.b16 %v1200
    %v2564 = vunpack.c.h.b16 %v1200
    %v2565 = vunpack.c.l.b16 %v1201
    %v2566 = vunpack.c.h.b16 %v1201
    %v2567 = vunpack.c.l.b16 %v1202
    %v2568 = vunpack.c.h.b16 %v1202
    %v2569 = vunpack.c.l.b16 %v1203
    %v2570 = vunpack.c.h.b16 %v1203
    %v2571 = vunpack.c.l.b16 %v1204
    %v2572 = vunpack.c.h.b16 %v1204
    %v2573 = vunpack.c.l.b16 %v1205
    %v2574 = vunpack.c.h.b16 %v1205
    %v2575 = vunpack.c.l.b16 %v1206
    %v2576 = vunpack.c.h.b16 %v1206
    %v2577 = vunpack.c.l.b16 %v1207
    %v2578 = vunpack.c.h.b16 %v1207
    %v2579 = vunpack.c.l.b16 %v1208
    %v2580 = vunpack.c.h.b16 %v1208
    %v2581 = vunpack.c.l.b16 %v1209
    %v2582 = vunpack.c.h.b16 %v1209
    %v2583 = vunpack.c.l.b16 %v1210
    %v2584 = vunpack.c.h.b16 %v1210
    %v2585 = vunpack.c.l.b16 %v1211
    %v2586 = vunpack.c.h.b16 %v1211
    %v2587 = vunpack.c.l.b16 %v1212
    %v2588 = vunpack.c.h.b16 %v1212
    %v2589 = vunpack.c.l.b16 %v1213
    %v2590 = vunpack.c.h.b16 %v1213
    %v2591 = vunpack.c.l.b16 %v1214
    %v2592 = vunpack.c.h.b16 %v1214
    %v2593 = vunpack.c.l.b16 %v1215
    %v2594 = vunpack.c.h.b16 %v1215
    %v2595 = vunpack.c.l.b16 %v1216
    %v2596 = vunpack.c.h.b16 %v1216
    %v2597 = vunpack.c.l.b16 %v1217
    %v2598 = vunpack.c.h.b16 %v1217
    %v2599 = vunpack.c.l.b16 %v1218
    %v2600 = vunpack.c.h.b16 %v1218
    %v2601 = vunpack.c.l.b16 %v1219
    %v2602 = vunpack.c.h.b16 %v1219
    %v2603 = vunpack.c.l.b16 %v1220
    %v2604 = vunpack.c.h.b16 %v1220
    %v2605 = vunpack.c.l.b16 %v1221
    %v2606 = vunpack.c.h.b16 %v1221
    %v2607 = vunpack.c.l.b16 %v1222
    %v2608 = vunpack.c.h.b16 %v1222
    %v2609 = vunpack.c.l.b16 %v1223
    %v2610 = vunpack.c.h.b16 %v1223
    %v2611 = vunpack.c.l.b16 %v1224
    %v2612 = vunpack.c.h.b16 %v1224
    %v2613 = vunpack.c.l.b16 %v1225
    %v2614 = vunpack.c.h.b16 %v1225
    %v2615 = vunpack.c.l.b16 %v1226
    %v2616 = vunpack.c.h.b16 %v1226
    %v2617 = vunpack.c.l.b16 %v1227
    %v2618 = vunpack.c.h.b16 %v1227
    %v2619 = vunpack.c.l.b16 %v1228
    %v2620 = vunpack.c.h.b16 %v1228
    %v2621 = vunpack.c.l.b16 %v1229
    %v2622 = vunpack.c.h.b16 %v1229
    %v2623 = vunpack.c.l.b16 %v1230
    %v2624 = vunpack.c.h.b16 %v1230
    %v2625 = vunpack.c.l.b16 %v1231
    %v2626 = vunpack.c.h.b16 %v1231
    %v2627 = vunpack.c.l.b16 %v1232
    %v2628 = vunpack.c.h.b16 %v1232
    %v2629 = vunpack.c.l.b16 %v1233
    %v2630 = vunpack.c.h.b16 %v1233
    %v2631 = vunpack.c.l.b16 %v1234
    %v2632 = vunpack.c.h.b16 %v1234
    %v2633 = vunpack.c.l.b16 %v1235
    %v2634 = vunpack.c.h.b16 %v1235
    %v2635 = vunpack.c.l.b16 %v1236
    %v2636 = vunpack.c.h.b16 %v1236
    %v2637 = vunpack.c.l.b16 %v1237
    %v2638 = vunpack.c.h.b16 %v1237
    %v2639 = vunpack.c.l.b16 %v1238
    %v2640 = vunpack.c.h.b16 %v1238
    %v2641 = vunpack.c.l.b16 %v1239
    %v2642 = vunpack.c.h.b16 %v1239
    %v2643 = vunpack.c.l.b16 %v1240
    %v2644 = vunpack.c.h.b16 %v1240
    %v2645 = vunpack.c.l.b16 %v1241
    %v2646 = vunpack.c.h.b16 %v1241
    %v2647 = vunpack.c.l.b16 %v1242
    %v2648 = vunpack.c.h.b16 %v1242
    %v2649 = vunpack.c.l.b16 %v1243
    %v2650 = vunpack.c.h.b16 %v1243
    %v2651 = vunpack.c.l.b16 %v1244
    %v2652 = vunpack.c.h.b16 %v1244
    %v2653 = vunpack.c.l.b16 %v1245
    %v2654 = vunpack.c.h.b16 %v1245
    %v2655 = vunpack.c.l.b16 %v1246
    %v2656 = vunpack.c.h.b16 %v1246
    %v2657 = vunpack.c.l.b16 %v1247
    %v2658 = vunpack.c.h.b16 %v1247
    %v2659 = vunpack.c.l.b16 %v1248
    %v2660 = vunpack.c.h.b16 %v1248
    %v2661 = vunpack.c.l.b16 %v1249
    %v2662 = vunpack.c.h.b16 %v1249
    %v2663 = vunpack.c.l.b16 %v1250
    %v2664 = vunpack.c.h.b16 %v1250
    %v2665 = vunpack.c.l.b16 %v1251
    %v2666 = vunpack.c.h.b16 %v1251
    %v2667 = vunpack.c.l.b16 %v1252
    %v2668 = vunpack.c.h.b16 %v1252
    %v2669 = vunpack.c.l.b16 %v1253
    %v2670 = vunpack.c.h.b16 %v1253
    %v2671 = vunpack.c.l.b16 %v1254
    %v2672 = vunpack.c.h.b16 %v1254
    %v2673 = vunpack.c.l.b16 %v1255
    %v2674 = vunpack.c.h.b16 %v1255
    %v2675 = vunpack.c.l.b16 %v1256
    %v2676 = vunpack.c.h.b16 %v1256
    %v2677 = vunpack.c.l.b16 %v1257
    %v2678 = vunpack.c.h.b16 %v1257
    %v2679 = vunpack.c.l.b16 %v1258
    %v2680 = vunpack.c.h.b16 %v1258
    %v2681 = vunpack.c.l.b16 %v1259
    %v2682 = vunpack.c.h.b16 %v1259
    %v2683 = vunpack.c.l.b16 %v1260
    %v2684 = vunpack.c.h.b16 %v1260
    %v2685 = vunpack.c.l.b16 %v1261
    %v2686 = vunpack.c.h.b16 %v1261
    %v2687 = vunpack.c.l.b16 %v1262
    %v2688 = vunpack.c.h.b16 %v1262
    %v2689 = vunpack.c.l.b16 %v1263
    %v2690 = vunpack.c.h.b16 %v1263
    %v2691 = vunpack.c.l.b16 %v1264
    %v2692 = vunpack.c.h.b16 %v1264
    %v2693 = vunpack.c.l.b16 %v1265
    %v2694 = vunpack.c.h.b16 %v1265
    %v2695 = vunpack.c.l.b16 %v1266
    %v2696 = vunpack.c.h.b16 %v1266
    %v2697 = vunpack.c.l.b16 %v1267
    %v2698 = vunpack.c.h.b16 %v1267
    %v2699 = vunpack.c.l.b16 %v1268
    %v2700 = vunpack.c.h.b16 %v1268
    %v2701 = vunpack.c.l.b16 %v1269
    %v2702 = vunpack.c.h.b16 %v1269
    %v2703 = vunpack.c.l.b16 %v1270
    %v2704 = vunpack.c.h.b16 %v1270
    %v2705 = vunpack.c.l.b16 %v1271
    %v2706 = vunpack.c.h.b16 %v1271
    %v2707 = vunpack.c.l.b16 %v1272
    %v2708 = vunpack.c.h.b16 %v1272
    %v2709 = vunpack.c.l.b16 %v1273
    %v2710 = vunpack.c.h.b16 %v1273
    %v2711 = vunpack.c.l.b16 %v1274
    %v2712 = vunpack.c.h.b16 %v1274
    %v2713 = vunpack.c.l.b16 %v1275
    %v2714 = vunpack.c.h.b16 %v1275
    %v2715 = vunpack.c.l.b16 %v1276
    %v2716 = vunpack.c.h.b16 %v1276
    %v2717 = vunpack.c.l.b16 %v1277
    %v2718 = vunpack.c.h.b16 %v1277
    %v2719 = vunpack.c.l.b16 %v1278
    %v2720 = vunpack.c.h.b16 %v1278
    %v2721 = vunpack.c.l.b16 %v1279
    %v2722 = vunpack.c.h.b16 %v1279
    %v2723 = vunpack.c.l.b16 %v1280
    %v2724 = vunpack.c.h.b16 %v1280
    %v2725 = vunpack.c.l.b16 %v1281
    %v2726 = vunpack.c.h.b16 %v1281
    %v2727 = vunpack.c.l.b16 %v1282
    %v2728 = vunpack.c.h.b16 %v1282
    %v2729 = vunpack.c.l.b16 %v1283
    %v2730 = vunpack.c.h.b16 %v1283
    %v2731 = vunpack.c.l.b16 %v1284
    %v2732 = vunpack.c.h.b16 %v1284
    %v2733 = vunpack.c.l.b16 %v1285
    %v2734 = vunpack.c.h.b16 %v1285
    %v2735 = vunpack.c.l.b16 %v1286
    %v2736 = vunpack.c.h.b16 %v1286
    %v2737 = vunpack.c.l.b16 %v1287
    %v2738 = vunpack.c.h.b16 %v1287
    %v2739 = vunpack.c.l.b16 %v1288
    %v2740 = vunpack.c.h.b16 %v1288
    %v2741 = vunpack.c.l.b16 %v1289
    %v2742 = vunpack.c.h.b16 %v1289
    %v2743 = vunpack.c.l.b16 %v1290
    %v2744 = vunpack.c.h.b16 %v1290
    %v2745 = vunpack.c.l.b16 %v1291
    %v2746 = vunpack.c.h.b16 %v1291
    %v2747 = vunpack.c.l.b16 %v1292
    %v2748 = vunpack.c.h.b16 %v1292
    %v2749 = vunpack.c.l.b16 %v1293
    %v2750 = vunpack.c.h.b16 %v1293
    %v2751 = vunpack.c.l.b16 %v1294
    %v2752 = vunpack.c.h.b16 %v1294
    %v2753 = vunpack.c.l.b16 %v1295
    %v2754 = vunpack.c.h.b16 %v1295
    %v2755 = vunpack.c.l.b16 %v1296
    %v2756 = vunpack.c.h.b16 %v1296
    %v2757 = vunpack.c.l.b16 %v1297
    %v2758 = vunpack.c.h.b16 %v1297
    %v2759 = vunpack.c.l.b16 %v1298
    %v2760 = vunpack.c.h.b16 %v1298
    %v2761 = vunpack.c.l.b16 %v1299
    %v2762 = vunpack.c.h.b16 %v1299
    %v2763 = vunpack.c.l.b16 %v1300
    %v2764 = vunpack.c.h.b16 %v1300
    %v2765 = vunpack.c.l.b16 %v1301
    %v2766 = vunpack.c.h.b16 %v1301
    %v2767 = vunpack.c.l.b16 %v1302
    %v2768 = vunpack.c.h.b16 %v1302
    %v2769 = vunpack.c.l.b16 %v1303
    %v2770 = vunpack.c.h.b16 %v1303
    %v2771 = vunpack.c.l.b16 %v1304
    %v2772 = vunpack.c.h.b16 %v1304
    %v2773 = vunpack.c.l.b16 %v1305
    %v2774 = vunpack.c.h.b16 %v1305
    %v2775 = vunpack.c.l.b16 %v1306
    %v2776 = vunpack.c.h.b16 %v1306
    %v2777 = vunpack.c.l.b16 %v1307
    %v2778 = vunpack.c.h.b16 %v1307
    %v2779 = vunpack.c.l.b16 %v1308
    %v2780 = vunpack.c.h.b16 %v1308
    %v2781 = vunpack.c.l.b16 %v1309
    %v2782 = vunpack.c.h.b16 %v1309
    %v2783 = vunpack.c.l.b16 %v1310
    %v2784 = vunpack.c.h.b16 %v1310
    %v2785 = vunpack.c.l.b16 %v1311
    %v2786 = vunpack.c.h.b16 %v1311
    %v2787 = vunpack.c.l.b16 %v1312
    %v2788 = vunpack.c.h.b16 %v1312
    %v2789 = vunpack.c.l.b16 %v1313
    %v2790 = vunpack.c.h.b16 %v1313
    %v2791 = vunpack.c.l.b16 %v1314
    %v2792 = vunpack.c.h.b16 %v1314
    %v2793 = vunpack.c.l.b16 %v1315
    %v2794 = vunpack.c.h.b16 %v1315
    %v2795 = vunpack.c.l.b16 %v1316
    %v2796 = vunpack.c.h.b16 %v1316
    %v2797 = vunpack.c.l.b16 %v1317
    %v2798 = vunpack.c.h.b16 %v1317
    %v2799 = vunpack.c.l.b16 %v1318
    %v2800 = vunpack.c.h.b16 %v1318
    %v2801 = vunpack.c.l.b16 %v1319
    %v2802 = vunpack.c.h.b16 %v1319
    %v2803 = vunpack.c.l.b16 %v1320
    %v2804 = vunpack.c.h.b16 %v1320
    %v2805 = vunpack.c.l.b16 %v1321
    %v2806 = vunpack.c.h.b16 %v1321
    %v2807 = vunpack.c.l.b16 %v1322
    %v2808 = vunpack.c.h.b16 %v1322
    %v2809 = vunpack.c.l.b16 %v1323
    %v2810 = vunpack.c.h.b16 %v1323
    %v2811 = vunpack.c.l.b16 %v1324
    %v2812 = vunpack.c.h.b16 %v1324
    %v2813 = vunpack.c.l.b16 %v1325
    %v2814 = vunpack.c.h.b16 %v1325
    %v2815 = vunpack.c.l.b16 %v1326
    %v2816 = vunpack.c.h.b16 %v1326
    %v2817 = vunpack.c.l.b16 %v1327
    %v2818 = vunpack.c.h.b16 %v1327
    %v2819 = vunpack.c.l.b16 %v1328
    %v2820 = vunpack.c.h.b16 %v1328
    %v2821 = vunpack.c.l.b16 %v1329
    %v2822 = vunpack.c.h.b16 %v1329
    %v2823 = vunpack.c.l.b16 %v1330
    %v2824 = vunpack.c.h.b16 %v1330
    %v2825 = vunpack.c.l.b16 %v1331
    %v2826 = vunpack.c.h.b16 %v1331
    %v2827 = vunpack.c.l.b16 %v1332
    %v2828 = vunpack.c.h.b16 %v1332
    %v2829 = vunpack.c.l.b16 %v1333
    %v2830 = vunpack.c.h.b16 %v1333
    %v2831 = vunpack.c.l.b16 %v1334
    %v2832 = vunpack.c.h.b16 %v1334
    %v2833 = vunpack.c.l.b16 %v1335
    %v2834 = vunpack.c.h.b16 %v1335
    %v2835 = vunpack.c.l.b16 %v1336
    %v2836 = vunpack.c.h.b16 %v1336
    %v2837 = vunpack.c.l.b16 %v1337
    %v2838 = vunpack.c.h.b16 %v1337
    %v2839 = vunpack.c.l.b16 %v1338
    %v2840 = vunpack.c.h.b16 %v1338
    %v2841 = vunpack.c.l.b16 %v1339
    %v2842 = vunpack.c.h.b16 %v1339
    %v2843 = vunpack.c.l.b16 %v1340
    %v2844 = vunpack.c.h.b16 %v1340
    %v2845 = vunpack.c.l.b16 %v1341
    %v2846 = vunpack.c.h.b16 %v1341
    %v2847 = vunpack.c.l.b16 %v1342
    %v2848 = vunpack.c.h.b16 %v1342
    %v2849 = vunpack.c.l.b16 %v1343
    %v2850 = vunpack.c.h.b16 %v1343
    %v2851 = vunpack.c.l.b16 %v1344
    %v2852 = vunpack.c.h.b16 %v1344
    %v2853 = vunpack.c.l.b16 %v1345
    %v2854 = vunpack.c.h.b16 %v1345
    %v2855 = vunpack.c.l.b16 %v1346
    %v2856 = vunpack.c.h.b16 %v1346
    %v2857 = vunpack.c.l.b16 %v1347
    %v2858 = vunpack.c.h.b16 %v1347
    %v2859 = vunpack.c.l.b16 %v1348
    %v2860 = vunpack.c.h.b16 %v1348
    %v2861 = vunpack.c.l.b16 %v1349
    %v2862 = vunpack.c.h.b16 %v1349
    %v2863 = vunpack.c.l.b16 %v1350
    %v2864 = vunpack.c.h.b16 %v1350
    %v2865 = vunpack.c.l.b16 %v1351
    %v2866 = vunpack.c.h.b16 %v1351
    %v2867 = vunpack.c.l.b16 %v1352
    %v2868 = vunpack.c.h.b16 %v1352
    %v2869 = vunpack.c.l.b16 %v1353
    %v2870 = vunpack.c.h.b16 %v1353
    %v2871 = vunpack.c.l.b16 %v1354
    %v2872 = vunpack.c.h.b16 %v1354
    %v2873 = vunpack.c.l.b16 %v1355
    %v2874 = vunpack.c.h.b16 %v1355
    %v2875 = vunpack.c.l.b16 %v1356
    %v2876 = vunpack.c.h.b16 %v1356
    %v2877 = vunpack.c.l.b16 %v1357
    %v2878 = vunpack.c.h.b16 %v1357
    %v2879 = vunpack.c.l.b16 %v1358
    %v2880 = vunpack.c.h.b16 %v1358
    %v2881 = vunpack.c.l.b16 %v1359
    %v2882 = vunpack.c.h.b16 %v1359
    %v2883 = vunpack.c.l.b16 %v1360
    %v2884 = vunpack.c.h.b16 %v1360
    %v2885 = vunpack.c.l.b16 %v1361
    %v2886 = vunpack.c.h.b16 %v1361
    %v2887 = vunpack.c.l.b16 %v1362
    %v2888 = vunpack.c.h.b16 %v1362
    %v2889 = vunpack.c.l.b16 %v1363
    %v2890 = vunpack.c.h.b16 %v1363
    %v2891 = vunpack.c.l.b16 %v1364
    %v2892 = vunpack.c.h.b16 %v1364
    %v2893 = vunpack.c.l.b16 %v1365
    %v2894 = vunpack.c.h.b16 %v1365
    %v2895 = vunpack.c.l.b16 %v1366
    %v2896 = vunpack.c.h.b16 %v1366
    %v2897 = vunpack.c.l.b16 %v1367
    %v2898 = vunpack.c.h.b16 %v1367
    %v2899 = vunpack.c.l.b16 %v1368
    %v2900 = vunpack.c.h.b16 %v1368
    %v2901 = vunpack.c.l.b16 %v1369
    %v2902 = vunpack.c.h.b16 %v1369
    %v2903 = vunpack.c.l.b16 %v1370
    %v2904 = vunpack.c.h.b16 %v1370
    %v2905 = vunpack.c.l.b16 %v1371
    %v2906 = vunpack.c.h.b16 %v1371
    %v2907 = vunpack.c.l.b16 %v1372
    %v2908 = vunpack.c.h.b16 %v1372
    %v2909 = vunpack.c.l.b16 %v1373
    %v2910 = vunpack.c.h.b16 %v1373
    %v2911 = vunpack.c.l.b16 %v1374
    %v2912 = vunpack.c.h.b16 %v1374
    %v2913 = vunpack.c.l.b16 %v1375
    %v2914 = vunpack.c.h.b16 %v1375
    %v2915 = vunpack.c.l.b16 %v1376
    %v2916 = vunpack.c.h.b16 %v1376
    %v2917 = vunpack.c.l.b16 %v1377
    %v2918 = vunpack.c.h.b16 %v1377
    %v2919 = vunpack.c.l.b16 %v1378
    %v2920 = vunpack.c.h.b16 %v1378
    %v2921 = vunpack.c.l.b16 %v1379
    %v2922 = vunpack.c.h.b16 %v1379
    %v2923 = vunpack.c.l.b16 %v1380
    %v2924 = vunpack.c.h.b16 %v1380
    %v2925 = vunpack.c.l.b16 %v1381
    %v2926 = vunpack.c.h.b16 %v1381
    %v2927 = vunpack.c.l.b16 %v1382
    %v2928 = vunpack.c.h.b16 %v1382
    %v2929 = vunpack.c.l.b16 %v1383
    %v2930 = vunpack.c.h.b16 %v1383
    %v2931 = vunpack.c.l.b16 %v1384
    %v2932 = vunpack.c.h.b16 %v1384
    %v2933 = vpack.c.b16 %v1911, %v1909
    %v2934 = vpack.c.b16 %v1912, %v1910
    %v2935 = vpack.c.b16 %v1915, %v1913
    %v2936 = vpack.c.b16 %v1916, %v1914
    %v2937 = vpack.c.b16 %v1919, %v1917
    %v2938 = vpack.c.b16 %v1920, %v1918
    %v2939 = vpack.c.b16 %v1923, %v1921
    %v2940 = vpack.c.b16 %v1924, %v1922
    %v2941 = vpack.c.b16 %v1927, %v1925
    %v2942 = vpack.c.b16 %v1928, %v1926
    %v2943 = vpack.c.b16 %v1931, %v1929
    %v2944 = vpack.c.b16 %v1932, %v1930
    %v2945 = vpack.c.b16 %v1935, %v1933
    %v2946 = vpack.c.b16 %v1936, %v1934
    %v2947 = vpack.c.b16 %v1939, %v1937
    %v2948 = vpack.c.b16 %v1940, %v1938
    %v2949 = vpack.c.b16 %v1943, %v1941
    %v2950 = vpack.c.b16 %v1944, %v1942
    %v2951 = vpack.c.b16 %v1947, %v1945
    %v2952 = vpack.c.b16 %v1948, %v1946
    %v2953 = vpack.c.b16 %v1951, %v1949
    %v2954 = vpack.c.b16 %v1952, %v1950
    %v2955 = vpack.c.b16 %v1955, %v1953
    %v2956 = vpack.c.b16 %v1956, %v1954
    %v2957 = vpack.c.b16 %v1959, %v1957
    %v2958 = vpack.c.b16 %v1960, %v1958
    %v2959 = vpack.c.b16 %v1963, %v1961
    %v2960 = vpack.c.b16 %v1964, %v1962
    %v2961 = vpack.c.b16 %v1967, %v1965
    %v2962 = vpack.c.b16 %v1968, %v1966
    %v2963 = vpack.c.b16 %v1971, %v1969
    %v2964 = vpack.c.b16 %v1972, %v1970
    %v2965 = vpack.c.b16 %v1975, %v1973
    %v2966 = vpack.c.b16 %v1976, %v1974
    %v2967 = vpack.c.b16 %v1979, %v1977
    %v2968 = vpack.c.b16 %v1980, %v1978
    %v2969 = vpack.c.b16 %v1983, %v1981
    %v2970 = vpack.c.b16 %v1984, %v1982
    %v2971 = vpack.c.b16 %v1987, %v1985
    %v2972 = vpack.c.b16 %v1988, %v1986
    %v2973 = vpack.c.b16 %v1991, %v1989
    %v2974 = vpack.c.b16 %v1992, %v1990
    %v2975 = vpack.c.b16 %v1995, %v1993
    %v2976 = vpack.c.b16 %v1996, %v1994
    %v2977 = vpack.c.b16 %v1999, %v1997
    %v2978 = vpack.c.b16 %v2000, %v1998
    %v2979 = vpack.c.b16 %v2003, %v2001
    %v2980 = vpack.c.b16 %v2004, %v2002
    %v2981 = vpack.c.b16 %v2007, %v2005
    %v2982 = vpack.c.b16 %v2008, %v2006
    %v2983 = vpack.c.b16 %v2011, %v2009
    %v2984 = vpack.c.b16 %v2012, %v2010
    %v2985 = vpack.c.b16 %v2015, %v2013
    %v2986 = vpack.c.b16 %v2016, %v2014
    %v2987 = vpack.c.b16 %v2019, %v2017
    %v2988 = vpack.c.b16 %v2020, %v2018
    %v2989 = vpack.c.b16 %v2023, %v2021
    %v2990 = vpack.c.b16 %v2024, %v2022
    %v2991 = vpack.c.b16 %v2027, %v2025
    %v2992 = vpack.c.b16 %v2028, %v2026
    %v2993 = vpack.c.b16 %v2031, %v2029
    %v2994 = vpack.c.b16 %v2032, %v2030
    %v2995 = vpack.c.b16 %v2035, %v2033
    %v2996 = vpack.c.b16 %v2036, %v2034
    %v2997 = vpack.c.b16 %v2039, %v2037
    %v2998 = vpack.c.b16 %v2040, %v2038
    %v2999 = vpack.c.b16 %v2043, %v2041
    %v3000 = vpack.c.b16 %v2044, %v2042
    %v3001 = vpack.c.b16 %v2047, %v2045
    %v3002 = vpack.c.b16 %v2048, %v2046
    %v3003 = vpack.c.b16 %v2051, %v2049
    %v3004 = vpack.c.b16 %v2052, %v2050
    %v3005 = vpack.c.b16 %v2055, %v2053
    %v3006 = vpack.c.b16 %v2056, %v2054
    %v3007 = vpack.c.b16 %v2059, %v2057
    %v3008 = vpack.c.b16 %v2060, %v2058
    %v3009 = vpack.c.b16 %v2063, %v2061
    %v3010 = vpack.c.b16 %v2064, %v2062
    %v3011 = vpack.c.b16 %v2067, %v2065
    %v3012 = vpack.c.b16 %v2068, %v2066
    %v3013 = vpack.c.b16 %v2071, %v2069
    %v3014 = vpack.c.b16 %v2072, %v2070
    %v3015 = vpack.c.b16 %v2075, %v2073
    %v3016 = vpack.c.b16 %v2076, %v2074
    %v3017 = vpack.c.b16 %v2079, %v2077
    %v3018 = vpack.c.b16 %v2080, %v2078
    %v3019 = vpack.c.b16 %v2083, %v2081
    %v3020 = vpack.c.b16 %v2084, %v2082
    %v3021 = vpack.c.b16 %v2087, %v2085
    %v3022 = vpack.c.b16 %v2088, %v2086
    %v3023 = vpack.c.b16 %v2091, %v2089
    %v3024 = vpack.c.b16 %v2092, %v2090
    %v3025 = vpack.c.b16 %v2095, %v2093
    %v3026 = vpack.c.b16 %v2096, %v2094
    %v3027 = vpack.c.b16 %v2099, %v2097
    %v3028 = vpack.c.b16 %v2100, %v2098
    %v3029 = vpack.c.b16 %v2103, %v2101
    %v3030 = vpack.c.b16 %v2104, %v2102
    %v3031 = vpack.c.b16 %v2107, %v2105
    %v3032 = vpack.c.b16 %v2108, %v2106
    %v3033 = vpack.c.b16 %v2111, %v2109
    %v3034 = vpack.c.b16 %v2112, %v2110
    %v3035 = vpack.c.b16 %v2115, %v2113
    %v3036 = vpack.c.b16 %v2116, %v2114
    %v3037 = vpack.c.b16 %v2119, %v2117
    %v3038 = vpack.c.b16 %v2120, %v2118
    %v3039 = vpack.c.b16 %v2123, %v2121
    %v3040 = vpack.c.b16 %v2124, %v2122
    %v3041 = vpack.c.b16 %v2127, %v2125
    %v3042 = vpack.c.b16 %v2128, %v2126
    %v3043 = vpack.c.b16 %v2131, %v2129
    %v3044 = vpack.c.b16 %v2132, %v2130
    %v3045 = vpack.c.b16 %v2135, %v2133
    %v3046 = vpack.c.b16 %v2136, %v2134
    %v3047 = vpack.c.b16 %v2139, %v2137
    %v3048 = vpack.c.b16 %v2140, %v2138
    %v3049 = vpack.c.b16 %v2143, %v2141
    %v3050 = vpack.c.b16 %v2144, %v2142
    %v3051 = vpack.c.b16 %v2147, %v2145
    %v3052 = vpack.c.b16 %v2148, %v2146
    %v3053 = vpack.c.b16 %v2151, %v2149
    %v3054 = vpack.c.b16 %v2152, %v2150
    %v3055 = vpack.c.b16 %v2155, %v2153
    %v3056 = vpack.c.b16 %v2156, %v2154
    %v3057 = vpack.c.b16 %v2159, %v2157
    %v3058 = vpack.c.b16 %v2160, %v2158
    %v3059 = vpack.c.b16 %v2163, %v2161
    %v3060 = vpack.c.b16 %v2164, %v2162
    %v3061 = vpack.c.b16 %v2167, %v2165
    %v3062 = vpack.c.b16 %v2168, %v2166
    %v3063 = vpack.c.b16 %v2171, %v2169
    %v3064 = vpack.c.b16 %v2172, %v2170
    %v3065 = vpack.c.b16 %v2175, %v2173
    %v3066 = vpack.c.b16 %v2176, %v2174
    %v3067 = vpack.c.b16 %v2179, %v2177
    %v3068 = vpack.c.b16 %v2180, %v2178
    %v3069 = vpack.c.b16 %v2183, %v2181
    %v3070 = vpack.c.b16 %v2184, %v2182
    %v3071 = vpack.c.b16 %v2187, %v2185
    %v3072 = vpack.c.b16 %v2188, %v2186
    %v3073 = vpack.c.b16 %v2191, %v2189
    %v3074 = vpack.c.b16 %v2192, %v2190
    %v3075 = vpack.c.b16 %v2195, %v2193
    %v3076 = vpack.c.b16 %v2196, %v2194
    %v3077 = vpack.c.b16 %v2199, %v2197
    %v3078 = vpack.c.b16 %v2200, %v2198
    %v3079 = vpack.c.b16 %v2203, %v2201
    %v3080 = vpack.c.b16 %v2204, %v2202
    %v3081 = vpack.c.b16 %v2207, %v2205
    %v3082 = vpack.c.b16 %v2208, %v2206
    %v3083 = vpack.c.b16 %v2211, %v2209
    %v3084 = vpack.c.b16 %v2212, %v2210
    %v3085 = vpack.c.b16 %v2215, %v2213
    %v3086 = vpack.c.b16 %v2216, %v2214
    %v3087 = vpack.c.b16 %v2219, %v2217
    %v3088 = vpack.c.b16 %v2220, %v2218
    %v3089 = vpack.c.b16 %v2223, %v2221
    %v3090 = vpack.c.b16 %v2224, %v2222
    %v3091 = vpack.c.b16 %v2227, %v2225
    %v3092 = vpack.c.b16 %v2228, %v2226
    %v3093 = vpack.c.b16 %v2231, %v2229
    %v3094 = vpack.c.b16 %v2232, %v2230
    %v3095 = vpack.c.b16 %v2235, %v2233
    %v3096 = vpack.c.b16 %v2236, %v2234
    %v3097 = vpack.c.b16 %v2239, %v2237
    %v3098 = vpack.c.b16 %v2240, %v2238
    %v3099 = vpack.c.b16 %v2243, %v2241
    %v3100 = vpack.c.b16 %v2244, %v2242
    %v3101 = vpack.c.b16 %v2247, %v2245
    %v3102 = vpack.c.b16 %v2248, %v2246
    %v3103 = vpack.c.b16 %v2251, %v2249
    %v3104 = vpack.c.b16 %v2252, %v2250
    %v3105 = vpack.c.b16 %v2255, %v2253
    %v3106 = vpack.c.b16 %v2256, %v2254
    %v3107 = vpack.c.b16 %v2259, %v2257
    %v3108 = vpack.c.b16 %v2260, %v2258
    %v3109 = vpack.c.b16 %v2263, %v2261
    %v3110 = vpack.c.b16 %v2264, %v2262
    %v3111 = vpack.c.b16 %v2267, %v2265
    %v3112 = vpack.c.b16 %v2268, %v2266
    %v3113 = vpack.c.b16 %v2271, %v2269
    %v3114 = vpack.c.b16 %v2272, %v2270
    %v3115 = vpack.c.b16 %v2275, %v2273
    %v3116 = vpack.c.b16 %v2276, %v2274
    %v3117 = vpack.c.b16 %v2279, %v2277
    %v3118 = vpack.c.b16 %v2280, %v2278
    %v3119 = vpack.c.b16 %v2283, %v2281
    %v3120 = vpack.c.b16 %v2284, %v2282
    %v3121 = vpack.c.b16 %v2287, %v2285
    %v3122 = vpack.c.b16 %v2288, %v2286
    %v3123 = vpack.c.b16 %v2291, %v2289
    %v3124 = vpack.c.b16 %v2292, %v2290
    %v3125 = vpack.c.b16 %v2295, %v2293
    %v3126 = vpack.c.b16 %v2296, %v2294
    %v3127 = vpack.c.b16 %v2299, %v2297
    %v3128 = vpack.c.b16 %v2300, %v2298
    %v3129 = vpack.c.b16 %v2303, %v2301
    %v3130 = vpack.c.b16 %v2304, %v2302
    %v3131 = vpack.c.b16 %v2307, %v2305
    %v3132 = vpack.c.b16 %v2308, %v2306
    %v3133 = vpack.c.b16 %v2311, %v2309
    %v3134 = vpack.c.b16 %v2312, %v2310
    %v3135 = vpack.c.b16 %v2315, %v2313
    %v3136 = vpack.c.b16 %v2316, %v2314
    %v3137 = vpack.c.b16 %v2319, %v2317
    %v3138 = vpack.c.b16 %v2320, %v2318
    %v3139 = vpack.c.b16 %v2323, %v2321
    %v3140 = vpack.c.b16 %v2324, %v2322
    %v3141 = vpack.c.b16 %v2327, %v2325
    %v3142 = vpack.c.b16 %v2328, %v2326
    %v3143 = vpack.c.b16 %v2331, %v2329
    %v3144 = vpack.c.b16 %v2332, %v2330
    %v3145 = vpack.c.b16 %v2335, %v2333
    %v3146 = vpack.c.b16 %v2336, %v2334
    %v3147 = vpack.c.b16 %v2339, %v2337
    %v3148 = vpack.c.b16 %v2340, %v2338
    %v3149 = vpack.c.b16 %v2343, %v2341
    %v3150 = vpack.c.b16 %v2344, %v2342
    %v3151 = vpack.c.b16 %v2347, %v2345
    %v3152 = vpack.c.b16 %v2348, %v2346
    %v3153 = vpack.c.b16 %v2351, %v2349
    %v3154 = vpack.c.b16 %v2352, %v2350
    %v3155 = vpack.c.b16 %v2355, %v2353
    %v3156 = vpack.c.b16 %v2356, %v2354
    %v3157 = vpack.c.b16 %v2359, %v2357
    %v3158 = vpack.c.b16 %v2360, %v2358
    %v3159 = vpack.c.b16 %v2363, %v2361
    %v3160 = vpack.c.b16 %v2364, %v2362
    %v3161 = vpack.c.b16 %v2367, %v2365
    %v3162 = vpack.c.b16 %v2368, %v2366
    %v3163 = vpack.c.b16 %v2371, %v2369
    %v3164 = vpack.c.b16 %v2372, %v2370
    %v3165 = vpack.c.b16 %v2375, %v2373
    %v3166 = vpack.c.b16 %v2376, %v2374
    %v3167 = vpack.c.b16 %v2379, %v2377
    %v3168 = vpack.c.b16 %v2380, %v2378
    %v3169 = vpack.c.b16 %v2383, %v2381
    %v3170 = vpack.c.b16 %v2384, %v2382
    %v3171 = vpack.c.b16 %v2387, %v2385
    %v3172 = vpack.c.b16 %v2388, %v2386
    %v3173 = vpack.c.b16 %v2391, %v2389
    %v3174 = vpack.c.b16 %v2392, %v2390
    %v3175 = vpack.c.b16 %v2395, %v2393
    %v3176 = vpack.c.b16 %v2396, %v2394
    %v3177 = vpack.c.b16 %v2399, %v2397
    %v3178 = vpack.c.b16 %v2400, %v2398
    %v3179 = vpack.c.b16 %v2403, %v2401
    %v3180 = vpack.c.b16 %v2404, %v2402
    %v3181 = vpack.c.b16 %v2407, %v2405
    %v3182 = vpack.c.b16 %v2408, %v2406
    %v3183 = vpack.c.b16 %v2411, %v2409
    %v3184 = vpack.c.b16 %v2412, %v2410
    %v3185 = vpack.c.b16 %v2415, %v2413
    %v3186 = vpack.c.b16 %v2416, %v2414
    %v3187 = vpack.c.b16 %v2419, %v2417
    %v3188 = vpack.c.b16 %v2420, %v2418
    %v3189 = vpack.c.b16 %v2423, %v2421
    %v3190 = vpack.c.b16 %v2424, %v2422
    %v3191 = vpack.c.b16 %v2427, %v2425
    %v3192 = vpack.c.b16 %v2428, %v2426
    %v3193 = vpack.c.b16 %v2431, %v2429
    %v3194 = vpack.c.b16 %v2432, %v2430
    %v3195 = vpack.c.b16 %v2435, %v2433
    %v3196 = vpack.c.b16 %v2436, %v2434
    %v3197 = vpack.c.b16 %v2439, %v2437
    %v3198 = vpack.c.b16 %v2440, %v2438
    %v3199 = vpack.c.b16 %v2443, %v2441
    %v3200 = vpack.c.b16 %v2444, %v2442
    %v3201 = vpack.c.b16 %v2447, %v2445
    %v3202 = vpack.c.b16 %v2448, %v2446
    %v3203 = vpack.c.b16 %v2451, %v2449
    %v3204 = vpack.c.b16 %v2452, %v2450
    %v3205 = vpack.c.b16 %v2455, %v2453
    %v3206 = vpack.c.b16 %v2456, %v2454
    %v3207 = vpack.c.b16 %v2459, %v2457
    %v3208 = vpack.c.b16 %v2460, %v2458
    %v3209 = vpack.c.b16 %v2463, %v2461
    %v3210 = vpack.c.b16 %v2464, %v2462
    %v3211 = vpack.c.b16 %v2467, %v2465
    %v3212 = vpack.c.b16 %v2468, %v2466
    %v3213 = vpack.c.b16 %v2471, %v2469
    %v3214 = vpack.c.b16 %v2472, %v2470
    %v3215 = vpack.c.b16 %v2475, %v2473
    %v3216 = vpack.c.b16 %v2476, %v2474
    %v3217 = vpack.c.b16 %v2479, %v2477
    %v3218 = vpack.c.b16 %v2480, %v2478
    %v3219 = vpack.c.b16 %v2483, %v2481
    %v3220 = vpack.c.b16 %v2484, %v2482
    %v3221 = vpack.c.b16 %v2487, %v2485
    %v3222 = vpack.c.b16 %v2488, %v2486
    %v3223 = vpack.c.b16 %v2491, %v2489
    %v3224 = vpack.c.b16 %v2492, %v2490
    %v3225 = vpack.c.b16 %v2495, %v2493
    %v3226 = vpack.c.b16 %v2496, %v2494
    %v3227 = vpack.c.b16 %v2499, %v2497
    %v3228 = vpack.c.b16 %v2500, %v2498
    %v3229 = vpack.c.b16 %v2503, %v2501
    %v3230 = vpack.c.b16 %v2504, %v2502
    %v3231 = vpack.c.b16 %v2507, %v2505
    %v3232 = vpack.c.b16 %v2508, %v2506
    %v3233 = vpack.c.b16 %v2511, %v2509
    %v3234 = vpack.c.b16 %v2512, %v2510
    %v3235 = vpack.c.b16 %v2515, %v2513
    %v3236 = vpack.c.b16 %v2516, %v2514
    %v3237 = vpack.c.b16 %v2519, %v2517
    %v3238 = vpack.c.b16 %v2520, %v2518
    %v3239 = vpack.c.b16 %v2523, %v2521
    %v3240 = vpack.c.b16 %v2524, %v2522
    %v3241 = vpack.c.b16 %v2527, %v2525
    %v3242 = vpack.c.b16 %v2528, %v2526
    %v3243 = vpack.c.b16 %v2531, %v2529
    %v3244 = vpack.c.b16 %v2532, %v2530
    %v3245 = vpack.c.b16 %v2535, %v2533
    %v3246 = vpack.c.b16 %v2536, %v2534
    %v3247 = vpack.c.b16 %v2539, %v2537
    %v3248 = vpack.c.b16 %v2540, %v2538
    %v3249 = vpack.c.b16 %v2543, %v2541
    %v3250 = vpack.c.b16 %v2544, %v2542
    %v3251 = vpack.c.b16 %v2547, %v2545
    %v3252 = vpack.c.b16 %v2548, %v2546
    %v3253 = vpack.c.b16 %v2551, %v2549
    %v3254 = vpack.c.b16 %v2552, %v2550
    %v3255 = vpack.c.b16 %v2555, %v2553
    %v3256 = vpack.c.b16 %v2556, %v2554
    %v3257 = vpack.c.b16 %v2559, %v2557
    %v3258 = vpack.c.b16 %v2560, %v2558
    %v3259 = vpack.c.b16 %v2563, %v2561
    %v3260 = vpack.c.b16 %v2564, %v2562
    %v3261 = vpack.c.b16 %v2567, %v2565
    %v3262 = vpack.c.b16 %v2568, %v2566
    %v3263 = vpack.c.b16 %v2571, %v2569
    %v3264 = vpack.c.b16 %v2572, %v2570
    %v3265 = vpack.c.b16 %v2575, %v2573
    %v3266 = vpack.c.b16 %v2576, %v2574
    %v3267 = vpack.c.b16 %v2579, %v2577
    %v3268 = vpack.c.b16 %v2580, %v2578
    %v3269 = vpack.c.b16 %v2583, %v2581
    %v3270 = vpack.c.b16 %v2584, %v2582
    %v3271 = vpack.c.b16 %v2587, %v2585
    %v3272 = vpack.c.b16 %v2588, %v2586
    %v3273 = vpack.c.b16 %v2591, %v2589
    %v3274 = vpack.c.b16 %v2592, %v2590
    %v3275 = vpack.c.b16 %v2595, %v2593
    %v3276 = vpack.c.b16 %v2596, %v2594
    %v3277 = vpack.c.b16 %v2599, %v2597
    %v3278 = vpack.c.b16 %v2600, %v2598
    %v3279 = vpack.c.b16 %v2603, %v2601
    %v3280 = vpack.c.b16 %v2604, %v2602
    %v3281 = vpack.c.b16 %v2607, %v2605
    %v3282 = vpack.c.b16 %v2608, %v2606
    %v3283 = vpack.c.b16 %v2611, %v2609
    %v3284 = vpack.c.b16 %v2612, %v2610
    %v3285 = vpack.c.b16 %v2615, %v2613
    %v3286 = vpack.c.b16 %v2616, %v2614
    %v3287 = vpack.c.b16 %v2619, %v2617
    %v3288 = vpack.c.b16 %v2620, %v2618
    %v3289 = vpack.c.b16 %v2623, %v2621
    %v3290 = vpack.c.b16 %v2624, %v2622
    %v3291 = vpack.c.b16 %v2627, %v2625
    %v3292 = vpack.c.b16 %v2628, %v2626
    %v3293 = vpack.c.b16 %v2631, %v2629
    %v3294 = vpack.c.b16 %v2632, %v2630
    %v3295 = vpack.c.b16 %v2635, %v2633
    %v3296 = vpack.c.b16 %v2636, %v2634
    %v3297 = vpack.c.b16 %v2639, %v2637
    %v3298 = vpack.c.b16 %v2640, %v2638
    %v3299 = vpack.c.b16 %v2643, %v2641
    %v3300 = vpack.c.b16 %v2644, %v2642
    %v3301 = vpack.c.b16 %v2647, %v2645
    %v3302 = vpack.c.b16 %v2648, %v2646
    %v3303 = vpack.c.b16 %v2651, %v2649
    %v3304 = vpack.c.b16 %v2652, %v2650
    %v3305 = vpack.c.b16 %v2655, %v2653
    %v3306 = vpack.c.b16 %v2656, %v2654
    %v3307 = vpack.c.b16 %v2659, %v2657
    %v3308 = vpack.c.b16 %v2660, %v2658
    %v3309 = vpack.c.b16 %v2663, %v2661
    %v3310 = vpack.c.b16 %v2664, %v2662
    %v3311 = vpack.c.b16 %v2667, %v2665
    %v3312 = vpack.c.b16 %v2668, %v2666
    %v3313 = vpack.c.b16 %v2671, %v2669
    %v3314 = vpack.c.b16 %v2672, %v2670
    %v3315 = vpack.c.b16 %v2675, %v2673
    %v3316 = vpack.c.b16 %v2676, %v2674
    %v3317 = vpack.c.b16 %v2679, %v2677
    %v3318 = vpack.c.b16 %v2680, %v2678
    %v3319 = vpack.c.b16 %v2683, %v2681
    %v3320 = vpack.c.b16 %v2684, %v2682
    %v3321 = vpack.c.b16 %v2687, %v2685
    %v3322 = vpack.c.b16 %v2688, %v2686
    %v3323 = vpack.c.b16 %v2691, %v2689
    %v3324 = vpack.c.b16 %v2692, %v2690
    %v3325 = vpack.c.b16 %v2695, %v2693
    %v3326 = vpack.c.b16 %v2696, %v2694
    %v3327 = vpack.c.b16 %v2699, %v2697
    %v3328 = vpack.c.b16 %v2700, %v2698
    %v3329 = vpack.c.b16 %v2703, %v2701
    %v3330 = vpack.c.b16 %v2704, %v2702
    %v3331 = vpack.c.b16 %v2707, %v2705
    %v3332 = vpack.c.b16 %v2708, %v2706
    %v3333 = vpack.c.b16 %v2711, %v2709
    %v3334 = vpack.c.b16 %v2712, %v2710
    %v3335 = vpack.c.b16 %v2715, %v2713
    %v3336 = vpack.c.b16 %v2716, %v2714
    %v3337 = vpack.c.b16 %v2719, %v2717
    %v3338 = vpack.c.b16 %v2720, %v2718
    %v3339 = vpack.c.b16 %v2723, %v2721
    %v3340 = vpack.c.b16 %v2724, %v2722
    %v3341 = vpack.c.b16 %v2727, %v2725
    %v3342 = vpack.c.b16 %v2728, %v2726
    %v3343 = vpack.c.b16 %v2731, %v2729
    %v3344 = vpack.c.b16 %v2732, %v2730
    %v3345 = vpack.c.b16 %v2735, %v2733
    %v3346 = vpack.c.b16 %v2736, %v2734
    %v3347 = vpack.c.b16 %v2739, %v2737
    %v3348 = vpack.c.b16 %v2740, %v2738
    %v3349 = vpack.c.b16 %v2743, %v2741
    %v3350 = vpack.c.b16 %v2744, %v2742
    %v3351 = vpack.c.b16 %v2747, %v2745
    %v3352 = vpack.c.b16 %v2748, %v2746
    %v3353 = vpack.c.b16 %v2751, %v2749
    %v3354 = vpack.c.b16 %v2752, %v2750
    %v3355 = vpack.c.b16 %v2755, %v2753
    %v3356 = vpack.c.b16 %v2756, %v2754
    %v3357 = vpack.c.b16 %v2759, %v2757
    %v3358 = vpack.c.b16 %v2760, %v2758
    %v3359 = vpack.c.b16 %v2763, %v2761
    %v3360 = vpack.c.b16 %v2764, %v2762
    %v3361 = vpack.c.b16 %v2767, %v2765
    %v3362 = vpack.c.b16 %v2768, %v2766
    %v3363 = vpack.c.b16 %v2771, %v2769
    %v3364 = vpack.c.b16 %v2772, %v2770
    %v3365 = vpack.c.b16 %v2775, %v2773
    %v3366 = vpack.c.b16 %v2776, %v2774
    %v3367 = vpack.c.b16 %v2779, %v2777
    %v3368 = vpack.c.b16 %v2780, %v2778
    %v3369 = vpack.c.b16 %v2783, %v2781
    %v3370 = vpack.c.b16 %v2784, %v2782
    %v3371 = vpack.c.b16 %v2787, %v2785
    %v3372 = vpack.c.b16 %v2788, %v2786
    %v3373 = vpack.c.b16 %v2791, %v2789
    %v3374 = vpack.c.b16 %v2792, %v2790
    %v3375 = vpack.c.b16 %v2795, %v2793
    %v3376 = vpack.c.b16 %v2796, %v2794
    %v3377 = vpack.c.b16 %v2799, %v2797
    %v3378 = vpack.c.b16 %v2800, %v2798
    %v3379 = vpack.c.b16 %v2803, %v2801
    %v3380 = vpack.c.b16 %v2804, %v2802
    %v3381 = vpack.c.b16 %v2807, %v2805
    %v3382 = vpack.c.b16 %v2808, %v2806
    %v3383 = vpack.c.b16 %v2811, %v2809
    %v3384 = vpack.c.b16 %v2812, %v2810
    %v3385 = vpack.c.b16 %v2815, %v2813
    %v3386 = vpack.c.b16 %v2816, %v2814
    %v3387 = vpack.c.b16 %v2819, %v2817
    %v3388 = vpack.c.b16 %v2820, %v2818
    %v3389 = vpack.c.b16 %v2823, %v2821
    %v3390 = vpack.c.b16 %v2824, %v2822
    %v3391 = vpack.c.b16 %v2827, %v2825
    %v3392 = vpack.c.b16 %v2828, %v2826
    %v3393 = vpack.c.b16 %v2831, %v2829
    %v3394 = vpack.c.b16 %v2832, %v2830
    %v3395 = vpack.c.b16 %v2835, %v2833
    %v3396 = vpack.c.b16 %v2836, %v2834
    %v3397 = vpack.c.b16 %v2839, %v2837
    %v3398 = vpack.c.b16 %v2840, %v2838
    %v3399 = vpack.c.b16 %v2843, %v2841
    %v3400 = vpack.c.b16 %v2844, %v2842
    %v3401 = vpack.c.b16 %v2847, %v2845
    %v3402 = vpack.c.b16 %v2848, %v2846
    %v3403 = vpack.c.b16 %v2851, %v2849
    %v3404 = vpack.c.b16 %v2852, %v2850
    %v3405 = vpack.c.b16 %v2855, %v2853
    %v3406 = vpack.c.b16 %v2856, %v2854
    %v3407 = vpack.c.b16 %v2859, %v2857
    %v3408 = vpack.c.b16 %v2860, %v2858
    %v3409 = vpack.c.b16 %v2863, %v2861
    %v3410 = vpack.c.b16 %v2864, %v2862
    %v3411 = vpack.c.b16 %v2867, %v2865
    %v3412 = vpack.c.b16 %v2868, %v2866
    %v3413 = vpack.c.b16 %v2871, %v2869
    %v3414 = vpack.c.b16 %v2872, %v2870
    %v3415 = vpack.c.b16 %v2875, %v2873
    %v3416 = vpack.c.b16 %v2876, %v2874
    %v3417 = vpack.c.b16 %v2879, %v2877
    %v3418 = vpack.c.b16 %v2880, %v2878
    %v3419 = vpack.c.b16 %v2883, %v2881
    %v3420 = vpack.c.b16 %v2884, %v2882
    %v3421 = vpack.c.b16 %v2887, %v2885
    %v3422 = vpack.c.b16 %v2888, %v2886
    %v3423 = vpack.c.b16 %v2891, %v2889
    %v3424 = vpack.c.b16 %v2892, %v2890
    %v3425 = vpack.c.b16 %v2895, %v2893
    %v3426 = vpack.c.b16 %v2896, %v2894
    %v3427 = vpack.c.b16 %v2899, %v2897
    %v3428 = vpack.c.b16 %v2900, %v2898
    %v3429 = vpack.c.b16 %v2903, %v2901
    %v3430 = vpack.c.b16 %v2904, %v2902
    %v3431 = vpack.c.b16 %v2907, %v2905
    %v3432 = vpack.c.b16 %v2908, %v2906
    %v3433 = vpack.c.b16 %v2911, %v2909
    %v3434 = vpack.c.b16 %v2912, %v2910
    %v3435 = vpack.c.b16 %v2915, %v2913
    %v3436 = vpack.c.b16 %v2916, %v2914
    %v3437 = vpack.c.b16 %v2919, %v2917
    %v3438 = vpack.c.b16 %v2920, %v2918
    %v3439 = vpack.c.b16 %v2923, %v2921
    %v3440 = vpack.c.b16 %v2924, %v2922
    %v3441 = vpack.c.b16 %v2927, %v2925
    %v3442 = vpack.c.b16 %v2928, %v2926
    %v3443 = vpack.c.b16 %v2931, %v2929
    %v3444 = vpack.c.b16 %v2932, %v2930
    %3957 = vmatprep.subr.bf16.mxu0 %v2934
    %3958 = vmatpush1.bf16.msra.mxu0 %v2933
    %3959 = vmatprep.subr.bf16.mxu0 %v2936
    %3960 = vmatpush1.bf16.msra.mxu0 %v2935
    %3961 = vmatprep.subr.bf16.mxu0 %v2938
    %3962 = vmatpush1.bf16.msra.mxu0 %v2937
    %3963 = vmatprep.subr.bf16.mxu0 %v2940
    %3964 = vmatpush1.bf16.msra.mxu0 %v2939
    %3965 = vmatprep.subr.bf16.mxu0 %v2942
    %3966 = vmatpush1.bf16.msra.mxu0 %v2941
    %3967 = vmatprep.subr.bf16.mxu0 %v2944
    %3968 = vmatpush1.bf16.msra.mxu0 %v2943
    %3969 = vmatprep.subr.bf16.mxu0 %v2946
    %3970 = vmatpush1.bf16.msra.mxu0 %v2945
    %3971 = vmatprep.subr.bf16.mxu0 %v2948
    %3972 = vmatpush1.bf16.msra.mxu0 %v2947
    %3973 = vmatprep.subr.bf16.mxu0 %v2950
    %3974 = vmatpush1.bf16.msra.mxu0 %v2949
    %3975 = vmatprep.subr.bf16.mxu0 %v2952
    %3976 = vmatpush1.bf16.msra.mxu0 %v2951
    %3977 = vmatprep.subr.bf16.mxu0 %v2954
    %3978 = vmatpush1.bf16.msra.mxu0 %v2953
    %3979 = vmatprep.subr.bf16.mxu0 %v2956
    %3980 = vmatpush1.bf16.msra.mxu0 %v2955
    %3981 = vmatprep.subr.bf16.mxu0 %v2958
    %3982 = vmatpush1.bf16.msra.mxu0 %v2957
    %3983 = vmatprep.subr.bf16.mxu0 %v2960
    %3984 = vmatpush1.bf16.msra.mxu0 %v2959
    %3985 = vmatprep.subr.bf16.mxu0 %v2962
    %3986 = vmatpush1.bf16.msra.mxu0 %v2961
    %3987 = vmatprep.subr.bf16.mxu0 %v2964
    %3988 = vmatpush1.bf16.msra.mxu0 %v2963
    %3989 = vmatprep.mubr.bf16.mxu0 %v842
    %3990 = vmatmul.mubr.bf16.gmra.mrb[0].mxu0 %v841
    %v3991 = vpop.f32.mrb[0].mxu0
    %v3992 = vadd.f32 %v1390, %v3991
    %v3993 = vpop.f32.mrb[0].mxu0
    %v3994 = vadd.f32 %v1394, %v3993
    %v3995 = vpop.f32.mrb[0].mxu0
    %v3996 = vpop.f32.mrb[0].mxu0
    %3997 = vdwg.mxu0
    %3998 = vmatprep.subr.bf16.mxu0 %v2966
    %3999 = vmatpush1.bf16.msra.mxu0 %v2965
    %4000 = vmatprep.subr.bf16.mxu0 %v2968
    %4001 = vmatpush1.bf16.msra.mxu0 %v2967
    %4002 = vmatprep.subr.bf16.mxu0 %v2970
    %4003 = vmatpush1.bf16.msra.mxu0 %v2969
    %4004 = vmatprep.subr.bf16.mxu0 %v2972
    %4005 = vmatpush1.bf16.msra.mxu0 %v2971
    %4006 = vmatprep.subr.bf16.mxu0 %v2974
    %4007 = vmatpush1.bf16.msra.mxu0 %v2973
    %4008 = vmatprep.subr.bf16.mxu0 %v2976
    %4009 = vmatpush1.bf16.msra.mxu0 %v2975
    %4010 = vmatprep.subr.bf16.mxu0 %v2978
    %4011 = vmatpush1.bf16.msra.mxu0 %v2977
    %4012 = vmatprep.subr.bf16.mxu0 %v2980
    %4013 = vmatpush1.bf16.msra.mxu0 %v2979
    %4014 = vmatprep.subr.bf16.mxu0 %v2982
    %4015 = vmatpush1.bf16.msra.mxu0 %v2981
    %4016 = vmatprep.subr.bf16.mxu0 %v2984
    %4017 = vmatpush1.bf16.msra.mxu0 %v2983
    %4018 = vmatprep.subr.bf16.mxu0 %v2986
    %4019 = vmatpush1.bf16.msra.mxu0 %v2985
    %4020 = vmatprep.subr.bf16.mxu0 %v2988
    %4021 = vmatpush1.bf16.msra.mxu0 %v2987
    %4022 = vmatprep.subr.bf16.mxu0 %v2990
    %4023 = vmatpush1.bf16.msra.mxu0 %v2989
    %4024 = vmatprep.subr.bf16.mxu0 %v2992
    %4025 = vmatpush1.bf16.msra.mxu0 %v2991
    %4026 = vmatprep.subr.bf16.mxu0 %v2994
    %4027 = vmatpush1.bf16.msra.mxu0 %v2993
    %4028 = vmatprep.subr.bf16.mxu0 %v2996
    %4029 = vmatpush1.bf16.msra.mxu0 %v2995
    %4030 = vmatprep.mubr.bf16.mxu0 %v844
    %4031 = vmatmul.mubr.bf16.gmra.mrb[0].mxu0 %v843
    %v4032 = vpop.f32.mrb[0].mxu0
    %v4033 = vadd.f32 %v3992, %v4032
    %v4034 = vpop.f32.mrb[0].mxu0
    %v4035 = vadd.f32 %v3994, %v4034
    %v4036 = vpop.f32.mrb[0].mxu0
    %v4037 = vpop.f32.mrb[0].mxu0
    %4038 = vdwg.mxu0
    %4039 = vmatprep.subr.bf16.mxu0 %v2998
    %4040 = vmatpush1.bf16.msra.mxu0 %v2997
    %4041 = vmatprep.subr.bf16.mxu0 %v3000
    %4042 = vmatpush1.bf16.msra.mxu0 %v2999
    %4043 = vmatprep.subr.bf16.mxu0 %v3002
    %4044 = vmatpush1.bf16.msra.mxu0 %v3001
    %4045 = vmatprep.subr.bf16.mxu0 %v3004
    %4046 = vmatpush1.bf16.msra.mxu0 %v3003
    %4047 = vmatprep.subr.bf16.mxu0 %v3006
    %4048 = vmatpush1.bf16.msra.mxu0 %v3005
    %4049 = vmatprep.subr.bf16.mxu0 %v3008
    %4050 = vmatpush1.bf16.msra.mxu0 %v3007
    %4051 = vmatprep.subr.bf16.mxu0 %v3010
    %4052 = vmatpush1.bf16.msra.mxu0 %v3009
    %4053 = vmatprep.subr.bf16.mxu0 %v3012
    %4054 = vmatpush1.bf16.msra.mxu0 %v3011
    %4055 = vmatprep.subr.bf16.mxu0 %v3014
    %4056 = vmatpush1.bf16.msra.mxu0 %v3013
    %4057 = vmatprep.subr.bf16.mxu0 %v3016
    %4058 = vmatpush1.bf16.msra.mxu0 %v3015
    %4059 = vmatprep.subr.bf16.mxu0 %v3018
    %4060 = vmatpush1.bf16.msra.mxu0 %v3017
    %4061 = vmatprep.subr.bf16.mxu0 %v3020
    %4062 = vmatpush1.bf16.msra.mxu0 %v3019
    %4063 = vmatprep.subr.bf16.mxu0 %v3022
    %4064 = vmatpush1.bf16.msra.mxu0 %v3021
    %4065 = vmatprep.subr.bf16.mxu0 %v3024
    %4066 = vmatpush1.bf16.msra.mxu0 %v3023
    %4067 = vmatprep.subr.bf16.mxu0 %v3026
    %4068 = vmatpush1.bf16.msra.mxu0 %v3025
    %4069 = vmatprep.subr.bf16.mxu0 %v3028
    %4070 = vmatpush1.bf16.msra.mxu0 %v3027
    %4071 = vmatprep.mubr.bf16.mxu0 %v846
    %4072 = vmatmul.mubr.bf16.gmra.mrb[0].mxu0 %v845
    %v4073 = vpop.f32.mrb[0].mxu0
    %v4074 = vadd.f32 %v4033, %v4073
    %v4075 = vpop.f32.mrb[0].mxu0
    %v4076 = vadd.f32 %v4035, %v4075
    %v4077 = vpop.f32.mrb[0].mxu0
    %v4078 = vpop.f32.mrb[0].mxu0
    %4079 = vdwg.mxu0
    %4080 = vmatprep.subr.bf16.mxu0 %v3030
    %4081 = vmatpush1.bf16.msra.mxu0 %v3029
    %4082 = vmatprep.subr.bf16.mxu0 %v3032
    %4083 = vmatpush1.bf16.msra.mxu0 %v3031
    %4084 = vmatprep.subr.bf16.mxu0 %v3034
    %4085 = vmatpush1.bf16.msra.mxu0 %v3033
    %4086 = vmatprep.subr.bf16.mxu0 %v3036
    %4087 = vmatpush1.bf16.msra.mxu0 %v3035
    %4088 = vmatprep.subr.bf16.mxu0 %v3038
    %4089 = vmatpush1.bf16.msra.mxu0 %v3037
    %4090 = vmatprep.subr.bf16.mxu0 %v3040
    %4091 = vmatpush1.bf16.msra.mxu0 %v3039
    %4092 = vmatprep.subr.bf16.mxu0 %v3042
    %4093 = vmatpush1.bf16.msra.mxu0 %v3041
    %4094 = vmatprep.subr.bf16.mxu0 %v3044
    %4095 = vmatpush1.bf16.msra.mxu0 %v3043
    %4096 = vmatprep.subr.bf16.mxu0 %v3046
    %4097 = vmatpush1.bf16.msra.mxu0 %v3045
    %4098 = vmatprep.subr.bf16.mxu0 %v3048
    %4099 = vmatpush1.bf16.msra.mxu0 %v3047
    %4100 = vmatprep.subr.bf16.mxu0 %v3050
    %4101 = vmatpush1.bf16.msra.mxu0 %v3049
    %4102 = vmatprep.subr.bf16.mxu0 %v3052
    %4103 = vmatpush1.bf16.msra.mxu0 %v3051
    %4104 = vmatprep.subr.bf16.mxu0 %v3054
    %4105 = vmatpush1.bf16.msra.mxu0 %v3053
    %4106 = vmatprep.subr.bf16.mxu0 %v3056
    %4107 = vmatpush1.bf16.msra.mxu0 %v3055
    %4108 = vmatprep.subr.bf16.mxu0 %v3058
    %4109 = vmatpush1.bf16.msra.mxu0 %v3057
    %4110 = vmatprep.subr.bf16.mxu0 %v3060
    %4111 = vmatpush1.bf16.msra.mxu0 %v3059
    %4112 = vmatprep.mubr.bf16.mxu0 %v848
    %4113 = vmatmul.mubr.bf16.gmra.mrb[0].mxu0 %v847
    %v4114 = vpop.f32.mrb[0].mxu0
    %v4115 = vadd.f32 %v4074, %v4114
    %v4116 = vpop.f32.mrb[0].mxu0
    %v4117 = vadd.f32 %v4076, %v4116
    %v4118 = vpop.f32.mrb[0].mxu0
    %v4119 = vpop.f32.mrb[0].mxu0
    %4120 = vdwg.mxu0
    %4121 = vmatprep.subr.bf16.mxu0 %v3062
    %4122 = vmatpush1.bf16.msra.mxu0 %v3061
    %4123 = vmatprep.subr.bf16.mxu0 %v3064
    %4124 = vmatpush1.bf16.msra.mxu0 %v3063
    %4125 = vmatprep.subr.bf16.mxu0 %v3066
    %4126 = vmatpush1.bf16.msra.mxu0 %v3065
    %4127 = vmatprep.subr.bf16.mxu0 %v3068
    %4128 = vmatpush1.bf16.msra.mxu0 %v3067
    %4129 = vmatprep.subr.bf16.mxu0 %v3070
    %4130 = vmatpush1.bf16.msra.mxu0 %v3069
    %4131 = vmatprep.subr.bf16.mxu0 %v3072
    %4132 = vmatpush1.bf16.msra.mxu0 %v3071
    %4133 = vmatprep.subr.bf16.mxu0 %v3074
    %4134 = vmatpush1.bf16.msra.mxu0 %v3073
    %4135 = vmatprep.subr.bf16.mxu0 %v3076
    %4136 = vmatpush1.bf16.msra.mxu0 %v3075
    %4137 = vmatprep.subr.bf16.mxu0 %v3078
    %4138 = vmatpush1.bf16.msra.mxu0 %v3077
    %4139 = vmatprep.subr.bf16.mxu0 %v3080
    %4140 = vmatpush1.bf16.msra.mxu0 %v3079
    %4141 = vmatprep.subr.bf16.mxu0 %v3082
    %4142 = vmatpush1.bf16.msra.mxu0 %v3081
    %4143 = vmatprep.subr.bf16.mxu0 %v3084
    %4144 = vmatpush1.bf16.msra.mxu0 %v3083
    %4145 = vmatprep.subr.bf16.mxu0 %v3086
    %4146 = vmatpush1.bf16.msra.mxu0 %v3085
    %4147 = vmatprep.subr.bf16.mxu0 %v3088
    %4148 = vmatpush1.bf16.msra.mxu0 %v3087
    %4149 = vmatprep.subr.bf16.mxu0 %v3090
    %4150 = vmatpush1.bf16.msra.mxu0 %v3089
    %4151 = vmatprep.subr.bf16.mxu0 %v3092
    %4152 = vmatpush1.bf16.msra.mxu0 %v3091
    %4153 = vmatprep.mubr.bf16.mxu0 %v850
    %4154 = vmatmul.mubr.bf16.gmra.mrb[0].mxu0 %v849
    %v4155 = vpop.f32.mrb[0].mxu0
    %v4156 = vadd.f32 %v4115, %v4155
    %v4157 = vpop.f32.mrb[0].mxu0
    %v4158 = vadd.f32 %v4117, %v4157
    %v4159 = vpop.f32.mrb[0].mxu0
    %v4160 = vpop.f32.mrb[0].mxu0
    %4161 = vdwg.mxu0
    %4162 = vmatprep.subr.bf16.mxu0 %v3094
    %4163 = vmatpush1.bf16.msra.mxu0 %v3093
    %4164 = vmatprep.subr.bf16.mxu0 %v3096
    %4165 = vmatpush1.bf16.msra.mxu0 %v3095
    %4166 = vmatprep.subr.bf16.mxu0 %v3098
    %4167 = vmatpush1.bf16.msra.mxu0 %v3097
    %4168 = vmatprep.subr.bf16.mxu0 %v3100
    %4169 = vmatpush1.bf16.msra.mxu0 %v3099
    %4170 = vmatprep.subr.bf16.mxu0 %v3102
    %4171 = vmatpush1.bf16.msra.mxu0 %v3101
    %4172 = vmatprep.subr.bf16.mxu0 %v3104
    %4173 = vmatpush1.bf16.msra.mxu0 %v3103
    %4174 = vmatprep.subr.bf16.mxu0 %v3106
    %4175 = vmatpush1.bf16.msra.mxu0 %v3105
    %4176 = vmatprep.subr.bf16.mxu0 %v3108
    %4177 = vmatpush1.bf16.msra.mxu0 %v3107
    %4178 = vmatprep.subr.bf16.mxu0 %v3110
    %4179 = vmatpush1.bf16.msra.mxu0 %v3109
    %4180 = vmatprep.subr.bf16.mxu0 %v3112
    %4181 = vmatpush1.bf16.msra.mxu0 %v3111
    %4182 = vmatprep.subr.bf16.mxu0 %v3114
    %4183 = vmatpush1.bf16.msra.mxu0 %v3113
    %4184 = vmatprep.subr.bf16.mxu0 %v3116
    %4185 = vmatpush1.bf16.msra.mxu0 %v3115
    %4186 = vmatprep.subr.bf16.mxu0 %v3118
    %4187 = vmatpush1.bf16.msra.mxu0 %v3117
    %4188 = vmatprep.subr.bf16.mxu0 %v3120
    %4189 = vmatpush1.bf16.msra.mxu0 %v3119
    %4190 = vmatprep.subr.bf16.mxu0 %v3122
    %4191 = vmatpush1.bf16.msra.mxu0 %v3121
    %4192 = vmatprep.subr.bf16.mxu0 %v3124
    %4193 = vmatpush1.bf16.msra.mxu0 %v3123
    %4194 = vmatprep.mubr.bf16.mxu0 %v852
    %4195 = vmatmul.mubr.bf16.gmra.mrb[0].mxu0 %v851
    %v4196 = vpop.f32.mrb[0].mxu0
    %v4197 = vadd.f32 %v4156, %v4196
    %v4198 = vpop.f32.mrb[0].mxu0
    %v4199 = vadd.f32 %v4158, %v4198
    %v4200 = vpop.f32.mrb[0].mxu0
    %v4201 = vpop.f32.mrb[0].mxu0
    %4202 = vdwg.mxu0
    %4203 = vmatprep.subr.bf16.mxu0 %v3126
    %4204 = vmatpush1.bf16.msra.mxu0 %v3125
    %4205 = vmatprep.subr.bf16.mxu0 %v3128
    %4206 = vmatpush1.bf16.msra.mxu0 %v3127
    %4207 = vmatprep.subr.bf16.mxu0 %v3130
    %4208 = vmatpush1.bf16.msra.mxu0 %v3129
    %4209 = vmatprep.subr.bf16.mxu0 %v3132
    %4210 = vmatpush1.bf16.msra.mxu0 %v3131
    %4211 = vmatprep.subr.bf16.mxu0 %v3134
    %4212 = vmatpush1.bf16.msra.mxu0 %v3133
    %4213 = vmatprep.subr.bf16.mxu0 %v3136
    %4214 = vmatpush1.bf16.msra.mxu0 %v3135
    %4215 = vmatprep.subr.bf16.mxu0 %v3138
    %4216 = vmatpush1.bf16.msra.mxu0 %v3137
    %4217 = vmatprep.subr.bf16.mxu0 %v3140
    %4218 = vmatpush1.bf16.msra.mxu0 %v3139
    %4219 = vmatprep.subr.bf16.mxu0 %v3142
    %4220 = vmatpush1.bf16.msra.mxu0 %v3141
    %4221 = vmatprep.subr.bf16.mxu0 %v3144
    %4222 = vmatpush1.bf16.msra.mxu0 %v3143
    %4223 = vmatprep.subr.bf16.mxu0 %v3146
    %4224 = vmatpush1.bf16.msra.mxu0 %v3145
    %4225 = vmatprep.subr.bf16.mxu0 %v3148
    %4226 = vmatpush1.bf16.msra.mxu0 %v3147
    %4227 = vmatprep.subr.bf16.mxu0 %v3150
    %4228 = vmatpush1.bf16.msra.mxu0 %v3149
    %4229 = vmatprep.subr.bf16.mxu0 %v3152
    %4230 = vmatpush1.bf16.msra.mxu0 %v3151
    %4231 = vmatprep.subr.bf16.mxu0 %v3154
    %4232 = vmatpush1.bf16.msra.mxu0 %v3153
    %4233 = vmatprep.subr.bf16.mxu0 %v3156
    %4234 = vmatpush1.bf16.msra.mxu0 %v3155
    %4235 = vmatprep.mubr.bf16.mxu0 %v854
    %4236 = vmatmul.mubr.bf16.gmra.mrb[0].mxu0 %v853
    %v4237 = vpop.f32.mrb[0].mxu0
    %v4238 = vadd.f32 %v4197, %v4237
    %v4239 = vpop.f32.mrb[0].mxu0
    %v4240 = vadd.f32 %v4199, %v4239
    %v4241 = vpop.f32.mrb[0].mxu0
    %v4242 = vpop.f32.mrb[0].mxu0
    %4243 = vdwg.mxu0
    %4244 = vmatprep.subr.bf16.mxu0 %v3158
    %4245 = vmatpush1.bf16.msra.mxu0 %v3157
    %4246 = vmatprep.subr.bf16.mxu0 %v3160
    %4247 = vmatpush1.bf16.msra.mxu0 %v3159
    %4248 = vmatprep.subr.bf16.mxu0 %v3162
    %4249 = vmatpush1.bf16.msra.mxu0 %v3161
    %4250 = vmatprep.subr.bf16.mxu0 %v3164
    %4251 = vmatpush1.bf16.msra.mxu0 %v3163
    %4252 = vmatprep.subr.bf16.mxu0 %v3166
    %4253 = vmatpush1.bf16.msra.mxu0 %v3165
    %4254 = vmatprep.subr.bf16.mxu0 %v3168
    %4255 = vmatpush1.bf16.msra.mxu0 %v3167
    %4256 = vmatprep.subr.bf16.mxu0 %v3170
    %4257 = vmatpush1.bf16.msra.mxu0 %v3169
    %4258 = vmatprep.subr.bf16.mxu0 %v3172
    %4259 = vmatpush1.bf16.msra.mxu0 %v3171
    %4260 = vmatprep.subr.bf16.mxu0 %v3174
    %4261 = vmatpush1.bf16.msra.mxu0 %v3173
    %4262 = vmatprep.subr.bf16.mxu0 %v3176
    %4263 = vmatpush1.bf16.msra.mxu0 %v3175
    %4264 = vmatprep.subr.bf16.mxu0 %v3178
    %4265 = vmatpush1.bf16.msra.mxu0 %v3177
    %4266 = vmatprep.subr.bf16.mxu0 %v3180
    %4267 = vmatpush1.bf16.msra.mxu0 %v3179
    %4268 = vmatprep.subr.bf16.mxu0 %v3182
    %4269 = vmatpush1.bf16.msra.mxu0 %v3181
    %4270 = vmatprep.subr.bf16.mxu0 %v3184
    %4271 = vmatpush1.bf16.msra.mxu0 %v3183
    %4272 = vmatprep.subr.bf16.mxu0 %v3186
    %4273 = vmatpush1.bf16.msra.mxu0 %v3185
    %4274 = vmatprep.subr.bf16.mxu0 %v3188
    %4275 = vmatpush1.bf16.msra.mxu0 %v3187
    %4276 = vmatprep.mubr.bf16.mxu0 %v856
    %4277 = vmatmul.mubr.bf16.gmra.mrb[0].mxu0 %v855
    %v4278 = vpop.f32.mrb[0].mxu0
    %v4279 = vadd.f32 %v4238, %v4278
    %v4280 = vpop.f32.mrb[0].mxu0
    %v4281 = vadd.f32 %v4240, %v4280
    %v4282 = vpop.f32.mrb[0].mxu0
    %v4283 = vpop.f32.mrb[0].mxu0
    %4284 = vdwg.mxu0
    %4285 = vmatprep.subr.bf16.mxu0 %v3190
    %4286 = vmatpush1.bf16.msra.mxu0 %v3189
    %4287 = vmatprep.subr.bf16.mxu0 %v3192
    %4288 = vmatpush1.bf16.msra.mxu0 %v3191
    %4289 = vmatprep.subr.bf16.mxu0 %v3194
    %4290 = vmatpush1.bf16.msra.mxu0 %v3193
    %4291 = vmatprep.subr.bf16.mxu0 %v3196
    %4292 = vmatpush1.bf16.msra.mxu0 %v3195
    %4293 = vmatprep.subr.bf16.mxu0 %v3198
    %4294 = vmatpush1.bf16.msra.mxu0 %v3197
    %4295 = vmatprep.subr.bf16.mxu0 %v3200
    %4296 = vmatpush1.bf16.msra.mxu0 %v3199
    %4297 = vmatprep.subr.bf16.mxu0 %v3202
    %4298 = vmatpush1.bf16.msra.mxu0 %v3201
    %4299 = vmatprep.subr.bf16.mxu0 %v3204
    %4300 = vmatpush1.bf16.msra.mxu0 %v3203
    %4301 = vmatprep.subr.bf16.mxu0 %v3206
    %4302 = vmatpush1.bf16.msra.mxu0 %v3205
    %4303 = vmatprep.subr.bf16.mxu0 %v3208
    %4304 = vmatpush1.bf16.msra.mxu0 %v3207
    %4305 = vmatprep.subr.bf16.mxu0 %v3210
    %4306 = vmatpush1.bf16.msra.mxu0 %v3209
    %4307 = vmatprep.subr.bf16.mxu0 %v3212
    %4308 = vmatpush1.bf16.msra.mxu0 %v3211
    %4309 = vmatprep.subr.bf16.mxu0 %v3214
    %4310 = vmatpush1.bf16.msra.mxu0 %v3213
    %4311 = vmatprep.subr.bf16.mxu0 %v3216
    %4312 = vmatpush1.bf16.msra.mxu0 %v3215
    %4313 = vmatprep.subr.bf16.mxu0 %v3218
    %4314 = vmatpush1.bf16.msra.mxu0 %v3217
    %4315 = vmatprep.subr.bf16.mxu0 %v3220
    %4316 = vmatpush1.bf16.msra.mxu0 %v3219
    %4317 = vmatprep.mubr.bf16.mxu0 %v858
    %4318 = vmatmul.mubr.bf16.gmra.mrb[0].mxu0 %v857
    %v4319 = vpop.f32.mrb[0].mxu0
    %v4320 = vadd.f32 %v4279, %v4319
    %v4321 = vpop.f32.mrb[0].mxu0
    %v4322 = vadd.f32 %v4281, %v4321
    %v4323 = vpop.f32.mrb[0].mxu0
    %v4324 = vpop.f32.mrb[0].mxu0
    %4325 = vdwg.mxu0
    %4326 = vmatprep.subr.bf16.mxu0 %v3222
    %4327 = vmatpush1.bf16.msra.mxu0 %v3221
    %4328 = vmatprep.subr.bf16.mxu0 %v3224
    %4329 = vmatpush1.bf16.msra.mxu0 %v3223
    %4330 = vmatprep.subr.bf16.mxu0 %v3226
    %4331 = vmatpush1.bf16.msra.mxu0 %v3225
    %4332 = vmatprep.subr.bf16.mxu0 %v3228
    %4333 = vmatpush1.bf16.msra.mxu0 %v3227
    %4334 = vmatprep.subr.bf16.mxu0 %v3230
    %4335 = vmatpush1.bf16.msra.mxu0 %v3229
    %4336 = vmatprep.subr.bf16.mxu0 %v3232
    %4337 = vmatpush1.bf16.msra.mxu0 %v3231
    %4338 = vmatprep.subr.bf16.mxu0 %v3234
    %4339 = vmatpush1.bf16.msra.mxu0 %v3233
    %4340 = vmatprep.subr.bf16.mxu0 %v3236
    %4341 = vmatpush1.bf16.msra.mxu0 %v3235
    %4342 = vmatprep.subr.bf16.mxu0 %v3238
    %4343 = vmatpush1.bf16.msra.mxu0 %v3237
    %4344 = vmatprep.subr.bf16.mxu0 %v3240
    %4345 = vmatpush1.bf16.msra.mxu0 %v3239
    %4346 = vmatprep.subr.bf16.mxu0 %v3242
    %4347 = vmatpush1.bf16.msra.mxu0 %v3241
    %4348 = vmatprep.subr.bf16.mxu0 %v3244
    %4349 = vmatpush1.bf16.msra.mxu0 %v3243
    %4350 = vmatprep.subr.bf16.mxu0 %v3246
    %4351 = vmatpush1.bf16.msra.mxu0 %v3245
    %4352 = vmatprep.subr.bf16.mxu0 %v3248
    %4353 = vmatpush1.bf16.msra.mxu0 %v3247
    %4354 = vmatprep.subr.bf16.mxu0 %v3250
    %4355 = vmatpush1.bf16.msra.mxu0 %v3249
    %4356 = vmatprep.subr.bf16.mxu0 %v3252
    %4357 = vmatpush1.bf16.msra.mxu0 %v3251
    %4358 = vmatprep.mubr.bf16.mxu0 %v860
    %4359 = vmatmul.mubr.bf16.gmra.mrb[0].mxu0 %v859
    %v4360 = vpop.f32.mrb[0].mxu0
    %v4361 = vadd.f32 %v4320, %v4360
    %v4362 = vpop.f32.mrb[0].mxu0
    %v4363 = vadd.f32 %v4322, %v4362
    %v4364 = vpop.f32.mrb[0].mxu0
    %v4365 = vpop.f32.mrb[0].mxu0
    %4366 = vdwg.mxu0
    %4367 = vmatprep.subr.bf16.mxu0 %v3254
    %4368 = vmatpush1.bf16.msra.mxu0 %v3253
    %4369 = vmatprep.subr.bf16.mxu0 %v3256
    %4370 = vmatpush1.bf16.msra.mxu0 %v3255
    %4371 = vmatprep.subr.bf16.mxu0 %v3258
    %4372 = vmatpush1.bf16.msra.mxu0 %v3257
    %4373 = vmatprep.subr.bf16.mxu0 %v3260
    %4374 = vmatpush1.bf16.msra.mxu0 %v3259
    %4375 = vmatprep.subr.bf16.mxu0 %v3262
    %4376 = vmatpush1.bf16.msra.mxu0 %v3261
    %4377 = vmatprep.subr.bf16.mxu0 %v3264
    %4378 = vmatpush1.bf16.msra.mxu0 %v3263
    %4379 = vmatprep.subr.bf16.mxu0 %v3266
    %4380 = vmatpush1.bf16.msra.mxu0 %v3265
    %4381 = vmatprep.subr.bf16.mxu0 %v3268
    %4382 = vmatpush1.bf16.msra.mxu0 %v3267
    %4383 = vmatprep.subr.bf16.mxu0 %v3270
    %4384 = vmatpush1.bf16.msra.mxu0 %v3269
    %4385 = vmatprep.subr.bf16.mxu0 %v3272
    %4386 = vmatpush1.bf16.msra.mxu0 %v3271
    %4387 = vmatprep.subr.bf16.mxu0 %v3274
    %4388 = vmatpush1.bf16.msra.mxu0 %v3273
    %4389 = vmatprep.subr.bf16.mxu0 %v3276
    %4390 = vmatpush1.bf16.msra.mxu0 %v3275
    %4391 = vmatprep.subr.bf16.mxu0 %v3278
    %4392 = vmatpush1.bf16.msra.mxu0 %v3277
    %4393 = vmatprep.subr.bf16.mxu0 %v3280
    %4394 = vmatpush1.bf16.msra.mxu0 %v3279
    %4395 = vmatprep.subr.bf16.mxu0 %v3282
    %4396 = vmatpush1.bf16.msra.mxu0 %v3281
    %4397 = vmatprep.subr.bf16.mxu0 %v3284
    %4398 = vmatpush1.bf16.msra.mxu0 %v3283
    %4399 = vmatprep.mubr.bf16.mxu0 %v862
    %4400 = vmatmul.mubr.bf16.gmra.mrb[0].mxu0 %v861
    %v4401 = vpop.f32.mrb[0].mxu0
    %v4402 = vadd.f32 %v4361, %v4401
    %v4403 = vpop.f32.mrb[0].mxu0
    %v4404 = vadd.f32 %v4363, %v4403
    %v4405 = vpop.f32.mrb[0].mxu0
    %v4406 = vpop.f32.mrb[0].mxu0
    %4407 = vdwg.mxu0
    %4408 = vmatprep.subr.bf16.mxu0 %v3286
    %4409 = vmatpush1.bf16.msra.mxu0 %v3285
    %4410 = vmatprep.subr.bf16.mxu0 %v3288
    %4411 = vmatpush1.bf16.msra.mxu0 %v3287
    %4412 = vmatprep.subr.bf16.mxu0 %v3290
    %4413 = vmatpush1.bf16.msra.mxu0 %v3289
    %4414 = vmatprep.subr.bf16.mxu0 %v3292
    %4415 = vmatpush1.bf16.msra.mxu0 %v3291
    %4416 = vmatprep.subr.bf16.mxu0 %v3294
    %4417 = vmatpush1.bf16.msra.mxu0 %v3293
    %4418 = vmatprep.subr.bf16.mxu0 %v3296
    %4419 = vmatpush1.bf16.msra.mxu0 %v3295
    %4420 = vmatprep.subr.bf16.mxu0 %v3298
    %4421 = vmatpush1.bf16.msra.mxu0 %v3297
    %4422 = vmatprep.subr.bf16.mxu0 %v3300
    %4423 = vmatpush1.bf16.msra.mxu0 %v3299
    %4424 = vmatprep.subr.bf16.mxu0 %v3302
    %4425 = vmatpush1.bf16.msra.mxu0 %v3301
    %4426 = vmatprep.subr.bf16.mxu0 %v3304
    %4427 = vmatpush1.bf16.msra.mxu0 %v3303
    %4428 = vmatprep.subr.bf16.mxu0 %v3306
    %4429 = vmatpush1.bf16.msra.mxu0 %v3305
    %4430 = vmatprep.subr.bf16.mxu0 %v3308
    %4431 = vmatpush1.bf16.msra.mxu0 %v3307
    %4432 = vmatprep.subr.bf16.mxu0 %v3310
    %4433 = vmatpush1.bf16.msra.mxu0 %v3309
    %4434 = vmatprep.subr.bf16.mxu0 %v3312
    %4435 = vmatpush1.bf16.msra.mxu0 %v3311
    %4436 = vmatprep.subr.bf16.mxu0 %v3314
    %4437 = vmatpush1.bf16.msra.mxu0 %v3313
    %4438 = vmatprep.subr.bf16.mxu0 %v3316
    %4439 = vmatpush1.bf16.msra.mxu0 %v3315
    %4440 = vmatprep.mubr.bf16.mxu0 %v864
    %4441 = vmatmul.mubr.bf16.gmra.mrb[0].mxu0 %v863
    %v4442 = vpop.f32.mrb[0].mxu0
    %v4443 = vadd.f32 %v4402, %v4442
    %v4444 = vpop.f32.mrb[0].mxu0
    %v4445 = vadd.f32 %v4404, %v4444
    %v4446 = vpop.f32.mrb[0].mxu0
    %v4447 = vpop.f32.mrb[0].mxu0
    %4448 = vdwg.mxu0
    %4449 = vmatprep.subr.bf16.mxu0 %v3318
    %4450 = vmatpush1.bf16.msra.mxu0 %v3317
    %4451 = vmatprep.subr.bf16.mxu0 %v3320
    %4452 = vmatpush1.bf16.msra.mxu0 %v3319
    %4453 = vmatprep.subr.bf16.mxu0 %v3322
    %4454 = vmatpush1.bf16.msra.mxu0 %v3321
    %4455 = vmatprep.subr.bf16.mxu0 %v3324
    %4456 = vmatpush1.bf16.msra.mxu0 %v3323
    %4457 = vmatprep.subr.bf16.mxu0 %v3326
    %4458 = vmatpush1.bf16.msra.mxu0 %v3325
    %4459 = vmatprep.subr.bf16.mxu0 %v3328
    %4460 = vmatpush1.bf16.msra.mxu0 %v3327
    %4461 = vmatprep.subr.bf16.mxu0 %v3330
    %4462 = vmatpush1.bf16.msra.mxu0 %v3329
    %4463 = vmatprep.subr.bf16.mxu0 %v3332
    %4464 = vmatpush1.bf16.msra.mxu0 %v3331
    %4465 = vmatprep.subr.bf16.mxu0 %v3334
    %4466 = vmatpush1.bf16.msra.mxu0 %v3333
    %4467 = vmatprep.subr.bf16.mxu0 %v3336
    %4468 = vmatpush1.bf16.msra.mxu0 %v3335
    %4469 = vmatprep.subr.bf16.mxu0 %v3338
    %4470 = vmatpush1.bf16.msra.mxu0 %v3337
    %4471 = vmatprep.subr.bf16.mxu0 %v3340
    %4472 = vmatpush1.bf16.msra.mxu0 %v3339
    %4473 = vmatprep.subr.bf16.mxu0 %v3342
    %4474 = vmatpush1.bf16.msra.mxu0 %v3341
    %4475 = vmatprep.subr.bf16.mxu0 %v3344
    %4476 = vmatpush1.bf16.msra.mxu0 %v3343
    %4477 = vmatprep.subr.bf16.mxu0 %v3346
    %4478 = vmatpush1.bf16.msra.mxu0 %v3345
    %4479 = vmatprep.subr.bf16.mxu0 %v3348
    %4480 = vmatpush1.bf16.msra.mxu0 %v3347
    %4481 = vmatprep.mubr.bf16.mxu0 %v866
    %4482 = vmatmul.mubr.bf16.gmra.mrb[0].mxu0 %v865
    %v4483 = vpop.f32.mrb[0].mxu0
    %v4484 = vadd.f32 %v4443, %v4483
    %v4485 = vpop.f32.mrb[0].mxu0
    %v4486 = vadd.f32 %v4445, %v4485
    %v4487 = vpop.f32.mrb[0].mxu0
    %v4488 = vpop.f32.mrb[0].mxu0
    %4489 = vdwg.mxu0
    %4490 = vmatprep.subr.bf16.mxu0 %v3350
    %4491 = vmatpush1.bf16.msra.mxu0 %v3349
    %4492 = vmatprep.subr.bf16.mxu0 %v3352
    %4493 = vmatpush1.bf16.msra.mxu0 %v3351
    %4494 = vmatprep.subr.bf16.mxu0 %v3354
    %4495 = vmatpush1.bf16.msra.mxu0 %v3353
    %4496 = vmatprep.subr.bf16.mxu0 %v3356
    %4497 = vmatpush1.bf16.msra.mxu0 %v3355
    %4498 = vmatprep.subr.bf16.mxu0 %v3358
    %4499 = vmatpush1.bf16.msra.mxu0 %v3357
    %4500 = vmatprep.subr.bf16.mxu0 %v3360
    %4501 = vmatpush1.bf16.msra.mxu0 %v3359
    %4502 = vmatprep.subr.bf16.mxu0 %v3362
    %4503 = vmatpush1.bf16.msra.mxu0 %v3361
    %4504 = vmatprep.subr.bf16.mxu0 %v3364
    %4505 = vmatpush1.bf16.msra.mxu0 %v3363
    %4506 = vmatprep.subr.bf16.mxu0 %v3366
    %4507 = vmatpush1.bf16.msra.mxu0 %v3365
    %4508 = vmatprep.subr.bf16.mxu0 %v3368
    %4509 = vmatpush1.bf16.msra.mxu0 %v3367
    %4510 = vmatprep.subr.bf16.mxu0 %v3370
    %4511 = vmatpush1.bf16.msra.mxu0 %v3369
    %4512 = vmatprep.subr.bf16.mxu0 %v3372
    %4513 = vmatpush1.bf16.msra.mxu0 %v3371
    %4514 = vmatprep.subr.bf16.mxu0 %v3374
    %4515 = vmatpush1.bf16.msra.mxu0 %v3373
    %4516 = vmatprep.subr.bf16.mxu0 %v3376
    %4517 = vmatpush1.bf16.msra.mxu0 %v3375
    %4518 = vmatprep.subr.bf16.mxu0 %v3378
    %4519 = vmatpush1.bf16.msra.mxu0 %v3377
    %4520 = vmatprep.subr.bf16.mxu0 %v3380
    %4521 = vmatpush1.bf16.msra.mxu0 %v3379
    %4522 = vmatprep.mubr.bf16.mxu0 %v868
    %4523 = vmatmul.mubr.bf16.gmra.mrb[0].mxu0 %v867
    %v4524 = vpop.f32.mrb[0].mxu0
    %v4525 = vadd.f32 %v4484, %v4524
    %v4526 = vpop.f32.mrb[0].mxu0
    %v4527 = vadd.f32 %v4486, %v4526
    %v4528 = vpop.f32.mrb[0].mxu0
    %v4529 = vpop.f32.mrb[0].mxu0
    %4530 = vdwg.mxu0
    %4531 = vmatprep.subr.bf16.mxu0 %v3382
    %4532 = vmatpush1.bf16.msra.mxu0 %v3381
    %4533 = vmatprep.subr.bf16.mxu0 %v3384
    %4534 = vmatpush1.bf16.msra.mxu0 %v3383
    %4535 = vmatprep.subr.bf16.mxu0 %v3386
    %4536 = vmatpush1.bf16.msra.mxu0 %v3385
    %4537 = vmatprep.subr.bf16.mxu0 %v3388
    %4538 = vmatpush1.bf16.msra.mxu0 %v3387
    %4539 = vmatprep.subr.bf16.mxu0 %v3390
    %4540 = vmatpush1.bf16.msra.mxu0 %v3389
    %4541 = vmatprep.subr.bf16.mxu0 %v3392
    %4542 = vmatpush1.bf16.msra.mxu0 %v3391
    %4543 = vmatprep.subr.bf16.mxu0 %v3394
    %4544 = vmatpush1.bf16.msra.mxu0 %v3393
    %4545 = vmatprep.subr.bf16.mxu0 %v3396
    %4546 = vmatpush1.bf16.msra.mxu0 %v3395
    %4547 = vmatprep.subr.bf16.mxu0 %v3398
    %4548 = vmatpush1.bf16.msra.mxu0 %v3397
    %4549 = vmatprep.subr.bf16.mxu0 %v3400
    %4550 = vmatpush1.bf16.msra.mxu0 %v3399
    %4551 = vmatprep.subr.bf16.mxu0 %v3402
    %4552 = vmatpush1.bf16.msra.mxu0 %v3401
    %4553 = vmatprep.subr.bf16.mxu0 %v3404
    %4554 = vmatpush1.bf16.msra.mxu0 %v3403
    %4555 = vmatprep.subr.bf16.mxu0 %v3406
    %4556 = vmatpush1.bf16.msra.mxu0 %v3405
    %4557 = vmatprep.subr.bf16.mxu0 %v3408
    %4558 = vmatpush1.bf16.msra.mxu0 %v3407
    %4559 = vmatprep.subr.bf16.mxu0 %v3410
    %4560 = vmatpush1.bf16.msra.mxu0 %v3409
    %4561 = vmatprep.subr.bf16.mxu0 %v3412
    %4562 = vmatpush1.bf16.msra.mxu0 %v3411
    %4563 = vmatprep.mubr.bf16.mxu0 %v870
    %4564 = vmatmul.mubr.bf16.gmra.mrb[0].mxu0 %v869
    %v4565 = vpop.f32.mrb[0].mxu0
    %v4566 = vadd.f32 %v4525, %v4565
    %v4567 = vpop.f32.mrb[0].mxu0
    %v4568 = vadd.f32 %v4527, %v4567
    %v4569 = vpop.f32.mrb[0].mxu0
    %v4570 = vpop.f32.mrb[0].mxu0
    %4571 = vdwg.mxu0
    %4572 = vmatprep.subr.bf16.mxu0 %v3414
    %4573 = vmatpush1.bf16.msra.mxu0 %v3413
    %4574 = vmatprep.subr.bf16.mxu0 %v3416
    %4575 = vmatpush1.bf16.msra.mxu0 %v3415
    %4576 = vmatprep.subr.bf16.mxu0 %v3418
    %4577 = vmatpush1.bf16.msra.mxu0 %v3417
    %4578 = vmatprep.subr.bf16.mxu0 %v3420
    %4579 = vmatpush1.bf16.msra.mxu0 %v3419
    %4580 = vmatprep.subr.bf16.mxu0 %v3422
    %4581 = vmatpush1.bf16.msra.mxu0 %v3421
    %4582 = vmatprep.subr.bf16.mxu0 %v3424
    %4583 = vmatpush1.bf16.msra.mxu0 %v3423
    %4584 = vmatprep.subr.bf16.mxu0 %v3426
    %4585 = vmatpush1.bf16.msra.mxu0 %v3425
    %4586 = vmatprep.subr.bf16.mxu0 %v3428
    %4587 = vmatpush1.bf16.msra.mxu0 %v3427
    %4588 = vmatprep.subr.bf16.mxu0 %v3430
    %4589 = vmatpush1.bf16.msra.mxu0 %v3429
    %4590 = vmatprep.subr.bf16.mxu0 %v3432
    %4591 = vmatpush1.bf16.msra.mxu0 %v3431
    %4592 = vmatprep.subr.bf16.mxu0 %v3434
    %4593 = vmatpush1.bf16.msra.mxu0 %v3433
    %4594 = vmatprep.subr.bf16.mxu0 %v3436
    %4595 = vmatpush1.bf16.msra.mxu0 %v3435
    %4596 = vmatprep.subr.bf16.mxu0 %v3438
    %4597 = vmatpush1.bf16.msra.mxu0 %v3437
    %4598 = vmatprep.subr.bf16.mxu0 %v3440
    %4599 = vmatpush1.bf16.msra.mxu0 %v3439
    %4600 = vmatprep.subr.bf16.mxu0 %v3442
    %4601 = vmatpush1.bf16.msra.mxu0 %v3441
    %4602 = vmatprep.subr.bf16.mxu0 %v3444
    %4603 = vmatpush1.bf16.msra.mxu0 %v3443
    %4604 = vmatprep.mubr.bf16.mxu0 %v872
    %4605 = vmatmul.mubr.bf16.gmra.mrb[0].mxu0 %v871
    %v4606 = vpop.f32.mrb[0].mxu0
    %v4607 = vadd.f32 %v4566, %v4606
    %v4608 = vpop.f32.mrb[0].mxu0
    %v4609 = vadd.f32 %v4568, %v4608
    %v4610 = vpop.f32.mrb[0].mxu0
    %v4611 = vpop.f32.mrb[0].mxu0
    %4612 = vdwg.mxu0
    %v4613 = vpack.c.bf16 %v4607, %v4607
    %v4614 = vpack.c.bf16 %v4609, %v4609
    %v4615 = vld [vmem:[%s5] sm:$0xf]
    %v4616 = vld [vmem:[%s5 + $0x4] sm:$0xf]
    %v4617 = vld [vmem:[%s5 + $0x8] sm:$0xf]
    %v4618 = vld [vmem:[%s5 + $0xc] sm:$0xf]
    %v4619 = vld [vmem:[%s5 + $0x10] sm:$0xf]
    %v4620 = vld [vmem:[%s5 + $0x14] sm:$0xf]
    %v4621 = vld [vmem:[%s5 + $0x18] sm:$0xf]
    %v4622 = vld [vmem:[%s5 + $0x1c] sm:$0xf]
    %v4623 = vld [vmem:[%s5 + $0x20] sm:$0xf]
    %v4624 = vld [vmem:[%s5 + $0x24] sm:$0xf]
    %v4625 = vld [vmem:[%s5 + $0x28] sm:$0xf]
    %v4626 = vld [vmem:[%s5 + $0x2c] sm:$0xf]
    %v4627 = vld [vmem:[%s5 + $0x30] sm:$0xf]
    %v4628 = vld [vmem:[%s5 + $0x34] sm:$0xf]
    %v4629 = vld [vmem:[%s5 + $0x38] sm:$0xf]
    %v4630 = vld [vmem:[%s5 + $0x3c] sm:$0xf]
    %v4631 = vld [vmem:[%s5 + $0x40] sm:$0xf]
    %v4632 = vld [vmem:[%s5 + $0x44] sm:$0xf]
    %v4633 = vld [vmem:[%s5 + $0x48] sm:$0xf]
    %v4634 = vld [vmem:[%s5 + $0x4c] sm:$0xf]
    %v4635 = vld [vmem:[%s5 + $0x50] sm:$0xf]
    %v4636 = vld [vmem:[%s5 + $0x54] sm:$0xf]
    %v4637 = vld [vmem:[%s5 + $0x58] sm:$0xf]
    %v4638 = vld [vmem:[%s5 + $0x5c] sm:$0xf]
    %v4639 = vld [vmem:[%s5 + $0x60] sm:$0xf]
    %v4640 = vld [vmem:[%s6] sm:$0x1]
    %v4642 = vlaneseq
    %v4643 = vshrl.u32 %v4642, 7
    %v4644 = vsub.s32 0, %v4643
    %v4645 = vrot.slane %v4640, %v4644
    %v4672 = vunpack.c.l.b16 %v4615
    %v4673 = vunpack.c.l.b16 %v4616
    %v4674 = vunpack.c.l.b16 %v4617
    %v4675 = vunpack.c.l.b16 %v4618
    %v4676 = vunpack.c.l.b16 %v4619
    %v4677 = vunpack.c.l.b16 %v4620
    %v4678 = vunpack.c.l.b16 %v4621
    %v4679 = vunpack.c.l.b16 %v4622
    %v4680 = vunpack.c.l.b16 %v4623
    %v4681 = vunpack.c.l.b16 %v4624
    %v4682 = vunpack.c.l.b16 %v4625
    %v4683 = vunpack.c.l.b16 %v4626
    %v4684 = vunpack.c.l.b16 %v4627
    %v4685 = vunpack.c.l.b16 %v4628
    %v4686 = vunpack.c.l.b16 %v4629
    %v4687 = vunpack.c.l.b16 %v4630
    %v4688 = vunpack.c.l.b16 %v4631
    %v4689 = vunpack.c.l.b16 %v4632
    %v4690 = vunpack.c.l.b16 %v4633
    %v4691 = vunpack.c.l.b16 %v4634
    %v4692 = vunpack.c.l.b16 %v4635
    %v4693 = vunpack.c.l.b16 %v4636
    %v4694 = vunpack.c.l.b16 %v4637
    %v4695 = vunpack.c.l.b16 %v4638
    %v4696 = vunpack.c.l.b16 %v4639
    %v4697 = vpack.c.b16 %v4673, %v4672
    %v4698 = vpack.c.b16 %v4675, %v4674
    %v4699 = vpack.c.b16 %v4677, %v4676
    %v4700 = vpack.c.b16 %v4679, %v4678
    %v4701 = vpack.c.b16 %v4681, %v4680
    %v4702 = vpack.c.b16 %v4683, %v4682
    %v4703 = vpack.c.b16 %v4685, %v4684
    %v4704 = vpack.c.b16 %v4687, %v4686
    %v4705 = vpack.c.b16 %v4689, %v4688
    %v4706 = vpack.c.b16 %v4691, %v4690
    %v4707 = vpack.c.b16 %v4693, %v4692
    %v4708 = vpack.c.b16 %v4695, %v4694
    %v4709 = vpack.c.b16 %v4696, %v4696
    %vm4722 = vcmask 588800
    %v4724 = vsel %vm4722, %v4614, 0
    %vm4726 = vcmask 1043456
    %v4728 = vsel %vm4726, %v4709, 0
    %4730 = vmatprep.subr.bf16.mxu0 0
    %4731 = vmatpush1.bf16.msra.mxu0 %v4697
    %4732 = vmatprep.subr.bf16.mxu0 0
    %4733 = vmatpush1.bf16.msra.mxu0 %v4698
    %4734 = vmatprep.subr.bf16.mxu0 0
    %4735 = vmatpush1.bf16.msra.mxu0 %v4699
    %4736 = vmatprep.subr.bf16.mxu0 0
    %4737 = vmatpush1.bf16.msra.mxu0 %v4700
    %4738 = vmatprep.subr.bf16.mxu0 0
    %4739 = vmatpush1.bf16.msra.mxu0 %v4701
    %4740 = vmatprep.subr.bf16.mxu0 0
    %4741 = vmatpush1.bf16.msra.mxu0 %v4702
    %4742 = vmatprep.subr.bf16.mxu0 0
    %4743 = vmatpush1.bf16.msra.mxu0 %v4703
    %4744 = vmatprep.subr.bf16.mxu0 0
    %4745 = vmatpush1.bf16.msra.mxu0 %v4704
    %4746 = vmatprep.subr.bf16.mxu0 0
    %4747 = vmatpush1.bf16.msra.mxu0 %v4705
    %4748 = vmatprep.subr.bf16.mxu0 0
    %4749 = vmatpush1.bf16.msra.mxu0 %v4706
    %4750 = vmatprep.subr.bf16.mxu0 0
    %4751 = vmatpush1.bf16.msra.mxu0 %v4707
    %4752 = vmatprep.subr.bf16.mxu0 0
    %4753 = vmatpush1.bf16.msra.mxu0 %v4708
    %4754 = vmatprep.subr.bf16.mxu0 0
    %4755 = vmatpush1.bf16.msra.mxu0 %v4728
    %4756 = vmatprep.subr.bf16.mxu0 0
    %4757 = vmatpush1.bf16.msra.mxu0 0
    %4758 = vmatprep.subr.bf16.mxu0 0
    %4759 = vmatpush1.bf16.msra.mxu0 0
    %4760 = vmatprep.subr.bf16.mxu0 0
    %4761 = vmatpush1.bf16.msra.mxu0 0
    %4762 = vmatprep.mubr.bf16.mxu0 %v4724
    %4763 = vmatmul.mubr.bf16.gmra.mrb[0].mxu0 %v4613
    %v4764 = vpop.f32.mrb[0].mxu0
    %v4765 = vadd.f32 %v4645, %v4764
    %v4766 = vpop.f32.mrb[0].mxu0
    %v4767 = vpop.f32.mrb[0].mxu0
    %v4768 = vpop.f32.mrb[0].mxu0
    %4769 = vdwg.mxu0
    %vm4770 = vcmask 1041408
    %v4771 = vsel %vm4770, %v4765, -inf
    %4772 = vmax.xlane.f32.xlu0 %v4771
    %v4773 = vpop.xlane.xlu0 %4772
    %v4774 = vsub.f32 %v4765, %v4773
    %v4775 = vmul.f32 %v4774, 1.442695
    %v4776 = vpow.pop %v4775
    %v4777 = vsel %vm4770, %v4776, 0.0
    %4778 = vadd.xlane.f32.xlu0 %v4777
    %v4779 = vpop.xlane.xlu0 %4778
    %v4780 = vlog2.pop %v4779
    %v4781 = vmul.f32 %v4780, 0.6931472
    %v4782 = vadd.f32 %v4781, %v4773
    %v4783 = vsub.f32 %v4765, %v4782
    %4784 = vst [vmem:[#allocation3] sm:$0x3] %v4783
    // Predicated region
    $region30: #{cnn_model_forward.3} parent=1 // pred_check
      _
    $region31: #{cnn_model_forward.3} parent=1 // pred_check_branch
      %4786 = sbr.rel (0) target = $region33
    $region32: #{cnn_model_forward.3} parent=1 // pred_region
      %s4788 = ssub.s32 32, 32
      %4789 = vsyncadd [#allocation4], %s4788
      %s4791 = sshll.u32 [#allocation3], 4
      %s4792 = int_to_ptr.vmem [resolvable:$true] %s4791
      %4794 = dma.vmem_to_hbm [thread:$0]  %s4792, 32, %s7, [#allocation4]
    $region33: #{cnn_model_forward.3} parent=1 // pred_fallthru
      _
    // Predicated region
    $region34: #{cnn_model_forward.3} parent=1 // pred_check
      _
    $region35: #{cnn_model_forward.3} parent=1 // pred_check_branch
      %4796 = sbr.rel (0) target = $region37
    $region36: #{cnn_model_forward.3} parent=1 // pred_region
      %4797 = dma.done [#allocation4], 32
    $region37: #{cnn_model_forward.3} parent=1 // pred_fallthru
      _
    %4798 = vsyncpa [#allocation4], 1

</llo_original>
